<compile_context>
chip_gen: v7x
topology: tpu7x:2x2x1
jax: 0.10.0
libtpu: 0.0.40
codegen_flags: <defaults>
</compile_context>

<pallas_src>
import itertools
import functools

import jax
import jax.numpy as jnp
import numpy as np
from jax.experimental import pallas as pl
from jax.experimental.pallas import tpu as pltpu


# --------------------------------------------------------------------------- #
# Kernel
# --------------------------------------------------------------------------- #
def fibinet_kernel(x_ref,
                   w_se1_ref, b_se1_ref, w_se2x_ref, b_se2x_ref,
                   wcat_ref,
                   w_m1_ref, b_m1_ref, w_m2_ref, b_m2_ref,
                   w_out_ref, b_out_ref,
                   o_ref, xv_ref, *, num_fields, embed_dim, cpad):
    F, D = num_fields, embed_dim
    FD = F * D

    x2_bf = x_ref[...]                         # (tb, F*D) bf16, batch on sublanes
    x2 = x2_bf.astype(jnp.float32)             # SENET elementwise in f32 (v5e-safe)

    # ---------------- SENET layer 1 (max pool + tiny FMA excitation) ----------
    h = b_se1_ref[...]                         # (1, T) broadcasts up
    for f in range(F):
        zf = jnp.max(x2[:, f * D:(f + 1) * D], axis=1, keepdims=True)   # (tb, 1)
        h = h + zf * w_se1_ref[f:f + 1, :]                               # (tb, T)
    h = jnp.maximum(h, 0.0)

    # ---------------- SENET layer 2 on the MXU (pre-expanded weights) ---------
    # a_exp[:, f*D+d] == relu(h @ W2 + b2)[:, f]  (field weight replicated D times)
    a_exp = jnp.maximum(
        jnp.dot(h.astype(jnp.bfloat16), w_se2x_ref[...],
                preferred_element_type=jnp.float32) + b_se2x_ref[...], 0.0)
    v2 = a_exp * x2                            # (tb, F*D) SENET re-weighted embeddings

    # ------------- Fused Bilinear('all') on x2 and on v2 ----------------------
    # xv = [x2 | v2] written straight into a bf16 VMEM scratch (no concat copy);
    # one K=128 MXU matmul against the merged block matrix Wcat = [Wt_pad|Ws_pad],
    # split at a 128-lane boundary, elementwise multiply reproduces
    # torch.cat([bi1(x).view(B,-1), bi2(v).view(B,-1)], dim=1) (zero-padded lanes).
    xv_ref[:, :FD] = x2_bf
    xv_ref[:, FD:] = v2.astype(jnp.bfloat16)
    lr = jnp.dot(xv_ref[...], wcat_ref[...],
                 preferred_element_type=jnp.float32)          # (tb, 2*cpad) f32
    x_con = lr[:, :cpad] * lr[:, cpad:]                       # (tb, cpad), pad lanes = 0

    # ---------------- MLP head (Dropout identity; BN assumed folded) ----------
    h1 = jnp.maximum(
        jnp.dot(x_con.astype(jnp.bfloat16), w_m1_ref[...],
                preferred_element_type=jnp.float32) + b_m1_ref[...], 0.0)
    h2 = jnp.maximum(
        jnp.dot(h1.astype(jnp.bfloat16), w_m2_ref[...],
                preferred_element_type=jnp.float32) + b_m2_ref[...], 0.0)

    # Final (tb, H2) x (H2, 1) on the VPU as a lane reduce (MXU would use 1/256 lanes)
    y = jnp.sum(h2 * w_out_ref[...], axis=1, keepdims=True) + b_out_ref[...]
    o_ref[...] = y                              # (tb, 1)


# --------------------------------------------------------------------------- #
# Wrapper-side parameter fusion (done once, outside the kernel)
# --------------------------------------------------------------------------- #
def prepare_params(params, F, D):
    (w_se1, b_se1, w_se2, b_se2, w_bi1, w_bi2,
     w_m1, b_m1, w_m2, b_m2, w_out, b_out) = params
    pairs = list(itertools.combinations(range(F), 2))
    P = len(pairs)
    FD = F * D
    xcon_w = 2 * P * D
    cpad = ((xcon_w + 127) // 128) * 128        # pad x_con width to a 128-lane multiple

    # SENET layer 2 pre-expanded so its output is already replicated D times per field.
    w_se2x = jnp.asarray(jnp.repeat(jnp.asarray(w_se2, jnp.float32), D, axis=1),
                         jnp.bfloat16)                                  # (T, F*D) bf16
    b_se2x = jnp.repeat(jnp.asarray(b_se2, jnp.float32), D, axis=1)     # (1, F*D) f32

    # Merged bilinear transform/select block matrix Wcat = [Wt_pad | Ws_pad].
    w1 = np.asarray(w_bi1, dtype=np.float32)
    w2 = np.asarray(w_bi2, dtype=np.float32)
    eye = np.eye(D, dtype=np.float32)
    Wt = np.zeros((2 * FD, cpad), np.float32)
    Ws = np.zeros((2 * FD, cpad), np.float32)
    for p, (i, j) in enumerate(pairs):
        # x_bi1 half (consumes the x2 rows 0..FD-1)
        Wt[i * D:(i + 1) * D, p * D:(p + 1) * D] = w1
        Ws[j * D:(j + 1) * D, p * D:(p + 1) * D] = eye
        # x_bi2 half (consumes the v2 rows FD..2*FD-1)
        Wt[FD + i * D:FD + (i + 1) * D, P * D + p * D:P * D + (p + 1) * D] = w2
        Ws[FD + j * D:FD + (j + 1) * D, P * D + p * D:P * D + (p + 1) * D] = eye
    wcat = np.concatenate([Wt, Ws], axis=1)                # (2*FD, 2*cpad)

    # MLP-1 weight padded with zero rows to match the padded x_con lanes (K = cpad).
    w_m1_pad = np.zeros((cpad, np.asarray(w_m1).shape[1]), np.float32)
    w_m1_pad[:xcon_w, :] = np.asarray(w_m1, dtype=np.float32)

    fused = [jnp.asarray(w_se1, jnp.float32), jnp.asarray(b_se1, jnp.float32),
             w_se2x, b_se2x,
             jnp.asarray(wcat, jnp.bfloat16),
             jnp.asarray(w_m1_pad, jnp.bfloat16), jnp.asarray(b_m1, jnp.float32),
             jnp.asarray(w_m2, jnp.bfloat16), jnp.asarray(b_m2, jnp.float32),
             jnp.asarray(np.asarray(w_out, dtype=np.float32).T, jnp.float32),  # (1, H2)
             jnp.asarray(b_out, jnp.float32)]
    return fused, cpad


# --------------------------------------------------------------------------- #
# pallas_call wrapper
# --------------------------------------------------------------------------- #
def fibinet_forward(x2, fused_params, cpad, F, D, *, tb=512):
    """x2: (B, F*D) embeddings, ideally already bf16 (no extra HBM pass)."""
    B, FD = x2.shape
    assert FD == F * D
    if x2.dtype != jnp.bfloat16:
        x2 = x2.astype(jnp.bfloat16)            # no-op when the table is bf16

    # Keep the grid >= 2 where possible so both v7x TensorCores get steps;
    # on 1-TC chips (v5e/v6e) the only effect is a slightly smaller tile.
    if B < 2 * tb:
        tb = max(8, ((B + 15) // 16) * 8)
    Bp = ((B + tb - 1) // tb) * tb
    x2p = x2 if Bp == B else jnp.pad(x2, ((0, Bp - B), (0, 0)))
    grid = (Bp // tb,)

    in_specs = [pl.BlockSpec((tb, FD), lambda i: (i, 0))]
    in_specs += [pl.BlockSpec(tuple(p.shape), lambda i: (0, 0)) for p in fused_params]

    kernel = functools.partial(fibinet_kernel, num_fields=F, embed_dim=D, cpad=cpad)
    out = pl.pallas_call(
        kernel,
        out_shape=jax.ShapeDtypeStruct((Bp, 1), jnp.float32),
        grid=grid,
        in_specs=in_specs,
        out_specs=pl.BlockSpec((tb, 1), lambda i: (i, 0)),
        scratch_shapes=[pltpu.VMEM((tb, 2 * FD), jnp.bfloat16)],
        compiler_params=pltpu.CompilerParams(dimension_semantics=("parallel",)),
    )(x2p, *fused_params)
    return out[:B]


# --------------------------------------------------------------------------- #
# Pure-JAX reference (mirrors the PyTorch module; MXU operands mirrored in bf16
# with f32 accumulation so the comparison isolates kernel plumbing, not dtype).
# --------------------------------------------------------------------------- #
def fibinet_ref(x_emb_bf, p):
    (w_se1, b_se1, w_se2, b_se2, w_bi1, w_bi2,
     w_m1, b_m1, w_m2, b_m2, w_out, b_out) = p
    bf = jnp.bfloat16
    hi = jax.lax.Precision.HIGHEST

    def mm(a, b):
        return jnp.dot(a.astype(bf), b.astype(bf), preferred_element_type=jnp.float32)

    B, F, D = x_emb_bf.shape
    xf = x_emb_bf.astype(jnp.float32)
    z = jnp.max(xf, axis=2)                                             # SenetLayer max pool
    h = jax.nn.relu(jnp.dot(z, w_se1, precision=hi) + b_se1)
    a = jax.nn.relu(mm(h, w_se2) + b_se2)
    v = a[:, :, None] * xf
    v_bf = v.astype(bf)
    p1 = [mm(x_emb_bf[:, i, :], w_bi1) * xf[:, j, :]
          for i, j in itertools.combinations(range(F), 2)]
    p2 = [mm(v_bf[:, i, :], w_bi2) * v_bf[:, j, :].astype(jnp.float32)
          for i, j in itertools.combinations(range(F), 2)]
    x_con = jnp.concatenate(p1 + p2, axis=1)
    h1 = jax.nn.relu(mm(x_con, w_m1) + b_m1)
    h2 = jax.nn.relu(mm(h1, w_m2) + b_m2)
    return jnp.sum(h2 * w_out[:, 0][None, :], axis=1, keepdims=True) + b_out


# --------------------------------------------------------------------------- #
if __name__ == "__main__":
    # ----- configuration (consistent with the module; grid of 2 batch tiles) -----
    B = 1024
    field_dims = (10, 20, 30, 40)
    F = len(field_dims)
    D = 16                       # embed_dim
    mlp_layers = (64, 32)
    num_inter = F * (F - 1) // 2
    mlp_in = 2 * num_inter * D   # 192
    temp_dim = max(1, F // 1)    # SenetLayer ratio=1

    key = jax.random.PRNGKey(0)
    ks = jax.random.split(key, 24)

    def w(k, shape, scale=0.3):
        return jax.random.normal(k, shape, jnp.float32) * scale

    # Weights stored (in_features, out_features), i.e. transposed vs. nn.Linear.weight.
    params = [
        w(ks[0], (F, temp_dim)), w(ks[1], (1, temp_dim)),          # SENET Linear 1
        w(ks[2], (temp_dim, F)), w(ks[3], (1, F)),                 # SENET Linear 2
        w(ks[4], (D, D)),                                          # bilinear ('all') on x_emb
        w(ks[5], (D, D)),                                          # bilinear2 ('all') on x_senet
        w(ks[6], (mlp_in, mlp_layers[0])), w(ks[7], (1, mlp_layers[0])),
        w(ks[8], (mlp_layers[0], mlp_layers[1])), w(ks[9], (1, mlp_layers[1])),
        w(ks[10], (mlp_layers[1], 1)), w(ks[11], (1, 1)),
    ]

    # ----- FeaturesEmbedding glue: bf16 shared table + per-field offsets, gather in JAX.
    # Table is bf16 so the gathered activation stream enters the kernel as bf16
    # with no extra astype/reshape HBM pass.
    table = (jax.random.normal(ks[12], (sum(field_dims), D), jnp.float32) * 0.3
             ).astype(jnp.bfloat16)
    offsets = jnp.array((0,) + tuple(np.cumsum(field_dims)[:-1]), jnp.int32)
    x = jnp.stack(
        [jax.random.randint(ks[13 + f], (B,), 0, field_dims[f], dtype=jnp.int32)
         for f in range(F)],
        axis=1)                                           # (B, F) categorical ids
    x_emb_bf = jnp.take(table, x + offsets[None, :], axis=0)   # (B, F, D) bf16
    x2 = x_emb_bf.reshape(B, F * D)                             # (B, F*D) bf16, layout-free

    # ----- run Pallas kernel -----
    fused, cpad = prepare_params(params, F, D)
    y = fibinet_forward(x2, fused, cpad, F, D, tb=512)
    y = jax.block_until_ready(y)

    # ----- verify against the pure-JAX reference -----
    y_ref = fibinet_ref(x_emb_bf, params)
    np.testing.assert_allclose(np.asarray(y), np.asarray(y_ref), rtol=5e-3, atol=5e-3)

    print("KERNEL_OK")
</pallas_src>

<mosaic_0001>
module attributes {stable_mosaic.version = 11 : i64} {
  func.func @fibinet_kernel(%arg0: i32, %arg1: memref<512x64xbf16, #tpu.memory_space<vmem>>, %arg2: memref<4x4xf32, #tpu.memory_space<vmem>>, %arg3: memref<1x4xf32, #tpu.memory_space<vmem>>, %arg4: memref<4x64xbf16, #tpu.memory_space<vmem>>, %arg5: memref<1x64xf32, #tpu.memory_space<vmem>>, %arg6: memref<128x512xbf16, #tpu.memory_space<vmem>>, %arg7: memref<256x64xbf16, #tpu.memory_space<vmem>>, %arg8: memref<1x64xf32, #tpu.memory_space<vmem>>, %arg9: memref<64x32xbf16, #tpu.memory_space<vmem>>, %arg10: memref<1x32xf32, #tpu.memory_space<vmem>>, %arg11: memref<1x32xf32, #tpu.memory_space<vmem>>, %arg12: memref<1x1xf32, #tpu.memory_space<vmem>>, %arg13: memref<512x1xf32, #tpu.memory_space<vmem>>, %arg14: memref<512x128xbf16, #tpu.memory_space<vmem>>) attributes {dimension_semantics = [#tpu.dimension_semantics<parallel>], iteration_bounds = array<i64: 2>, scalar_prefetch = 0 : i64, scratch_operands = 1 : i64, tpu.core_type = #tpu.core_type<tc>, window_params = [{transform_indices = @transform_0, window_bounds = array<i64: 512, 64>}, {pipeline_mode = #tpu.pipeline_mode<synchronous>, transform_indices = @transform_1, window_bounds = array<i64: 4, 4>}, {pipeline_mode = #tpu.pipeline_mode<synchronous>, transform_indices = @transform_2, window_bounds = array<i64: 1, 4>}, {pipeline_mode = #tpu.pipeline_mode<synchronous>, transform_indices = @transform_3, window_bounds = array<i64: 4, 64>}, {pipeline_mode = #tpu.pipeline_mode<synchronous>, transform_indices = @transform_4, window_bounds = array<i64: 1, 64>}, {pipeline_mode = #tpu.pipeline_mode<synchronous>, transform_indices = @transform_5, window_bounds = array<i64: 128, 512>}, {pipeline_mode = #tpu.pipeline_mode<synchronous>, transform_indices = @transform_6, window_bounds = array<i64: 256, 64>}, {pipeline_mode = #tpu.pipeline_mode<synchronous>, transform_indices = @transform_7, window_bounds = array<i64: 1, 64>}, {pipeline_mode = #tpu.pipeline_mode<synchronous>, transform_indices = @transform_8, window_bounds = array<i64: 64, 32>}, {pipeline_mode = #tpu.pipeline_mode<synchronous>, transform_indices = @transform_9, window_bounds = array<i64: 1, 32>}, {pipeline_mode = #tpu.pipeline_mode<synchronous>, transform_indices = @transform_10, window_bounds = array<i64: 1, 32>}, {pipeline_mode = #tpu.pipeline_mode<synchronous>, transform_indices = @transform_11, window_bounds = array<i64: 1, 1>}, {transform_indices = @transform_12, window_bounds = array<i64: 512, 1>}]} {
    %c0 = arith.constant 0 : index
    %c0_0 = arith.constant 0 : index
    %0 = vector.load %arg1[%c0, %c0_0] : memref<512x64xbf16, #tpu.memory_space<vmem>>, vector<512x64xbf16>
    %1 = arith.extf %0 : vector<512x64xbf16> to vector<512x64xf32>
    %c0_1 = arith.constant 0 : index
    %c0_2 = arith.constant 0 : index
    %2 = vector.load %arg3[%c0_1, %c0_2] : memref<1x4xf32, #tpu.memory_space<vmem>>, vector<1x4xf32>
    %3 = vector.extract_strided_slice %1 {offsets = [0, 0], sizes = [512, 16], strides = [1, 1]} : vector<512x64xf32> to vector<512x16xf32>
    %cst = arith.constant dense<0xFF800000> : vector<512xf32>
    %4 = vector.multi_reduction <maximumf>, %3, %cst [1] : vector<512x16xf32> to vector<512xf32>
    %5 = vector.shape_cast %4 : vector<512xf32> to vector<512x1xf32>
    %c0_3 = arith.constant 0 : index
    %c0_4 = arith.constant 0 : index
    %6 = vector.load %arg2[%c0_3, %c0_4] : memref<4x4xf32, #tpu.memory_space<vmem>>, vector<1x4xf32>
    %7 = vector.broadcast %5 : vector<512x1xf32> to vector<512x4xf32>
    %8 = vector.broadcast %6 : vector<1x4xf32> to vector<512x4xf32>
    %9 = arith.mulf %7, %8 : vector<512x4xf32>
    %10 = vector.broadcast %2 : vector<1x4xf32> to vector<512x4xf32>
    %11 = arith.addf %10, %9 : vector<512x4xf32>
    %12 = vector.extract_strided_slice %1 {offsets = [0, 16], sizes = [512, 16], strides = [1, 1]} : vector<512x64xf32> to vector<512x16xf32>
    %cst_5 = arith.constant dense<0xFF800000> : vector<512xf32>
    %13 = vector.multi_reduction <maximumf>, %12, %cst_5 [1] : vector<512x16xf32> to vector<512xf32>
    %14 = vector.shape_cast %13 : vector<512xf32> to vector<512x1xf32>
    %c1 = arith.constant 1 : index
    %c0_6 = arith.constant 0 : index
    %15 = vector.load %arg2[%c1, %c0_6] : memref<4x4xf32, #tpu.memory_space<vmem>>, vector<1x4xf32>
    %16 = vector.broadcast %14 : vector<512x1xf32> to vector<512x4xf32>
    %17 = vector.broadcast %15 : vector<1x4xf32> to vector<512x4xf32>
    %18 = arith.mulf %16, %17 : vector<512x4xf32>
    %19 = arith.addf %11, %18 : vector<512x4xf32>
    %20 = vector.extract_strided_slice %1 {offsets = [0, 32], sizes = [512, 16], strides = [1, 1]} : vector<512x64xf32> to vector<512x16xf32>
    %cst_7 = arith.constant dense<0xFF800000> : vector<512xf32>
    %21 = vector.multi_reduction <maximumf>, %20, %cst_7 [1] : vector<512x16xf32> to vector<512xf32>
    %22 = vector.shape_cast %21 : vector<512xf32> to vector<512x1xf32>
    %c2 = arith.constant 2 : index
    %c0_8 = arith.constant 0 : index
    %23 = vector.load %arg2[%c2, %c0_8] : memref<4x4xf32, #tpu.memory_space<vmem>>, vector<1x4xf32>
    %24 = vector.broadcast %22 : vector<512x1xf32> to vector<512x4xf32>
    %25 = vector.broadcast %23 : vector<1x4xf32> to vector<512x4xf32>
    %26 = arith.mulf %24, %25 : vector<512x4xf32>
    %27 = arith.addf %19, %26 : vector<512x4xf32>
    %28 = vector.extract_strided_slice %1 {offsets = [0, 48], sizes = [512, 16], strides = [1, 1]} : vector<512x64xf32> to vector<512x16xf32>
    %cst_9 = arith.constant dense<0xFF800000> : vector<512xf32>
    %29 = vector.multi_reduction <maximumf>, %28, %cst_9 [1] : vector<512x16xf32> to vector<512xf32>
    %30 = vector.shape_cast %29 : vector<512xf32> to vector<512x1xf32>
    %c3 = arith.constant 3 : index
    %c0_10 = arith.constant 0 : index
    %31 = vector.load %arg2[%c3, %c0_10] : memref<4x4xf32, #tpu.memory_space<vmem>>, vector<1x4xf32>
    %32 = vector.broadcast %30 : vector<512x1xf32> to vector<512x4xf32>
    %33 = vector.broadcast %31 : vector<1x4xf32> to vector<512x4xf32>
    %34 = arith.mulf %32, %33 : vector<512x4xf32>
    %35 = arith.addf %27, %34 : vector<512x4xf32>
    %cst_11 = arith.constant 0.000000e+00 : f32
    %36 = vector.broadcast %cst_11 : f32 to vector<512x4xf32>
    %37 = arith.maximumf %35, %36 : vector<512x4xf32>
    %38 = arith.truncf %37 : vector<512x4xf32> to vector<512x4xbf16>
    %c0_12 = arith.constant 0 : index
    %c0_13 = arith.constant 0 : index
    %39 = vector.load %arg4[%c0_12, %c0_13] : memref<4x64xbf16, #tpu.memory_space<vmem>>, vector<4x64xbf16>
    %cst_14 = arith.constant dense<0.000000e+00> : vector<512x64xf32>
    %40 = tpu.matmul %38, %39, %cst_14 {dimension_numbers = #tpu.dot_dimension_numbers<[1], [0], [0], [1], [0, 0, 1, 1], [], []>} : vector<512x4xbf16>, vector<4x64xbf16>, vector<512x64xf32> -> vector<512x64xf32>
    %c0_15 = arith.constant 0 : index
    %c0_16 = arith.constant 0 : index
    %41 = vector.load %arg5[%c0_15, %c0_16] : memref<1x64xf32, #tpu.memory_space<vmem>>, vector<1x64xf32>
    %42 = vector.broadcast %41 : vector<1x64xf32> to vector<512x64xf32>
    %43 = arith.addf %40, %42 : vector<512x64xf32>
    %cst_17 = arith.constant 0.000000e+00 : f32
    %44 = vector.broadcast %cst_17 : f32 to vector<512x64xf32>
    %45 = arith.maximumf %43, %44 : vector<512x64xf32>
    %46 = arith.mulf %45, %1 : vector<512x64xf32>
    %c0_18 = arith.constant 0 : index
    %c0_19 = arith.constant 0 : index
    %47 = vector.load %arg14[%c0_18, %c0_19] : memref<512x128xbf16, #tpu.memory_space<vmem>>, vector<512x64xbf16>
    tpu.vector_store %arg14[%c0_18, %c0_19], %0 {strides = array<i32>} : memref<512x128xbf16, #tpu.memory_space<vmem>>, vector<512x64xbf16>,
    %48 = arith.truncf %46 : vector<512x64xf32> to vector<512x64xbf16>
    %c0_20 = arith.constant 0 : index
    %c64 = arith.constant 64 : index
    %49 = vector.load %arg14[%c0_20, %c64] : memref<512x128xbf16, #tpu.memory_space<vmem>>, vector<512x64xbf16>
    tpu.vector_store %arg14[%c0_20, %c64], %48 {strides = array<i32>} : memref<512x128xbf16, #tpu.memory_space<vmem>>, vector<512x64xbf16>,
    %c0_21 = arith.constant 0 : index
    %c0_22 = arith.constant 0 : index
    %50 = vector.load %arg14[%c0_21, %c0_22] : memref<512x128xbf16, #tpu.memory_space<vmem>>, vector<512x128xbf16>
    %c0_23 = arith.constant 0 : index
    %c0_24 = arith.constant 0 : index
    %51 = vector.load %arg6[%c0_23, %c0_24] : memref<128x512xbf16, #tpu.memory_space<vmem>>, vector<128x512xbf16>
    %cst_25 = arith.constant dense<0.000000e+00> : vector<512x512xf32>
    %52 = tpu.matmul %50, %51, %cst_25 {dimension_numbers = #tpu.dot_dimension_numbers<[1], [0], [0], [1], [0, 0, 1, 1], [], []>} : vector<512x128xbf16>, vector<128x512xbf16>, vector<512x512xf32> -> vector<512x512xf32>
    %53 = vector.extract_strided_slice %52 {offsets = [0, 0], sizes = [512, 256], strides = [1, 1]} : vector<512x512xf32> to vector<512x256xf32>
    %54 = vector.extract_strided_slice %52 {offsets = [0, 256], sizes = [512, 256], strides = [1, 1]} : vector<512x512xf32> to vector<512x256xf32>
    %55 = arith.mulf %53, %54 : vector<512x256xf32>
    %56 = arith.truncf %55 : vector<512x256xf32> to vector<512x256xbf16>
    %c0_26 = arith.constant 0 : index
    %c0_27 = arith.constant 0 : index
    %57 = vector.load %arg7[%c0_26, %c0_27] : memref<256x64xbf16, #tpu.memory_space<vmem>>, vector<256x64xbf16>
    %cst_28 = arith.constant dense<0.000000e+00> : vector<512x64xf32>
    %58 = tpu.matmul %56, %57, %cst_28 {dimension_numbers = #tpu.dot_dimension_numbers<[1], [0], [0], [1], [0, 0, 1, 1], [], []>} : vector<512x256xbf16>, vector<256x64xbf16>, vector<512x64xf32> -> vector<512x64xf32>
    %c0_29 = arith.constant 0 : index
    %c0_30 = arith.constant 0 : index
    %59 = vector.load %arg8[%c0_29, %c0_30] : memref<1x64xf32, #tpu.memory_space<vmem>>, vector<1x64xf32>
    %60 = vector.broadcast %59 : vector<1x64xf32> to vector<512x64xf32>
    %61 = arith.addf %58, %60 : vector<512x64xf32>
    %cst_31 = arith.constant 0.000000e+00 : f32
    %62 = vector.broadcast %cst_31 : f32 to vector<512x64xf32>
    %63 = arith.maximumf %61, %62 : vector<512x64xf32>
    %64 = arith.truncf %63 : vector<512x64xf32> to vector<512x64xbf16>
    %c0_32 = arith.constant 0 : index
    %c0_33 = arith.constant 0 : index
    %65 = vector.load %arg9[%c0_32, %c0_33] : memref<64x32xbf16, #tpu.memory_space<vmem>>, vector<64x32xbf16>
    %cst_34 = arith.constant dense<0.000000e+00> : vector<512x32xf32>
    %66 = tpu.matmul %64, %65, %cst_34 {dimension_numbers = #tpu.dot_dimension_numbers<[1], [0], [0], [1], [0, 0, 1, 1], [], []>} : vector<512x64xbf16>, vector<64x32xbf16>, vector<512x32xf32> -> vector<512x32xf32>
    %c0_35 = arith.constant 0 : index
    %c0_36 = arith.constant 0 : index
    %67 = vector.load %arg10[%c0_35, %c0_36] : memref<1x32xf32, #tpu.memory_space<vmem>>, vector<1x32xf32>
    %68 = vector.broadcast %67 : vector<1x32xf32> to vector<512x32xf32>
    %69 = arith.addf %66, %68 : vector<512x32xf32>
    %cst_37 = arith.constant 0.000000e+00 : f32
    %70 = vector.broadcast %cst_37 : f32 to vector<512x32xf32>
    %71 = arith.maximumf %69, %70 : vector<512x32xf32>
    %c0_38 = arith.constant 0 : index
    %c0_39 = arith.constant 0 : index
    %72 = vector.load %arg11[%c0_38, %c0_39] : memref<1x32xf32, #tpu.memory_space<vmem>>, vector<1x32xf32>
    %73 = vector.broadcast %72 : vector<1x32xf32> to vector<512x32xf32>
    %74 = arith.mulf %71, %73 : vector<512x32xf32>
    %cst_40 = arith.constant dense<0.000000e+00> : vector<512xf32>
    %75 = vector.multi_reduction <add>, %74, %cst_40 [1] : vector<512x32xf32> to vector<512xf32>
    %76 = vector.shape_cast %75 : vector<512xf32> to vector<512x1xf32>
    %c0_41 = arith.constant 0 : index
    %c0_42 = arith.constant 0 : index
    %77 = vector.load %arg12[%c0_41, %c0_42] : memref<1x1xf32, #tpu.memory_space<vmem>>, vector<1x1xf32>
    %78 = vector.broadcast %77 : vector<1x1xf32> to vector<512x1xf32>
    %79 = arith.addf %76, %78 : vector<512x1xf32>
    %c0_43 = arith.constant 0 : index
    %c0_44 = arith.constant 0 : index
    %80 = vector.load %arg13[%c0_43, %c0_44] : memref<512x1xf32, #tpu.memory_space<vmem>>, vector<512x1xf32>
    tpu.vector_store %arg13[%c0_43, %c0_44], %79 {strides = array<i32>} : memref<512x1xf32, #tpu.memory_space<vmem>>, vector<512x1xf32>,
    return
  }
  func.func @transform_0(%arg0: i32) -> (i32, i32) {
    %c0_i32 = arith.constant 0 : i32
    %c0_i32_0 = arith.constant 0 : i32
    return %arg0, %c0_i32 : i32, i32
  }
  func.func @transform_1(%arg0: i32) -> (i32, i32) {
    %c0_i32 = arith.constant 0 : i32
    %c0_i32_0 = arith.constant 0 : i32
    %c0_i32_1 = arith.constant 0 : i32
    return %c0_i32, %c0_i32_0 : i32, i32
  }
  func.func @transform_2(%arg0: i32) -> (i32, i32) {
    %c0_i32 = arith.constant 0 : i32
    %c0_i32_0 = arith.constant 0 : i32
    %c0_i32_1 = arith.constant 0 : i32
    return %c0_i32, %c0_i32_0 : i32, i32
  }
  func.func @transform_3(%arg0: i32) -> (i32, i32) {
    %c0_i32 = arith.constant 0 : i32
    %c0_i32_0 = arith.constant 0 : i32
    %c0_i32_1 = arith.constant 0 : i32
    return %c0_i32, %c0_i32_0 : i32, i32
  }
  func.func @transform_4(%arg0: i32) -> (i32, i32) {
    %c0_i32 = arith.constant 0 : i32
    %c0_i32_0 = arith.constant 0 : i32
    %c0_i32_1 = arith.constant 0 : i32
    return %c0_i32, %c0_i32_0 : i32, i32
  }
  func.func @transform_5(%arg0: i32) -> (i32, i32) {
    %c0_i32 = arith.constant 0 : i32
    %c0_i32_0 = arith.constant 0 : i32
    %c0_i32_1 = arith.constant 0 : i32
    return %c0_i32, %c0_i32_0 : i32, i32
  }
  func.func @transform_6(%arg0: i32) -> (i32, i32) {
    %c0_i32 = arith.constant 0 : i32
    %c0_i32_0 = arith.constant 0 : i32
    %c0_i32_1 = arith.constant 0 : i32
    return %c0_i32, %c0_i32_0 : i32, i32
  }
  func.func @transform_7(%arg0: i32) -> (i32, i32) {
    %c0_i32 = arith.constant 0 : i32
    %c0_i32_0 = arith.constant 0 : i32
    %c0_i32_1 = arith.constant 0 : i32
    return %c0_i32, %c0_i32_0 : i32, i32
  }
  func.func @transform_8(%arg0: i32) -> (i32, i32) {
    %c0_i32 = arith.constant 0 : i32
    %c0_i32_0 = arith.constant 0 : i32
    %c0_i32_1 = arith.constant 0 : i32
    return %c0_i32, %c0_i32_0 : i32, i32
  }
  func.func @transform_9(%arg0: i32) -> (i32, i32) {
    %c0_i32 = arith.constant 0 : i32
    %c0_i32_0 = arith.constant 0 : i32
    %c0_i32_1 = arith.constant 0 : i32
    return %c0_i32, %c0_i32_0 : i32, i32
  }
  func.func @transform_10(%arg0: i32) -> (i32, i32) {
    %c0_i32 = arith.constant 0 : i32
    %c0_i32_0 = arith.constant 0 : i32
    %c0_i32_1 = arith.constant 0 : i32
    return %c0_i32, %c0_i32_0 : i32, i32
  }
  func.func @transform_11(%arg0: i32) -> (i32, i32) {
    %c0_i32 = arith.constant 0 : i32
    %c0_i32_0 = arith.constant 0 : i32
    %c0_i32_1 = arith.constant 0 : i32
    return %c0_i32, %c0_i32_0 : i32, i32
  }
  func.func @transform_12(%arg0: i32) -> (i32, i32) {
    %c0_i32 = arith.constant 0 : i32
    %c0_i32_0 = arith.constant 0 : i32
    return %arg0, %c0_i32 : i32, i32
  }
}

</mosaic_0001>

<llo_original>
// kernel: tpu_custom_call.1
$region0: #{tpu_custom_call.1}
  #allocation0 [shape = 'u32[]', space=smem, size = 0x4, offset = 0x4, fixed_abs, tag = 'smem constant byte address 0x4 - core index']
  #allocation1 [shape = 'u32[144,128]{1,0:T(1,128)}', space=vmem, size = 0x12000, scoped, tag = 'internal scratch']
  #allocation2 [shape = 'bf16[512,128]{1,0:T(16,128)(2,1)}', space=vmem, size = 0x20000, scoped, tag = 'scratch operand']
  #allocation3 [shape = 'f32[1,1]{1,0:T(1,128)S(1)}', space=vmem, size = 0x200, scoped, tag = 'scoped memory for tpu_custom_call.1']
  %s0 = inlined_call_operand.vmem [shape: bf16[1024,64], index: 0, kind: input, shape index: {}]
  %s1 = inlined_call_operand.vmem [shape: f32[4,4], index: 1, kind: input, shape index: {}]
  %s2 = inlined_call_operand.vmem [shape: f32[1,4], index: 2, kind: input, shape index: {}]
  %s3 = inlined_call_operand.vmem [shape: bf16[4,64], index: 3, kind: input, shape index: {}]
  %s4 = inlined_call_operand.vmem [shape: f32[1,64], index: 4, kind: input, shape index: {}]
  %s5 = inlined_call_operand.vmem [shape: bf16[128,512], index: 5, kind: input, shape index: {}]
  %s6 = inlined_call_operand.vmem [shape: bf16[256,64], index: 6, kind: input, shape index: {}]
  %s7 = inlined_call_operand.vmem [shape: f32[1,64], index: 7, kind: input, shape index: {}]
  %s8 = inlined_call_operand.vmem [shape: bf16[64,32], index: 8, kind: input, shape index: {}]
  %s9 = inlined_call_operand.vmem [shape: f32[1,32], index: 9, kind: input, shape index: {}]
  %s10 = inlined_call_operand.vmem [shape: f32[1,32], index: 10, kind: input, shape index: {}]
  %s11 = inlined_call_operand.<no memory space> [shape: f32[1,1], index: 11, kind: input, shape index: {}]
  %s12 = inlined_call_operand.vmem [shape: f32[1024,1], index: 12, kind: output, shape index: {}]
  %s13 = sld [smem:[#allocation0]]
  $region81: #{tpu_custom_call.1} parent=0
    _
  %s15 = ssub.s32 1, %s13
  %s16 = scalar_select 0, %s15, %s13
  %v17 = vstv %s11
  %18 = vst [vmem:[#allocation3] sm:$0x1] %v17
  loop: start=0, step=1, limit=4
  $region2: #{tpu_custom_call.1} parent=0 // loop_pre_header
    _
  $region3: #{tpu_custom_call.1} parent=0 // loop_header
    %s20 = sphi 0, %s24
    %p21 = scmp.ge.s32.totalorder %s20, 4
    %s30 = sphi 0, %s32
    %s33 = sphi 0, %s30
    %s34 = sphi 0, %s33
    %s50 = sphi 0, %s34
    %s54 = sphi 0, %s54
    %s56 = sphi 0, %s54
    %s57 = sphi 0, %s56
    %s71 = sphi 0, %s57
    %s75 = sphi 0, %s75
    %s77 = sphi 0, %s75
    %s78 = sphi 0, %s77
    %s92 = sphi 0, %s78
    %s96 = sphi 0, %s96
    %s98 = sphi 0, %s96
    %s99 = sphi 0, %s98
    %s113 = sphi 0, %s99
    %s117 = sphi 0, %s117
    %s119 = sphi 0, %s117
    %s120 = sphi 0, %s119
    %s134 = sphi 0, %s120
    %s138 = sphi 0, %s138
    %s140 = sphi 0, %s138
    %s141 = sphi 0, %s140
    %s155 = sphi 0, %s141
    %s159 = sphi 0, %s159
    %s161 = sphi 0, %s159
    %s162 = sphi 0, %s161
    %s176 = sphi 0, %s162
    %s180 = sphi 0, %s180
    %s182 = sphi 0, %s180
    %s183 = sphi 0, %s182
    %s197 = sphi 0, %s183
    %s201 = sphi 0, %s201
    %s203 = sphi 0, %s201
    %s204 = sphi 0, %s203
    %s218 = sphi 0, %s204
    %s222 = sphi 0, %s222
    %s224 = sphi 0, %s222
    %s225 = sphi 0, %s224
    %s239 = sphi 0, %s225
    %s243 = sphi 0, %s243
    %s245 = sphi 0, %s243
    %s246 = sphi 0, %s245
    %s260 = sphi 0, %s246
    %s264 = sphi 0, %s264
    %s266 = sphi 0, %s264
    %s267 = sphi 0, %s266
    %s281 = sphi 0, %s267
    %s287 = sphi 0, %s289
    %s290 = sphi 0, %s287
    %s291 = sphi 0, %s290
    %s307 = sphi 0, %s291
  $region4: #{tpu_custom_call.1} parent=0 // loop_header_branch
    %23 = sbr.rel (%p21) target = $region8
  $region5: #{tpu_custom_call.1} parent=0 // loop_body
    %s25 = ssub.s32 %s20, 1
    %s26 = ssub.s32 %s20, 2
    %s27 = sadd.s32 %s20, 1
    %s28 = ssub.s32 %s20, %s27
    %p29 = scmp.eq.s32.totalorder %s28, 0
    %s31 = sadd.s32 %s30, 1
    %s32 = scalar_select %p29, %s30, %s31
    %p35 = pneg %p29
    %p36 = scmp.eq.s32.totalorder %s20, 1
    %p37 = por %p35, %p36
    %p38 = scmp.ne.s32.totalorder %s30, %s33
    %p39 = scmp.eq.s32.totalorder %s20, 0
    %p40 = por %p38, %p39
    %p41 = scmp.ne.s32.totalorder %s30, %s33
    %p42 = scmp.eq.s32.totalorder %s25, 1
    %p43 = por %p41, %p42
    %p44 = scmp.ne.s32.totalorder %s33, %s34
    %p45 = scmp.eq.s32.totalorder %s25, 0
    %p46 = por %p44, %p45
    %p47 = scmp.ne.s32.totalorder %s33, %s34
    %p48 = scmp.eq.s32.totalorder %s26, 1
    %p49 = por %p47, %p48
    %p51 = scmp.ne.s32.totalorder %s34, %s50
    %p52 = scmp.eq.s32.totalorder %s26, 0
    %p53 = por %p51, %p52
    %s55 = sadd.s32 %s54, 1
    %p58 = scmp.eq.s32.totalorder %s20, 1
    %p59 = scmp.ne.s32.totalorder %s54, %s56
    %p60 = scmp.eq.s32.totalorder %s20, 0
    %p61 = por %p59, %p60
    %p62 = scmp.ne.s32.totalorder %s54, %s56
    %p63 = scmp.eq.s32.totalorder %s25, 1
    %p64 = por %p62, %p63
    %p65 = scmp.ne.s32.totalorder %s56, %s57
    %p66 = scmp.eq.s32.totalorder %s25, 0
    %p67 = por %p65, %p66
    %p68 = scmp.ne.s32.totalorder %s56, %s57
    %p69 = scmp.eq.s32.totalorder %s26, 1
    %p70 = por %p68, %p69
    %p72 = scmp.ne.s32.totalorder %s57, %s71
    %p73 = scmp.eq.s32.totalorder %s26, 0
    %p74 = por %p72, %p73
    %s76 = sadd.s32 %s75, 1
    %p79 = scmp.eq.s32.totalorder %s20, 1
    %p80 = scmp.ne.s32.totalorder %s75, %s77
    %p81 = scmp.eq.s32.totalorder %s20, 0
    %p82 = por %p80, %p81
    %p83 = scmp.ne.s32.totalorder %s75, %s77
    %p84 = scmp.eq.s32.totalorder %s25, 1
    %p85 = por %p83, %p84
    %p86 = scmp.ne.s32.totalorder %s77, %s78
    %p87 = scmp.eq.s32.totalorder %s25, 0
    %p88 = por %p86, %p87
    %p89 = scmp.ne.s32.totalorder %s77, %s78
    %p90 = scmp.eq.s32.totalorder %s26, 1
    %p91 = por %p89, %p90
    %p93 = scmp.ne.s32.totalorder %s78, %s92
    %p94 = scmp.eq.s32.totalorder %s26, 0
    %p95 = por %p93, %p94
    %s97 = sadd.s32 %s96, 1
    %p100 = scmp.eq.s32.totalorder %s20, 1
    %p101 = scmp.ne.s32.totalorder %s96, %s98
    %p102 = scmp.eq.s32.totalorder %s20, 0
    %p103 = por %p101, %p102
    %p104 = scmp.ne.s32.totalorder %s96, %s98
    %p105 = scmp.eq.s32.totalorder %s25, 1
    %p106 = por %p104, %p105
    %p107 = scmp.ne.s32.totalorder %s98, %s99
    %p108 = scmp.eq.s32.totalorder %s25, 0
    %p109 = por %p107, %p108
    %p110 = scmp.ne.s32.totalorder %s98, %s99
    %p111 = scmp.eq.s32.totalorder %s26, 1
    %p112 = por %p110, %p111
    %p114 = scmp.ne.s32.totalorder %s99, %s113
    %p115 = scmp.eq.s32.totalorder %s26, 0
    %p116 = por %p114, %p115
    %s118 = sadd.s32 %s117, 1
    %p121 = scmp.eq.s32.totalorder %s20, 1
    %p122 = scmp.ne.s32.totalorder %s117, %s119
    %p123 = scmp.eq.s32.totalorder %s20, 0
    %p124 = por %p122, %p123
    %p125 = scmp.ne.s32.totalorder %s117, %s119
    %p126 = scmp.eq.s32.totalorder %s25, 1
    %p127 = por %p125, %p126
    %p128 = scmp.ne.s32.totalorder %s119, %s120
    %p129 = scmp.eq.s32.totalorder %s25, 0
    %p130 = por %p128, %p129
    %p131 = scmp.ne.s32.totalorder %s119, %s120
    %p132 = scmp.eq.s32.totalorder %s26, 1
    %p133 = por %p131, %p132
    %p135 = scmp.ne.s32.totalorder %s120, %s134
    %p136 = scmp.eq.s32.totalorder %s26, 0
    %p137 = por %p135, %p136
    %s139 = sadd.s32 %s138, 1
    %p142 = scmp.eq.s32.totalorder %s20, 1
    %p143 = scmp.ne.s32.totalorder %s138, %s140
    %p144 = scmp.eq.s32.totalorder %s20, 0
    %p145 = por %p143, %p144
    %p146 = scmp.ne.s32.totalorder %s138, %s140
    %p147 = scmp.eq.s32.totalorder %s25, 1
    %p148 = por %p146, %p147
    %p149 = scmp.ne.s32.totalorder %s140, %s141
    %p150 = scmp.eq.s32.totalorder %s25, 0
    %p151 = por %p149, %p150
    %p152 = scmp.ne.s32.totalorder %s140, %s141
    %p153 = scmp.eq.s32.totalorder %s26, 1
    %p154 = por %p152, %p153
    %p156 = scmp.ne.s32.totalorder %s141, %s155
    %p157 = scmp.eq.s32.totalorder %s26, 0
    %p158 = por %p156, %p157
    %s160 = sadd.s32 %s159, 1
    %p163 = scmp.eq.s32.totalorder %s20, 1
    %p164 = scmp.ne.s32.totalorder %s159, %s161
    %p165 = scmp.eq.s32.totalorder %s20, 0
    %p166 = por %p164, %p165
    %p167 = scmp.ne.s32.totalorder %s159, %s161
    %p168 = scmp.eq.s32.totalorder %s25, 1
    %p169 = por %p167, %p168
    %p170 = scmp.ne.s32.totalorder %s161, %s162
    %p171 = scmp.eq.s32.totalorder %s25, 0
    %p172 = por %p170, %p171
    %p173 = scmp.ne.s32.totalorder %s161, %s162
    %p174 = scmp.eq.s32.totalorder %s26, 1
    %p175 = por %p173, %p174
    %p177 = scmp.ne.s32.totalorder %s162, %s176
    %p178 = scmp.eq.s32.totalorder %s26, 0
    %p179 = por %p177, %p178
    %s181 = sadd.s32 %s180, 1
    %p184 = scmp.eq.s32.totalorder %s20, 1
    %p185 = scmp.ne.s32.totalorder %s180, %s182
    %p186 = scmp.eq.s32.totalorder %s20, 0
    %p187 = por %p185, %p186
    %p188 = scmp.ne.s32.totalorder %s180, %s182
    %p189 = scmp.eq.s32.totalorder %s25, 1
    %p190 = por %p188, %p189
    %p191 = scmp.ne.s32.totalorder %s182, %s183
    %p192 = scmp.eq.s32.totalorder %s25, 0
    %p193 = por %p191, %p192
    %p194 = scmp.ne.s32.totalorder %s182, %s183
    %p195 = scmp.eq.s32.totalorder %s26, 1
    %p196 = por %p194, %p195
    %p198 = scmp.ne.s32.totalorder %s183, %s197
    %p199 = scmp.eq.s32.totalorder %s26, 0
    %p200 = por %p198, %p199
    %s202 = sadd.s32 %s201, 1
    %p205 = scmp.eq.s32.totalorder %s20, 1
    %p206 = scmp.ne.s32.totalorder %s201, %s203
    %p207 = scmp.eq.s32.totalorder %s20, 0
    %p208 = por %p206, %p207
    %p209 = scmp.ne.s32.totalorder %s201, %s203
    %p210 = scmp.eq.s32.totalorder %s25, 1
    %p211 = por %p209, %p210
    %p212 = scmp.ne.s32.totalorder %s203, %s204
    %p213 = scmp.eq.s32.totalorder %s25, 0
    %p214 = por %p212, %p213
    %p215 = scmp.ne.s32.totalorder %s203, %s204
    %p216 = scmp.eq.s32.totalorder %s26, 1
    %p217 = por %p215, %p216
    %p219 = scmp.ne.s32.totalorder %s204, %s218
    %p220 = scmp.eq.s32.totalorder %s26, 0
    %p221 = por %p219, %p220
    %s223 = sadd.s32 %s222, 1
    %p226 = scmp.eq.s32.totalorder %s20, 1
    %p227 = scmp.ne.s32.totalorder %s222, %s224
    %p228 = scmp.eq.s32.totalorder %s20, 0
    %p229 = por %p227, %p228
    %p230 = scmp.ne.s32.totalorder %s222, %s224
    %p231 = scmp.eq.s32.totalorder %s25, 1
    %p232 = por %p230, %p231
    %p233 = scmp.ne.s32.totalorder %s224, %s225
    %p234 = scmp.eq.s32.totalorder %s25, 0
    %p235 = por %p233, %p234
    %p236 = scmp.ne.s32.totalorder %s224, %s225
    %p237 = scmp.eq.s32.totalorder %s26, 1
    %p238 = por %p236, %p237
    %p240 = scmp.ne.s32.totalorder %s225, %s239
    %p241 = scmp.eq.s32.totalorder %s26, 0
    %p242 = por %p240, %p241
    %s244 = sadd.s32 %s243, 1
    %p247 = scmp.eq.s32.totalorder %s20, 1
    %p248 = scmp.ne.s32.totalorder %s243, %s245
    %p249 = scmp.eq.s32.totalorder %s20, 0
    %p250 = por %p248, %p249
    %p251 = scmp.ne.s32.totalorder %s243, %s245
    %p252 = scmp.eq.s32.totalorder %s25, 1
    %p253 = por %p251, %p252
    %p254 = scmp.ne.s32.totalorder %s245, %s246
    %p255 = scmp.eq.s32.totalorder %s25, 0
    %p256 = por %p254, %p255
    %p257 = scmp.ne.s32.totalorder %s245, %s246
    %p258 = scmp.eq.s32.totalorder %s26, 1
    %p259 = por %p257, %p258
    %p261 = scmp.ne.s32.totalorder %s246, %s260
    %p262 = scmp.eq.s32.totalorder %s26, 0
    %p263 = por %p261, %p262
    %s265 = sadd.s32 %s264, 1
    %p268 = scmp.eq.s32.totalorder %s20, 1
    %p269 = scmp.ne.s32.totalorder %s264, %s266
    %p270 = scmp.eq.s32.totalorder %s20, 0
    %p271 = por %p269, %p270
    %p272 = scmp.ne.s32.totalorder %s264, %s266
    %p273 = scmp.eq.s32.totalorder %s25, 1
    %p274 = por %p272, %p273
    %p275 = scmp.ne.s32.totalorder %s266, %s267
    %p276 = scmp.eq.s32.totalorder %s25, 0
    %p277 = por %p275, %p276
    %p278 = scmp.ne.s32.totalorder %s266, %s267
    %p279 = scmp.eq.s32.totalorder %s26, 1
    %p280 = por %p278, %p279
    %p282 = scmp.ne.s32.totalorder %s267, %s281
    %p283 = scmp.eq.s32.totalorder %s26, 0
    %p284 = por %p282, %p283
    %s285 = ssub.s32 %s20, %s27
    %p286 = scmp.eq.s32.totalorder %s285, 0
    %s288 = sadd.s32 %s287, 1
    %s289 = scalar_select %p286, %s287, %s288
    %p292 = pneg %p286
    %p293 = scmp.eq.s32.totalorder %s20, 1
    %p294 = por %p292, %p293
    %p295 = scmp.ne.s32.totalorder %s287, %s290
    %p296 = scmp.eq.s32.totalorder %s20, 0
    %p297 = por %p295, %p296
    %p298 = scmp.ne.s32.totalorder %s287, %s290
    %p299 = scmp.eq.s32.totalorder %s25, 1
    %p300 = por %p298, %p299
    %p301 = scmp.ne.s32.totalorder %s290, %s291
    %p302 = scmp.eq.s32.totalorder %s25, 0
    %p303 = por %p301, %p302
    %p304 = scmp.ne.s32.totalorder %s290, %s291
    %p305 = scmp.eq.s32.totalorder %s26, 1
    %p306 = por %p304, %p305
    %p308 = scmp.ne.s32.totalorder %s291, %s307
    %p309 = scmp.eq.s32.totalorder %s26, 0
    %p310 = por %p308, %p309
    %p311 = scmp.le.s32.totalorder 1, %s20
    %p312 = scmp.lt.s32.totalorder %s20, 3
    %p313 = pnand %p311, %p312
    %p314 = pneg %p313
    // Predicated region
    $region9: #{tpu_custom_call.1} parent=5 // pred_check
      _
    $region10: #{tpu_custom_call.1} parent=5 // pred_check_branch
      %316 = sbr.rel (%p313) target = $region12
    $region11: #{tpu_custom_call.1} parent=5 // pred_region
      %s317 = ssub.s32 %s20, 1
      // Predicated region
      $region13: #{tpu_custom_call.1} parent=11 // pred_check
        %p318 = pneg %p67
      $region14: #{tpu_custom_call.1} parent=11 // pred_check_branch
        %320 = sbr.rel (%p318) target = $region16
      $region15: #{tpu_custom_call.1} parent=11 // pred_region
        _
      $region16: #{tpu_custom_call.1} parent=11 // pred_fallthru
        _
      // Predicated region
      $region17: #{tpu_custom_call.1} parent=11 // pred_check
        %p321 = pneg %p88
      $region18: #{tpu_custom_call.1} parent=11 // pred_check_branch
        %323 = sbr.rel (%p321) target = $region20
      $region19: #{tpu_custom_call.1} parent=11 // pred_region
        _
      $region20: #{tpu_custom_call.1} parent=11 // pred_fallthru
        _
      // Predicated region
      $region21: #{tpu_custom_call.1} parent=11 // pred_check
        %p324 = pneg %p109
      $region22: #{tpu_custom_call.1} parent=11 // pred_check_branch
        %326 = sbr.rel (%p324) target = $region24
      $region23: #{tpu_custom_call.1} parent=11 // pred_region
        _
      $region24: #{tpu_custom_call.1} parent=11 // pred_fallthru
        _
      // Predicated region
      $region25: #{tpu_custom_call.1} parent=11 // pred_check
        %p327 = pneg %p130
      $region26: #{tpu_custom_call.1} parent=11 // pred_check_branch
        %329 = sbr.rel (%p327) target = $region28
      $region27: #{tpu_custom_call.1} parent=11 // pred_region
        _
      $region28: #{tpu_custom_call.1} parent=11 // pred_fallthru
        _
      // Predicated region
      $region29: #{tpu_custom_call.1} parent=11 // pred_check
        %p330 = pneg %p151
      $region30: #{tpu_custom_call.1} parent=11 // pred_check_branch
        %332 = sbr.rel (%p330) target = $region32
      $region31: #{tpu_custom_call.1} parent=11 // pred_region
        _
      $region32: #{tpu_custom_call.1} parent=11 // pred_fallthru
        _
      // Predicated region
      $region33: #{tpu_custom_call.1} parent=11 // pred_check
        %p333 = pneg %p172
      $region34: #{tpu_custom_call.1} parent=11 // pred_check_branch
        %335 = sbr.rel (%p333) target = $region36
      $region35: #{tpu_custom_call.1} parent=11 // pred_region
        _
      $region36: #{tpu_custom_call.1} parent=11 // pred_fallthru
        _
      // Predicated region
      $region37: #{tpu_custom_call.1} parent=11 // pred_check
        %p336 = pneg %p193
      $region38: #{tpu_custom_call.1} parent=11 // pred_check_branch
        %338 = sbr.rel (%p336) target = $region40
      $region39: #{tpu_custom_call.1} parent=11 // pred_region
        _
      $region40: #{tpu_custom_call.1} parent=11 // pred_fallthru
        _
      // Predicated region
      $region41: #{tpu_custom_call.1} parent=11 // pred_check
        %p339 = pneg %p214
      $region42: #{tpu_custom_call.1} parent=11 // pred_check_branch
        %341 = sbr.rel (%p339) target = $region44
      $region43: #{tpu_custom_call.1} parent=11 // pred_region
        _
      $region44: #{tpu_custom_call.1} parent=11 // pred_fallthru
        _
      // Predicated region
      $region45: #{tpu_custom_call.1} parent=11 // pred_check
        %p342 = pneg %p235
      $region46: #{tpu_custom_call.1} parent=11 // pred_check_branch
        %344 = sbr.rel (%p342) target = $region48
      $region47: #{tpu_custom_call.1} parent=11 // pred_region
        _
      $region48: #{tpu_custom_call.1} parent=11 // pred_fallthru
        _
      // Predicated region
      $region49: #{tpu_custom_call.1} parent=11 // pred_check
        %p345 = pneg %p256
      $region50: #{tpu_custom_call.1} parent=11 // pred_check_branch
        %347 = sbr.rel (%p345) target = $region52
      $region51: #{tpu_custom_call.1} parent=11 // pred_region
        _
      $region52: #{tpu_custom_call.1} parent=11 // pred_fallthru
        _
      // Predicated region
      $region53: #{tpu_custom_call.1} parent=11 // pred_check
        %p348 = pneg %p277
      $region54: #{tpu_custom_call.1} parent=11 // pred_check_branch
        %350 = sbr.rel (%p348) target = $region56
      $region55: #{tpu_custom_call.1} parent=11 // pred_region
        _
      $region56: #{tpu_custom_call.1} parent=11 // pred_fallthru
        _
    $region12: #{tpu_custom_call.1} parent=5 // pred_fallthru
      _
    %p351 = scmp.lt.s32.totalorder %s20, 2
    // Predicated region
    $region57: #{tpu_custom_call.1} parent=5 // pred_check
      %p352 = pneg %p351
    $region58: #{tpu_custom_call.1} parent=5 // pred_check_branch
      %354 = sbr.rel (%p352) target = $region60
    $region59: #{tpu_custom_call.1} parent=5 // pred_region
      // Predicated region
      $region61: #{tpu_custom_call.1} parent=59 // pred_check
        %p355 = pneg %p40
      $region62: #{tpu_custom_call.1} parent=59 // pred_check_branch
        %357 = sbr.rel (%p355) target = $region64
      $region63: #{tpu_custom_call.1} parent=59 // pred_region
        %s358 = smul.u32 64, %s20
        %p359 = scmp.lt.s32.totalorder %s358, 127
        %s360 = scalar_select %p359, %s358, 127
        %s361 = smul.addr %s360, 4
        %s362 = scalar_lea.vmem %s0, %s361
        %s363 = smul.u32 64, %s20
      $region64: #{tpu_custom_call.1} parent=59 // pred_fallthru
        _
    $region60: #{tpu_custom_call.1} parent=5 // pred_fallthru
      _
    %p364 = scmp.le.s32.totalorder 1, %s20
    %p365 = scmp.lt.s32.totalorder %s20, 3
    %p366 = pnand %p364, %p365
    %p367 = pneg %p366
    // Predicated region
    $region65: #{tpu_custom_call.1} parent=5 // pred_check
      _
    $region66: #{tpu_custom_call.1} parent=5 // pred_check_branch
      %369 = sbr.rel (%p366) target = $region68
    $region67: #{tpu_custom_call.1} parent=5 // pred_region
      %s370 = ssub.s32 %s20, 1
      %s371 = smul.u32 64, %s25
      %p372 = scmp.lt.s32.totalorder %s371, 127
      %s373 = scalar_select %p372, %s371, 127
      %s374 = smul.addr %s373, 4
      %s375 = scalar_lea.vmem %s0, %s374
      %p376 = pneg %p46
      %p377 = pneg %p43
      %p378 = pneg %p67
      %p379 = pneg %p64
      %p380 = pneg %p88
      %p381 = pneg %p85
      %p382 = pneg %p109
      %p383 = pneg %p106
      %p384 = pneg %p130
      %p385 = pneg %p127
      %p386 = pneg %p151
      %p387 = pneg %p148
      %p388 = pneg %p172
      %p389 = pneg %p169
      %p390 = pneg %p193
      %p391 = pneg %p190
      %p392 = pneg %p214
      %p393 = pneg %p211
      %p394 = pneg %p235
      %p395 = pneg %p232
      %p396 = pneg %p256
      %p397 = pneg %p253
      %p398 = pneg %p277
      %p399 = pneg %p274
      %p400 = pneg %p303
      %p401 = pneg %p300
      %s402 = smul.u32 64, %s25
      %p403 = scmp.lt.s32.totalorder %s402, 127
      %s404 = scalar_select %p403, %s402, 127
      %s405 = smul.addr %s404, 8
      %s406 = scalar_lea.vmem %s12, %s405
      %s407 = smul.u32 64, %s25
      %p408 = scmp.lt.s32.totalorder %s407, 127
      %s409 = scalar_select %p408, %s407, 127
      %s410 = smul.addr %s409, 4
      %s411 = scalar_lea.vmem %s0, %s410
      %s412 = smul.u32 64, %s25
      %s413 = smul.u32 64, %s25
      %p414 = scmp.lt.s32.totalorder %s413, 127
      %s415 = scalar_select %p414, %s413, 127
      %s416 = smul.addr %s415, 8
      %s417 = scalar_lea.vmem %s12, %s416
      %s418 = smul.u32 64, %s25
      %v420 = vld [vmem:[%s411] sm:$0xf]
      %v421 = vld [vmem:[%s411 + $0x4] sm:$0xf]
      %v422 = vld [vmem:[%s411 + $0x8] sm:$0xf]
      %v423 = vld [vmem:[%s411 + $0xc] sm:$0xf]
      %v424 = vld [vmem:[%s411 + $0x10] sm:$0xf]
      %v425 = vld [vmem:[%s411 + $0x14] sm:$0xf]
      %v426 = vld [vmem:[%s411 + $0x18] sm:$0xf]
      %v427 = vld [vmem:[%s411 + $0x1c] sm:$0xf]
      %v428 = vld [vmem:[%s411 + $0x20] sm:$0xf]
      %v429 = vld [vmem:[%s411 + $0x24] sm:$0xf]
      %v430 = vld [vmem:[%s411 + $0x28] sm:$0xf]
      %v431 = vld [vmem:[%s411 + $0x2c] sm:$0xf]
      %v432 = vld [vmem:[%s411 + $0x30] sm:$0xf]
      %v433 = vld [vmem:[%s411 + $0x34] sm:$0xf]
      %v434 = vld [vmem:[%s411 + $0x38] sm:$0xf]
      %v435 = vld [vmem:[%s411 + $0x3c] sm:$0xf]
      %v436 = vld [vmem:[%s411 + $0x40] sm:$0xf]
      %v437 = vld [vmem:[%s411 + $0x44] sm:$0xf]
      %v438 = vld [vmem:[%s411 + $0x48] sm:$0xf]
      %v439 = vld [vmem:[%s411 + $0x4c] sm:$0xf]
      %v440 = vld [vmem:[%s411 + $0x50] sm:$0xf]
      %v441 = vld [vmem:[%s411 + $0x54] sm:$0xf]
      %v442 = vld [vmem:[%s411 + $0x58] sm:$0xf]
      %v443 = vld [vmem:[%s411 + $0x5c] sm:$0xf]
      %v444 = vld [vmem:[%s411 + $0x60] sm:$0xf]
      %v445 = vld [vmem:[%s411 + $0x64] sm:$0xf]
      %v446 = vld [vmem:[%s411 + $0x68] sm:$0xf]
      %v447 = vld [vmem:[%s411 + $0x6c] sm:$0xf]
      %v448 = vld [vmem:[%s411 + $0x70] sm:$0xf]
      %v449 = vld [vmem:[%s411 + $0x74] sm:$0xf]
      %v450 = vld [vmem:[%s411 + $0x78] sm:$0xf]
      %v451 = vld [vmem:[%s411 + $0x7c] sm:$0xf]
      %v452 = vld [vmem:[%s411 + $0x80] sm:$0xf]
      %v453 = vld [vmem:[%s411 + $0x84] sm:$0xf]
      %v454 = vld [vmem:[%s411 + $0x88] sm:$0xf]
      %v455 = vld [vmem:[%s411 + $0x8c] sm:$0xf]
      %v456 = vld [vmem:[%s411 + $0x90] sm:$0xf]
      %v457 = vld [vmem:[%s411 + $0x94] sm:$0xf]
      %v458 = vld [vmem:[%s411 + $0x98] sm:$0xf]
      %v459 = vld [vmem:[%s411 + $0x9c] sm:$0xf]
      %v460 = vld [vmem:[%s411 + $0xa0] sm:$0xf]
      %v461 = vld [vmem:[%s411 + $0xa4] sm:$0xf]
      %v462 = vld [vmem:[%s411 + $0xa8] sm:$0xf]
      %v463 = vld [vmem:[%s411 + $0xac] sm:$0xf]
      %v464 = vld [vmem:[%s411 + $0xb0] sm:$0xf]
      %v465 = vld [vmem:[%s411 + $0xb4] sm:$0xf]
      %v466 = vld [vmem:[%s411 + $0xb8] sm:$0xf]
      %v467 = vld [vmem:[%s411 + $0xbc] sm:$0xf]
      %v468 = vld [vmem:[%s411 + $0xc0] sm:$0xf]
      %v469 = vld [vmem:[%s411 + $0xc4] sm:$0xf]
      %v470 = vld [vmem:[%s411 + $0xc8] sm:$0xf]
      %v471 = vld [vmem:[%s411 + $0xcc] sm:$0xf]
      %v472 = vld [vmem:[%s411 + $0xd0] sm:$0xf]
      %v473 = vld [vmem:[%s411 + $0xd4] sm:$0xf]
      %v474 = vld [vmem:[%s411 + $0xd8] sm:$0xf]
      %v475 = vld [vmem:[%s411 + $0xdc] sm:$0xf]
      %v476 = vld [vmem:[%s411 + $0xe0] sm:$0xf]
      %v477 = vld [vmem:[%s411 + $0xe4] sm:$0xf]
      %v478 = vld [vmem:[%s411 + $0xe8] sm:$0xf]
      %v479 = vld [vmem:[%s411 + $0xec] sm:$0xf]
      %v480 = vld [vmem:[%s411 + $0xf0] sm:$0xf]
      %v481 = vld [vmem:[%s411 + $0xf4] sm:$0xf]
      %v482 = vld [vmem:[%s411 + $0xf8] sm:$0xf]
      %v483 = vld [vmem:[%s411 + $0xfc] sm:$0xf]
      %v484 = vunpack.c.l.bf16 %v420
      %v485 = vunpack.c.l.bf16 %v421
      %v486 = vunpack.c.l.bf16 %v422
      %v487 = vunpack.c.l.bf16 %v423
      %v488 = vunpack.c.l.bf16 %v424
      %v489 = vunpack.c.l.bf16 %v425
      %v490 = vunpack.c.l.bf16 %v426
      %v491 = vunpack.c.l.bf16 %v427
      %v492 = vunpack.c.l.bf16 %v428
      %v493 = vunpack.c.l.bf16 %v429
      %v494 = vunpack.c.l.bf16 %v430
      %v495 = vunpack.c.l.bf16 %v431
      %v496 = vunpack.c.l.bf16 %v432
      %v497 = vunpack.c.l.bf16 %v433
      %v498 = vunpack.c.l.bf16 %v434
      %v499 = vunpack.c.l.bf16 %v435
      %v500 = vunpack.c.l.bf16 %v436
      %v501 = vunpack.c.l.bf16 %v437
      %v502 = vunpack.c.l.bf16 %v438
      %v503 = vunpack.c.l.bf16 %v439
      %v504 = vunpack.c.l.bf16 %v440
      %v505 = vunpack.c.l.bf16 %v441
      %v506 = vunpack.c.l.bf16 %v442
      %v507 = vunpack.c.l.bf16 %v443
      %v508 = vunpack.c.l.bf16 %v444
      %v509 = vunpack.c.l.bf16 %v445
      %v510 = vunpack.c.l.bf16 %v446
      %v511 = vunpack.c.l.bf16 %v447
      %v512 = vunpack.c.l.bf16 %v448
      %v513 = vunpack.c.l.bf16 %v449
      %v514 = vunpack.c.l.bf16 %v450
      %v515 = vunpack.c.l.bf16 %v451
      %v516 = vunpack.c.l.bf16 %v452
      %v517 = vunpack.c.l.bf16 %v453
      %v518 = vunpack.c.l.bf16 %v454
      %v519 = vunpack.c.l.bf16 %v455
      %v520 = vunpack.c.l.bf16 %v456
      %v521 = vunpack.c.l.bf16 %v457
      %v522 = vunpack.c.l.bf16 %v458
      %v523 = vunpack.c.l.bf16 %v459
      %v524 = vunpack.c.l.bf16 %v460
      %v525 = vunpack.c.l.bf16 %v461
      %v526 = vunpack.c.l.bf16 %v462
      %v527 = vunpack.c.l.bf16 %v463
      %v528 = vunpack.c.l.bf16 %v464
      %v529 = vunpack.c.l.bf16 %v465
      %v530 = vunpack.c.l.bf16 %v466
      %v531 = vunpack.c.l.bf16 %v467
      %v532 = vunpack.c.l.bf16 %v468
      %v533 = vunpack.c.l.bf16 %v469
      %v534 = vunpack.c.l.bf16 %v470
      %v535 = vunpack.c.l.bf16 %v471
      %v536 = vunpack.c.l.bf16 %v472
      %v537 = vunpack.c.l.bf16 %v473
      %v538 = vunpack.c.l.bf16 %v474
      %v539 = vunpack.c.l.bf16 %v475
      %v540 = vunpack.c.l.bf16 %v476
      %v541 = vunpack.c.l.bf16 %v477
      %v542 = vunpack.c.l.bf16 %v478
      %v543 = vunpack.c.l.bf16 %v479
      %v544 = vunpack.c.l.bf16 %v480
      %v545 = vunpack.c.l.bf16 %v481
      %v546 = vunpack.c.l.bf16 %v482
      %v547 = vunpack.c.l.bf16 %v483
      %v548 = vld [vmem:[%s2] sm:$0x1]
      %vm549 = vcmask 130048
      %v550 = vsel %vm549, %v484, -inf
      %551 = vmax.xlane.f32.xlu0 %v550
      %v552 = vpop.xlane.xlu0 %551
      %v553 = vsel %vm549, %v485, -inf
      %554 = vmax.xlane.f32.xlu0 %v553
      %v555 = vpop.xlane.xlu0 %554
      %v556 = vsel %vm549, %v486, -inf
      %557 = vmax.xlane.f32.xlu0 %v556
      %v558 = vpop.xlane.xlu0 %557
      %v559 = vsel %vm549, %v487, -inf
      %560 = vmax.xlane.f32.xlu0 %v559
      %v561 = vpop.xlane.xlu0 %560
      %v562 = vsel %vm549, %v488, -inf
      %563 = vmax.xlane.f32.xlu0 %v562
      %v564 = vpop.xlane.xlu0 %563
      %v565 = vsel %vm549, %v489, -inf
      %566 = vmax.xlane.f32.xlu0 %v565
      %v567 = vpop.xlane.xlu0 %566
      %v568 = vsel %vm549, %v490, -inf
      %569 = vmax.xlane.f32.xlu0 %v568
      %v570 = vpop.xlane.xlu0 %569
      %v571 = vsel %vm549, %v491, -inf
      %572 = vmax.xlane.f32.xlu0 %v571
      %v573 = vpop.xlane.xlu0 %572
      %v574 = vsel %vm549, %v492, -inf
      %575 = vmax.xlane.f32.xlu0 %v574
      %v576 = vpop.xlane.xlu0 %575
      %v577 = vsel %vm549, %v493, -inf
      %578 = vmax.xlane.f32.xlu0 %v577
      %v579 = vpop.xlane.xlu0 %578
      %v580 = vsel %vm549, %v494, -inf
      %581 = vmax.xlane.f32.xlu0 %v580
      %v582 = vpop.xlane.xlu0 %581
      %v583 = vsel %vm549, %v495, -inf
      %584 = vmax.xlane.f32.xlu0 %v583
      %v585 = vpop.xlane.xlu0 %584
      %v586 = vsel %vm549, %v496, -inf
      %587 = vmax.xlane.f32.xlu0 %v586
      %v588 = vpop.xlane.xlu0 %587
      %v589 = vsel %vm549, %v497, -inf
      %590 = vmax.xlane.f32.xlu0 %v589
      %v591 = vpop.xlane.xlu0 %590
      %v592 = vsel %vm549, %v498, -inf
      %593 = vmax.xlane.f32.xlu0 %v592
      %v594 = vpop.xlane.xlu0 %593
      %v595 = vsel %vm549, %v499, -inf
      %596 = vmax.xlane.f32.xlu0 %v595
      %v597 = vpop.xlane.xlu0 %596
      %v598 = vsel %vm549, %v500, -inf
      %599 = vmax.xlane.f32.xlu0 %v598
      %v600 = vpop.xlane.xlu0 %599
      %v601 = vsel %vm549, %v501, -inf
      %602 = vmax.xlane.f32.xlu0 %v601
      %v603 = vpop.xlane.xlu0 %602
      %v604 = vsel %vm549, %v502, -inf
      %605 = vmax.xlane.f32.xlu0 %v604
      %v606 = vpop.xlane.xlu0 %605
      %v607 = vsel %vm549, %v503, -inf
      %608 = vmax.xlane.f32.xlu0 %v607
      %v609 = vpop.xlane.xlu0 %608
      %v610 = vsel %vm549, %v504, -inf
      %611 = vmax.xlane.f32.xlu0 %v610
      %v612 = vpop.xlane.xlu0 %611
      %v613 = vsel %vm549, %v505, -inf
      %614 = vmax.xlane.f32.xlu0 %v613
      %v615 = vpop.xlane.xlu0 %614
      %v616 = vsel %vm549, %v506, -inf
      %617 = vmax.xlane.f32.xlu0 %v616
      %v618 = vpop.xlane.xlu0 %617
      %v619 = vsel %vm549, %v507, -inf
      %620 = vmax.xlane.f32.xlu0 %v619
      %v621 = vpop.xlane.xlu0 %620
      %v622 = vsel %vm549, %v508, -inf
      %623 = vmax.xlane.f32.xlu0 %v622
      %v624 = vpop.xlane.xlu0 %623
      %v625 = vsel %vm549, %v509, -inf
      %626 = vmax.xlane.f32.xlu0 %v625
      %v627 = vpop.xlane.xlu0 %626
      %v628 = vsel %vm549, %v510, -inf
      %629 = vmax.xlane.f32.xlu0 %v628
      %v630 = vpop.xlane.xlu0 %629
      %v631 = vsel %vm549, %v511, -inf
      %632 = vmax.xlane.f32.xlu0 %v631
      %v633 = vpop.xlane.xlu0 %632
      %v634 = vsel %vm549, %v512, -inf
      %635 = vmax.xlane.f32.xlu0 %v634
      %v636 = vpop.xlane.xlu0 %635
      %v637 = vsel %vm549, %v513, -inf
      %638 = vmax.xlane.f32.xlu0 %v637
      %v639 = vpop.xlane.xlu0 %638
      %v640 = vsel %vm549, %v514, -inf
      %641 = vmax.xlane.f32.xlu0 %v640
      %v642 = vpop.xlane.xlu0 %641
      %v643 = vsel %vm549, %v515, -inf
      %644 = vmax.xlane.f32.xlu0 %v643
      %v645 = vpop.xlane.xlu0 %644
      %v646 = vsel %vm549, %v516, -inf
      %647 = vmax.xlane.f32.xlu0 %v646
      %v648 = vpop.xlane.xlu0 %647
      %v649 = vsel %vm549, %v517, -inf
      %650 = vmax.xlane.f32.xlu0 %v649
      %v651 = vpop.xlane.xlu0 %650
      %v652 = vsel %vm549, %v518, -inf
      %653 = vmax.xlane.f32.xlu0 %v652
      %v654 = vpop.xlane.xlu0 %653
      %v655 = vsel %vm549, %v519, -inf
      %656 = vmax.xlane.f32.xlu0 %v655
      %v657 = vpop.xlane.xlu0 %656
      %v658 = vsel %vm549, %v520, -inf
      %659 = vmax.xlane.f32.xlu0 %v658
      %v660 = vpop.xlane.xlu0 %659
      %v661 = vsel %vm549, %v521, -inf
      %662 = vmax.xlane.f32.xlu0 %v661
      %v663 = vpop.xlane.xlu0 %662
      %v664 = vsel %vm549, %v522, -inf
      %665 = vmax.xlane.f32.xlu0 %v664
      %v666 = vpop.xlane.xlu0 %665
      %v667 = vsel %vm549, %v523, -inf
      %668 = vmax.xlane.f32.xlu0 %v667
      %v669 = vpop.xlane.xlu0 %668
      %v670 = vsel %vm549, %v524, -inf
      %671 = vmax.xlane.f32.xlu0 %v670
      %v672 = vpop.xlane.xlu0 %671
      %v673 = vsel %vm549, %v525, -inf
      %674 = vmax.xlane.f32.xlu0 %v673
      %v675 = vpop.xlane.xlu0 %674
      %v676 = vsel %vm549, %v526, -inf
      %677 = vmax.xlane.f32.xlu0 %v676
      %v678 = vpop.xlane.xlu0 %677
      %v679 = vsel %vm549, %v527, -inf
      %680 = vmax.xlane.f32.xlu0 %v679
      %v681 = vpop.xlane.xlu0 %680
      %v682 = vsel %vm549, %v528, -inf
      %683 = vmax.xlane.f32.xlu0 %v682
      %v684 = vpop.xlane.xlu0 %683
      %v685 = vsel %vm549, %v529, -inf
      %686 = vmax.xlane.f32.xlu0 %v685
      %v687 = vpop.xlane.xlu0 %686
      %v688 = vsel %vm549, %v530, -inf
      %689 = vmax.xlane.f32.xlu0 %v688
      %v690 = vpop.xlane.xlu0 %689
      %v691 = vsel %vm549, %v531, -inf
      %692 = vmax.xlane.f32.xlu0 %v691
      %v693 = vpop.xlane.xlu0 %692
      %v694 = vsel %vm549, %v532, -inf
      %695 = vmax.xlane.f32.xlu0 %v694
      %v696 = vpop.xlane.xlu0 %695
      %v697 = vsel %vm549, %v533, -inf
      %698 = vmax.xlane.f32.xlu0 %v697
      %v699 = vpop.xlane.xlu0 %698
      %v700 = vsel %vm549, %v534, -inf
      %701 = vmax.xlane.f32.xlu0 %v700
      %v702 = vpop.xlane.xlu0 %701
      %v703 = vsel %vm549, %v535, -inf
      %704 = vmax.xlane.f32.xlu0 %v703
      %v705 = vpop.xlane.xlu0 %704
      %v706 = vsel %vm549, %v536, -inf
      %707 = vmax.xlane.f32.xlu0 %v706
      %v708 = vpop.xlane.xlu0 %707
      %v709 = vsel %vm549, %v537, -inf
      %710 = vmax.xlane.f32.xlu0 %v709
      %v711 = vpop.xlane.xlu0 %710
      %v712 = vsel %vm549, %v538, -inf
      %713 = vmax.xlane.f32.xlu0 %v712
      %v714 = vpop.xlane.xlu0 %713
      %v715 = vsel %vm549, %v539, -inf
      %716 = vmax.xlane.f32.xlu0 %v715
      %v717 = vpop.xlane.xlu0 %716
      %v718 = vsel %vm549, %v540, -inf
      %719 = vmax.xlane.f32.xlu0 %v718
      %v720 = vpop.xlane.xlu0 %719
      %v721 = vsel %vm549, %v541, -inf
      %722 = vmax.xlane.f32.xlu0 %v721
      %v723 = vpop.xlane.xlu0 %722
      %v724 = vsel %vm549, %v542, -inf
      %725 = vmax.xlane.f32.xlu0 %v724
      %v726 = vpop.xlane.xlu0 %725
      %v727 = vsel %vm549, %v543, -inf
      %728 = vmax.xlane.f32.xlu0 %v727
      %v729 = vpop.xlane.xlu0 %728
      %v730 = vsel %vm549, %v544, -inf
      %731 = vmax.xlane.f32.xlu0 %v730
      %v732 = vpop.xlane.xlu0 %731
      %v733 = vsel %vm549, %v545, -inf
      %734 = vmax.xlane.f32.xlu0 %v733
      %v735 = vpop.xlane.xlu0 %734
      %v736 = vsel %vm549, %v546, -inf
      %737 = vmax.xlane.f32.xlu0 %v736
      %v738 = vpop.xlane.xlu0 %737
      %v739 = vsel %vm549, %v547, -inf
      %740 = vmax.xlane.f32.xlu0 %v739
      %v741 = vpop.xlane.xlu0 %740
      %v742 = vld [vmem:[%s1] sm:$0x1]
      %v743 = vlaneseq
      %v744 = vshrl.u32 %v743, 7
      %v745 = vsub.s32 0, %v744
      %v746 = vrot.slane %v742, %v745
      %v747 = vmul.f32 %v552, %v746
      %v748 = vmul.f32 %v555, %v746
      %v749 = vmul.f32 %v558, %v746
      %v750 = vmul.f32 %v561, %v746
      %v751 = vmul.f32 %v564, %v746
      %v752 = vmul.f32 %v567, %v746
      %v753 = vmul.f32 %v570, %v746
      %v754 = vmul.f32 %v573, %v746
      %v755 = vmul.f32 %v576, %v746
      %v756 = vmul.f32 %v579, %v746
      %v757 = vmul.f32 %v582, %v746
      %v758 = vmul.f32 %v585, %v746
      %v759 = vmul.f32 %v588, %v746
      %v760 = vmul.f32 %v591, %v746
      %v761 = vmul.f32 %v594, %v746
      %v762 = vmul.f32 %v597, %v746
      %v763 = vmul.f32 %v600, %v746
      %v764 = vmul.f32 %v603, %v746
      %v765 = vmul.f32 %v606, %v746
      %v766 = vmul.f32 %v609, %v746
      %v767 = vmul.f32 %v612, %v746
      %v768 = vmul.f32 %v615, %v746
      %v769 = vmul.f32 %v618, %v746
      %v770 = vmul.f32 %v621, %v746
      %v771 = vmul.f32 %v624, %v746
      %v772 = vmul.f32 %v627, %v746
      %v773 = vmul.f32 %v630, %v746
      %v774 = vmul.f32 %v633, %v746
      %v775 = vmul.f32 %v636, %v746
      %v776 = vmul.f32 %v639, %v746
      %v777 = vmul.f32 %v642, %v746
      %v778 = vmul.f32 %v645, %v746
      %v779 = vmul.f32 %v648, %v746
      %v780 = vmul.f32 %v651, %v746
      %v781 = vmul.f32 %v654, %v746
      %v782 = vmul.f32 %v657, %v746
      %v783 = vmul.f32 %v660, %v746
      %v784 = vmul.f32 %v663, %v746
      %v785 = vmul.f32 %v666, %v746
      %v786 = vmul.f32 %v669, %v746
      %v787 = vmul.f32 %v672, %v746
      %v788 = vmul.f32 %v675, %v746
      %v789 = vmul.f32 %v678, %v746
      %v790 = vmul.f32 %v681, %v746
      %v791 = vmul.f32 %v684, %v746
      %v792 = vmul.f32 %v687, %v746
      %v793 = vmul.f32 %v690, %v746
      %v794 = vmul.f32 %v693, %v746
      %v795 = vmul.f32 %v696, %v746
      %v796 = vmul.f32 %v699, %v746
      %v797 = vmul.f32 %v702, %v746
      %v798 = vmul.f32 %v705, %v746
      %v799 = vmul.f32 %v708, %v746
      %v800 = vmul.f32 %v711, %v746
      %v801 = vmul.f32 %v714, %v746
      %v802 = vmul.f32 %v717, %v746
      %v803 = vmul.f32 %v720, %v746
      %v804 = vmul.f32 %v723, %v746
      %v805 = vmul.f32 %v726, %v746
      %v806 = vmul.f32 %v729, %v746
      %v807 = vmul.f32 %v732, %v746
      %v808 = vmul.f32 %v735, %v746
      %v809 = vmul.f32 %v738, %v746
      %v810 = vmul.f32 %v741, %v746
      %v812 = vlaneseq
      %v813 = vshrl.u32 %v812, 7
      %v814 = vsub.s32 0, %v813
      %v815 = vrot.slane %v548, %v814
      %v817 = vadd.f32 %v815, %v747
      %v818 = vadd.f32 %v815, %v748
      %v819 = vadd.f32 %v815, %v749
      %v820 = vadd.f32 %v815, %v750
      %v821 = vadd.f32 %v815, %v751
      %v822 = vadd.f32 %v815, %v752
      %v823 = vadd.f32 %v815, %v753
      %v824 = vadd.f32 %v815, %v754
      %v825 = vadd.f32 %v815, %v755
      %v826 = vadd.f32 %v815, %v756
      %v827 = vadd.f32 %v815, %v757
      %v828 = vadd.f32 %v815, %v758
      %v829 = vadd.f32 %v815, %v759
      %v830 = vadd.f32 %v815, %v760
      %v831 = vadd.f32 %v815, %v761
      %v832 = vadd.f32 %v815, %v762
      %v833 = vadd.f32 %v815, %v763
      %v834 = vadd.f32 %v815, %v764
      %v835 = vadd.f32 %v815, %v765
      %v836 = vadd.f32 %v815, %v766
      %v837 = vadd.f32 %v815, %v767
      %v838 = vadd.f32 %v815, %v768
      %v839 = vadd.f32 %v815, %v769
      %v840 = vadd.f32 %v815, %v770
      %v841 = vadd.f32 %v815, %v771
      %v842 = vadd.f32 %v815, %v772
      %v843 = vadd.f32 %v815, %v773
      %v844 = vadd.f32 %v815, %v774
      %v845 = vadd.f32 %v815, %v775
      %v846 = vadd.f32 %v815, %v776
      %v847 = vadd.f32 %v815, %v777
      %v848 = vadd.f32 %v815, %v778
      %v849 = vadd.f32 %v815, %v779
      %v850 = vadd.f32 %v815, %v780
      %v851 = vadd.f32 %v815, %v781
      %v852 = vadd.f32 %v815, %v782
      %v853 = vadd.f32 %v815, %v783
      %v854 = vadd.f32 %v815, %v784
      %v855 = vadd.f32 %v815, %v785
      %v856 = vadd.f32 %v815, %v786
      %v857 = vadd.f32 %v815, %v787
      %v858 = vadd.f32 %v815, %v788
      %v859 = vadd.f32 %v815, %v789
      %v860 = vadd.f32 %v815, %v790
      %v861 = vadd.f32 %v815, %v791
      %v862 = vadd.f32 %v815, %v792
      %v863 = vadd.f32 %v815, %v793
      %v864 = vadd.f32 %v815, %v794
      %v865 = vadd.f32 %v815, %v795
      %v866 = vadd.f32 %v815, %v796
      %v867 = vadd.f32 %v815, %v797
      %v868 = vadd.f32 %v815, %v798
      %v869 = vadd.f32 %v815, %v799
      %v870 = vadd.f32 %v815, %v800
      %v871 = vadd.f32 %v815, %v801
      %v872 = vadd.f32 %v815, %v802
      %v873 = vadd.f32 %v815, %v803
      %v874 = vadd.f32 %v815, %v804
      %v875 = vadd.f32 %v815, %v805
      %v876 = vadd.f32 %v815, %v806
      %v877 = vadd.f32 %v815, %v807
      %v878 = vadd.f32 %v815, %v808
      %v879 = vadd.f32 %v815, %v809
      %v880 = vadd.f32 %v815, %v810
      %vm881 = vcmask 261248
      %v882 = vsel %vm881, %v484, -inf
      %883 = vmax.xlane.f32.xlu0 %v882
      %v884 = vpop.xlane.xlu0 %883
      %v885 = vsel %vm881, %v485, -inf
      %886 = vmax.xlane.f32.xlu0 %v885
      %v887 = vpop.xlane.xlu0 %886
      %v888 = vsel %vm881, %v486, -inf
      %889 = vmax.xlane.f32.xlu0 %v888
      %v890 = vpop.xlane.xlu0 %889
      %v891 = vsel %vm881, %v487, -inf
      %892 = vmax.xlane.f32.xlu0 %v891
      %v893 = vpop.xlane.xlu0 %892
      %v894 = vsel %vm881, %v488, -inf
      %895 = vmax.xlane.f32.xlu0 %v894
      %v896 = vpop.xlane.xlu0 %895
      %v897 = vsel %vm881, %v489, -inf
      %898 = vmax.xlane.f32.xlu0 %v897
      %v899 = vpop.xlane.xlu0 %898
      %v900 = vsel %vm881, %v490, -inf
      %901 = vmax.xlane.f32.xlu0 %v900
      %v902 = vpop.xlane.xlu0 %901
      %v903 = vsel %vm881, %v491, -inf
      %904 = vmax.xlane.f32.xlu0 %v903
      %v905 = vpop.xlane.xlu0 %904
      %v906 = vsel %vm881, %v492, -inf
      %907 = vmax.xlane.f32.xlu0 %v906
      %v908 = vpop.xlane.xlu0 %907
      %v909 = vsel %vm881, %v493, -inf
      %910 = vmax.xlane.f32.xlu0 %v909
      %v911 = vpop.xlane.xlu0 %910
      %v912 = vsel %vm881, %v494, -inf
      %913 = vmax.xlane.f32.xlu0 %v912
      %v914 = vpop.xlane.xlu0 %913
      %v915 = vsel %vm881, %v495, -inf
      %916 = vmax.xlane.f32.xlu0 %v915
      %v917 = vpop.xlane.xlu0 %916
      %v918 = vsel %vm881, %v496, -inf
      %919 = vmax.xlane.f32.xlu0 %v918
      %v920 = vpop.xlane.xlu0 %919
      %v921 = vsel %vm881, %v497, -inf
      %922 = vmax.xlane.f32.xlu0 %v921
      %v923 = vpop.xlane.xlu0 %922
      %v924 = vsel %vm881, %v498, -inf
      %925 = vmax.xlane.f32.xlu0 %v924
      %v926 = vpop.xlane.xlu0 %925
      %v927 = vsel %vm881, %v499, -inf
      %928 = vmax.xlane.f32.xlu0 %v927
      %v929 = vpop.xlane.xlu0 %928
      %v930 = vsel %vm881, %v500, -inf
      %931 = vmax.xlane.f32.xlu0 %v930
      %v932 = vpop.xlane.xlu0 %931
      %v933 = vsel %vm881, %v501, -inf
      %934 = vmax.xlane.f32.xlu0 %v933
      %v935 = vpop.xlane.xlu0 %934
      %v936 = vsel %vm881, %v502, -inf
      %937 = vmax.xlane.f32.xlu0 %v936
      %v938 = vpop.xlane.xlu0 %937
      %v939 = vsel %vm881, %v503, -inf
      %940 = vmax.xlane.f32.xlu0 %v939
      %v941 = vpop.xlane.xlu0 %940
      %v942 = vsel %vm881, %v504, -inf
      %943 = vmax.xlane.f32.xlu0 %v942
      %v944 = vpop.xlane.xlu0 %943
      %v945 = vsel %vm881, %v505, -inf
      %946 = vmax.xlane.f32.xlu0 %v945
      %v947 = vpop.xlane.xlu0 %946
      %v948 = vsel %vm881, %v506, -inf
      %949 = vmax.xlane.f32.xlu0 %v948
      %v950 = vpop.xlane.xlu0 %949
      %v951 = vsel %vm881, %v507, -inf
      %952 = vmax.xlane.f32.xlu0 %v951
      %v953 = vpop.xlane.xlu0 %952
      %v954 = vsel %vm881, %v508, -inf
      %955 = vmax.xlane.f32.xlu0 %v954
      %v956 = vpop.xlane.xlu0 %955
      %v957 = vsel %vm881, %v509, -inf
      %958 = vmax.xlane.f32.xlu0 %v957
      %v959 = vpop.xlane.xlu0 %958
      %v960 = vsel %vm881, %v510, -inf
      %961 = vmax.xlane.f32.xlu0 %v960
      %v962 = vpop.xlane.xlu0 %961
      %v963 = vsel %vm881, %v511, -inf
      %964 = vmax.xlane.f32.xlu0 %v963
      %v965 = vpop.xlane.xlu0 %964
      %v966 = vsel %vm881, %v512, -inf
      %967 = vmax.xlane.f32.xlu0 %v966
      %v968 = vpop.xlane.xlu0 %967
      %v969 = vsel %vm881, %v513, -inf
      %970 = vmax.xlane.f32.xlu0 %v969
      %v971 = vpop.xlane.xlu0 %970
      %v972 = vsel %vm881, %v514, -inf
      %973 = vmax.xlane.f32.xlu0 %v972
      %v974 = vpop.xlane.xlu0 %973
      %v975 = vsel %vm881, %v515, -inf
      %976 = vmax.xlane.f32.xlu0 %v975
      %v977 = vpop.xlane.xlu0 %976
      %v978 = vsel %vm881, %v516, -inf
      %979 = vmax.xlane.f32.xlu0 %v978
      %v980 = vpop.xlane.xlu0 %979
      %v981 = vsel %vm881, %v517, -inf
      %982 = vmax.xlane.f32.xlu0 %v981
      %v983 = vpop.xlane.xlu0 %982
      %v984 = vsel %vm881, %v518, -inf
      %985 = vmax.xlane.f32.xlu0 %v984
      %v986 = vpop.xlane.xlu0 %985
      %v987 = vsel %vm881, %v519, -inf
      %988 = vmax.xlane.f32.xlu0 %v987
      %v989 = vpop.xlane.xlu0 %988
      %v990 = vsel %vm881, %v520, -inf
      %991 = vmax.xlane.f32.xlu0 %v990
      %v992 = vpop.xlane.xlu0 %991
      %v993 = vsel %vm881, %v521, -inf
      %994 = vmax.xlane.f32.xlu0 %v993
      %v995 = vpop.xlane.xlu0 %994
      %v996 = vsel %vm881, %v522, -inf
      %997 = vmax.xlane.f32.xlu0 %v996
      %v998 = vpop.xlane.xlu0 %997
      %v999 = vsel %vm881, %v523, -inf
      %1000 = vmax.xlane.f32.xlu0 %v999
      %v1001 = vpop.xlane.xlu0 %1000
      %v1002 = vsel %vm881, %v524, -inf
      %1003 = vmax.xlane.f32.xlu0 %v1002
      %v1004 = vpop.xlane.xlu0 %1003
      %v1005 = vsel %vm881, %v525, -inf
      %1006 = vmax.xlane.f32.xlu0 %v1005
      %v1007 = vpop.xlane.xlu0 %1006
      %v1008 = vsel %vm881, %v526, -inf
      %1009 = vmax.xlane.f32.xlu0 %v1008
      %v1010 = vpop.xlane.xlu0 %1009
      %v1011 = vsel %vm881, %v527, -inf
      %1012 = vmax.xlane.f32.xlu0 %v1011
      %v1013 = vpop.xlane.xlu0 %1012
      %v1014 = vsel %vm881, %v528, -inf
      %1015 = vmax.xlane.f32.xlu0 %v1014
      %v1016 = vpop.xlane.xlu0 %1015
      %v1017 = vsel %vm881, %v529, -inf
      %1018 = vmax.xlane.f32.xlu0 %v1017
      %v1019 = vpop.xlane.xlu0 %1018
      %v1020 = vsel %vm881, %v530, -inf
      %1021 = vmax.xlane.f32.xlu0 %v1020
      %v1022 = vpop.xlane.xlu0 %1021
      %v1023 = vsel %vm881, %v531, -inf
      %1024 = vmax.xlane.f32.xlu0 %v1023
      %v1025 = vpop.xlane.xlu0 %1024
      %v1026 = vsel %vm881, %v532, -inf
      %1027 = vmax.xlane.f32.xlu0 %v1026
      %v1028 = vpop.xlane.xlu0 %1027
      %v1029 = vsel %vm881, %v533, -inf
      %1030 = vmax.xlane.f32.xlu0 %v1029
      %v1031 = vpop.xlane.xlu0 %1030
      %v1032 = vsel %vm881, %v534, -inf
      %1033 = vmax.xlane.f32.xlu0 %v1032
      %v1034 = vpop.xlane.xlu0 %1033
      %v1035 = vsel %vm881, %v535, -inf
      %1036 = vmax.xlane.f32.xlu0 %v1035
      %v1037 = vpop.xlane.xlu0 %1036
      %v1038 = vsel %vm881, %v536, -inf
      %1039 = vmax.xlane.f32.xlu0 %v1038
      %v1040 = vpop.xlane.xlu0 %1039
      %v1041 = vsel %vm881, %v537, -inf
      %1042 = vmax.xlane.f32.xlu0 %v1041
      %v1043 = vpop.xlane.xlu0 %1042
      %v1044 = vsel %vm881, %v538, -inf
      %1045 = vmax.xlane.f32.xlu0 %v1044
      %v1046 = vpop.xlane.xlu0 %1045
      %v1047 = vsel %vm881, %v539, -inf
      %1048 = vmax.xlane.f32.xlu0 %v1047
      %v1049 = vpop.xlane.xlu0 %1048
      %v1050 = vsel %vm881, %v540, -inf
      %1051 = vmax.xlane.f32.xlu0 %v1050
      %v1052 = vpop.xlane.xlu0 %1051
      %v1053 = vsel %vm881, %v541, -inf
      %1054 = vmax.xlane.f32.xlu0 %v1053
      %v1055 = vpop.xlane.xlu0 %1054
      %v1056 = vsel %vm881, %v542, -inf
      %1057 = vmax.xlane.f32.xlu0 %v1056
      %v1058 = vpop.xlane.xlu0 %1057
      %v1059 = vsel %vm881, %v543, -inf
      %1060 = vmax.xlane.f32.xlu0 %v1059
      %v1061 = vpop.xlane.xlu0 %1060
      %v1062 = vsel %vm881, %v544, -inf
      %1063 = vmax.xlane.f32.xlu0 %v1062
      %v1064 = vpop.xlane.xlu0 %1063
      %v1065 = vsel %vm881, %v545, -inf
      %1066 = vmax.xlane.f32.xlu0 %v1065
      %v1067 = vpop.xlane.xlu0 %1066
      %v1068 = vsel %vm881, %v546, -inf
      %1069 = vmax.xlane.f32.xlu0 %v1068
      %v1070 = vpop.xlane.xlu0 %1069
      %v1071 = vsel %vm881, %v547, -inf
      %1072 = vmax.xlane.f32.xlu0 %v1071
      %v1073 = vpop.xlane.xlu0 %1072
      %v1074 = vld [vmem:[%s1 + $0x1] sm:$0x1]
      %v1075 = vlaneseq
      %v1076 = vshrl.u32 %v1075, 7
      %v1077 = vsub.s32 0, %v1076
      %v1078 = vrot.slane %v1074, %v1077
      %v1079 = vmul.f32 %v884, %v1078
      %v1080 = vmul.f32 %v887, %v1078
      %v1081 = vmul.f32 %v890, %v1078
      %v1082 = vmul.f32 %v893, %v1078
      %v1083 = vmul.f32 %v896, %v1078
      %v1084 = vmul.f32 %v899, %v1078
      %v1085 = vmul.f32 %v902, %v1078
      %v1086 = vmul.f32 %v905, %v1078
      %v1087 = vmul.f32 %v908, %v1078
      %v1088 = vmul.f32 %v911, %v1078
      %v1089 = vmul.f32 %v914, %v1078
      %v1090 = vmul.f32 %v917, %v1078
      %v1091 = vmul.f32 %v920, %v1078
      %v1092 = vmul.f32 %v923, %v1078
      %v1093 = vmul.f32 %v926, %v1078
      %v1094 = vmul.f32 %v929, %v1078
      %v1095 = vmul.f32 %v932, %v1078
      %v1096 = vmul.f32 %v935, %v1078
      %v1097 = vmul.f32 %v938, %v1078
      %v1098 = vmul.f32 %v941, %v1078
      %v1099 = vmul.f32 %v944, %v1078
      %v1100 = vmul.f32 %v947, %v1078
      %v1101 = vmul.f32 %v950, %v1078
      %v1102 = vmul.f32 %v953, %v1078
      %v1103 = vmul.f32 %v956, %v1078
      %v1104 = vmul.f32 %v959, %v1078
      %v1105 = vmul.f32 %v962, %v1078
      %v1106 = vmul.f32 %v965, %v1078
      %v1107 = vmul.f32 %v968, %v1078
      %v1108 = vmul.f32 %v971, %v1078
      %v1109 = vmul.f32 %v974, %v1078
      %v1110 = vmul.f32 %v977, %v1078
      %v1111 = vmul.f32 %v980, %v1078
      %v1112 = vmul.f32 %v983, %v1078
      %v1113 = vmul.f32 %v986, %v1078
      %v1114 = vmul.f32 %v989, %v1078
      %v1115 = vmul.f32 %v992, %v1078
      %v1116 = vmul.f32 %v995, %v1078
      %v1117 = vmul.f32 %v998, %v1078
      %v1118 = vmul.f32 %v1001, %v1078
      %v1119 = vmul.f32 %v1004, %v1078
      %v1120 = vmul.f32 %v1007, %v1078
      %v1121 = vmul.f32 %v1010, %v1078
      %v1122 = vmul.f32 %v1013, %v1078
      %v1123 = vmul.f32 %v1016, %v1078
      %v1124 = vmul.f32 %v1019, %v1078
      %v1125 = vmul.f32 %v1022, %v1078
      %v1126 = vmul.f32 %v1025, %v1078
      %v1127 = vmul.f32 %v1028, %v1078
      %v1128 = vmul.f32 %v1031, %v1078
      %v1129 = vmul.f32 %v1034, %v1078
      %v1130 = vmul.f32 %v1037, %v1078
      %v1131 = vmul.f32 %v1040, %v1078
      %v1132 = vmul.f32 %v1043, %v1078
      %v1133 = vmul.f32 %v1046, %v1078
      %v1134 = vmul.f32 %v1049, %v1078
      %v1135 = vmul.f32 %v1052, %v1078
      %v1136 = vmul.f32 %v1055, %v1078
      %v1137 = vmul.f32 %v1058, %v1078
      %v1138 = vmul.f32 %v1061, %v1078
      %v1139 = vmul.f32 %v1064, %v1078
      %v1140 = vmul.f32 %v1067, %v1078
      %v1141 = vmul.f32 %v1070, %v1078
      %v1142 = vmul.f32 %v1073, %v1078
      %v1143 = vadd.f32 %v817, %v1079
      %v1144 = vadd.f32 %v818, %v1080
      %v1145 = vadd.f32 %v819, %v1081
      %v1146 = vadd.f32 %v820, %v1082
      %v1147 = vadd.f32 %v821, %v1083
      %v1148 = vadd.f32 %v822, %v1084
      %v1149 = vadd.f32 %v823, %v1085
      %v1150 = vadd.f32 %v824, %v1086
      %v1151 = vadd.f32 %v825, %v1087
      %v1152 = vadd.f32 %v826, %v1088
      %v1153 = vadd.f32 %v827, %v1089
      %v1154 = vadd.f32 %v828, %v1090
      %v1155 = vadd.f32 %v829, %v1091
      %v1156 = vadd.f32 %v830, %v1092
      %v1157 = vadd.f32 %v831, %v1093
      %v1158 = vadd.f32 %v832, %v1094
      %v1159 = vadd.f32 %v833, %v1095
      %v1160 = vadd.f32 %v834, %v1096
      %v1161 = vadd.f32 %v835, %v1097
      %v1162 = vadd.f32 %v836, %v1098
      %v1163 = vadd.f32 %v837, %v1099
      %v1164 = vadd.f32 %v838, %v1100
      %v1165 = vadd.f32 %v839, %v1101
      %v1166 = vadd.f32 %v840, %v1102
      %v1167 = vadd.f32 %v841, %v1103
      %v1168 = vadd.f32 %v842, %v1104
      %v1169 = vadd.f32 %v843, %v1105
      %v1170 = vadd.f32 %v844, %v1106
      %v1171 = vadd.f32 %v845, %v1107
      %v1172 = vadd.f32 %v846, %v1108
      %v1173 = vadd.f32 %v847, %v1109
      %v1174 = vadd.f32 %v848, %v1110
      %v1175 = vadd.f32 %v849, %v1111
      %v1176 = vadd.f32 %v850, %v1112
      %v1177 = vadd.f32 %v851, %v1113
      %v1178 = vadd.f32 %v852, %v1114
      %v1179 = vadd.f32 %v853, %v1115
      %v1180 = vadd.f32 %v854, %v1116
      %v1181 = vadd.f32 %v855, %v1117
      %v1182 = vadd.f32 %v856, %v1118
      %v1183 = vadd.f32 %v857, %v1119
      %v1184 = vadd.f32 %v858, %v1120
      %v1185 = vadd.f32 %v859, %v1121
      %v1186 = vadd.f32 %v860, %v1122
      %v1187 = vadd.f32 %v861, %v1123
      %v1188 = vadd.f32 %v862, %v1124
      %v1189 = vadd.f32 %v863, %v1125
      %v1190 = vadd.f32 %v864, %v1126
      %v1191 = vadd.f32 %v865, %v1127
      %v1192 = vadd.f32 %v866, %v1128
      %v1193 = vadd.f32 %v867, %v1129
      %v1194 = vadd.f32 %v868, %v1130
      %v1195 = vadd.f32 %v869, %v1131
      %v1196 = vadd.f32 %v870, %v1132
      %v1197 = vadd.f32 %v871, %v1133
      %v1198 = vadd.f32 %v872, %v1134
      %v1199 = vadd.f32 %v873, %v1135
      %v1200 = vadd.f32 %v874, %v1136
      %v1201 = vadd.f32 %v875, %v1137
      %v1202 = vadd.f32 %v876, %v1138
      %v1203 = vadd.f32 %v877, %v1139
      %v1204 = vadd.f32 %v878, %v1140
      %v1205 = vadd.f32 %v879, %v1141
      %v1206 = vadd.f32 %v880, %v1142
      %vm1207 = vcmask 392448
      %v1208 = vsel %vm1207, %v484, -inf
      %1209 = vmax.xlane.f32.xlu0 %v1208
      %v1210 = vpop.xlane.xlu0 %1209
      %v1211 = vsel %vm1207, %v485, -inf
      %1212 = vmax.xlane.f32.xlu0 %v1211
      %v1213 = vpop.xlane.xlu0 %1212
      %v1214 = vsel %vm1207, %v486, -inf
      %1215 = vmax.xlane.f32.xlu0 %v1214
      %v1216 = vpop.xlane.xlu0 %1215
      %v1217 = vsel %vm1207, %v487, -inf
      %1218 = vmax.xlane.f32.xlu0 %v1217
      %v1219 = vpop.xlane.xlu0 %1218
      %v1220 = vsel %vm1207, %v488, -inf
      %1221 = vmax.xlane.f32.xlu0 %v1220
      %v1222 = vpop.xlane.xlu0 %1221
      %v1223 = vsel %vm1207, %v489, -inf
      %1224 = vmax.xlane.f32.xlu0 %v1223
      %v1225 = vpop.xlane.xlu0 %1224
      %v1226 = vsel %vm1207, %v490, -inf
      %1227 = vmax.xlane.f32.xlu0 %v1226
      %v1228 = vpop.xlane.xlu0 %1227
      %v1229 = vsel %vm1207, %v491, -inf
      %1230 = vmax.xlane.f32.xlu0 %v1229
      %v1231 = vpop.xlane.xlu0 %1230
      %v1232 = vsel %vm1207, %v492, -inf
      %1233 = vmax.xlane.f32.xlu0 %v1232
      %v1234 = vpop.xlane.xlu0 %1233
      %v1235 = vsel %vm1207, %v493, -inf
      %1236 = vmax.xlane.f32.xlu0 %v1235
      %v1237 = vpop.xlane.xlu0 %1236
      %v1238 = vsel %vm1207, %v494, -inf
      %1239 = vmax.xlane.f32.xlu0 %v1238
      %v1240 = vpop.xlane.xlu0 %1239
      %v1241 = vsel %vm1207, %v495, -inf
      %1242 = vmax.xlane.f32.xlu0 %v1241
      %v1243 = vpop.xlane.xlu0 %1242
      %v1244 = vsel %vm1207, %v496, -inf
      %1245 = vmax.xlane.f32.xlu0 %v1244
      %v1246 = vpop.xlane.xlu0 %1245
      %v1247 = vsel %vm1207, %v497, -inf
      %1248 = vmax.xlane.f32.xlu0 %v1247
      %v1249 = vpop.xlane.xlu0 %1248
      %v1250 = vsel %vm1207, %v498, -inf
      %1251 = vmax.xlane.f32.xlu0 %v1250
      %v1252 = vpop.xlane.xlu0 %1251
      %v1253 = vsel %vm1207, %v499, -inf
      %1254 = vmax.xlane.f32.xlu0 %v1253
      %v1255 = vpop.xlane.xlu0 %1254
      %v1256 = vsel %vm1207, %v500, -inf
      %1257 = vmax.xlane.f32.xlu0 %v1256
      %v1258 = vpop.xlane.xlu0 %1257
      %v1259 = vsel %vm1207, %v501, -inf
      %1260 = vmax.xlane.f32.xlu0 %v1259
      %v1261 = vpop.xlane.xlu0 %1260
      %v1262 = vsel %vm1207, %v502, -inf
      %1263 = vmax.xlane.f32.xlu0 %v1262
      %v1264 = vpop.xlane.xlu0 %1263
      %v1265 = vsel %vm1207, %v503, -inf
      %1266 = vmax.xlane.f32.xlu0 %v1265
      %v1267 = vpop.xlane.xlu0 %1266
      %v1268 = vsel %vm1207, %v504, -inf
      %1269 = vmax.xlane.f32.xlu0 %v1268
      %v1270 = vpop.xlane.xlu0 %1269
      %v1271 = vsel %vm1207, %v505, -inf
      %1272 = vmax.xlane.f32.xlu0 %v1271
      %v1273 = vpop.xlane.xlu0 %1272
      %v1274 = vsel %vm1207, %v506, -inf
      %1275 = vmax.xlane.f32.xlu0 %v1274
      %v1276 = vpop.xlane.xlu0 %1275
      %v1277 = vsel %vm1207, %v507, -inf
      %1278 = vmax.xlane.f32.xlu0 %v1277
      %v1279 = vpop.xlane.xlu0 %1278
      %v1280 = vsel %vm1207, %v508, -inf
      %1281 = vmax.xlane.f32.xlu0 %v1280
      %v1282 = vpop.xlane.xlu0 %1281
      %v1283 = vsel %vm1207, %v509, -inf
      %1284 = vmax.xlane.f32.xlu0 %v1283
      %v1285 = vpop.xlane.xlu0 %1284
      %v1286 = vsel %vm1207, %v510, -inf
      %1287 = vmax.xlane.f32.xlu0 %v1286
      %v1288 = vpop.xlane.xlu0 %1287
      %v1289 = vsel %vm1207, %v511, -inf
      %1290 = vmax.xlane.f32.xlu0 %v1289
      %v1291 = vpop.xlane.xlu0 %1290
      %v1292 = vsel %vm1207, %v512, -inf
      %1293 = vmax.xlane.f32.xlu0 %v1292
      %v1294 = vpop.xlane.xlu0 %1293
      %v1295 = vsel %vm1207, %v513, -inf
      %1296 = vmax.xlane.f32.xlu0 %v1295
      %v1297 = vpop.xlane.xlu0 %1296
      %v1298 = vsel %vm1207, %v514, -inf
      %1299 = vmax.xlane.f32.xlu0 %v1298
      %v1300 = vpop.xlane.xlu0 %1299
      %v1301 = vsel %vm1207, %v515, -inf
      %1302 = vmax.xlane.f32.xlu0 %v1301
      %v1303 = vpop.xlane.xlu0 %1302
      %v1304 = vsel %vm1207, %v516, -inf
      %1305 = vmax.xlane.f32.xlu0 %v1304
      %v1306 = vpop.xlane.xlu0 %1305
      %v1307 = vsel %vm1207, %v517, -inf
      %1308 = vmax.xlane.f32.xlu0 %v1307
      %v1309 = vpop.xlane.xlu0 %1308
      %v1310 = vsel %vm1207, %v518, -inf
      %1311 = vmax.xlane.f32.xlu0 %v1310
      %v1312 = vpop.xlane.xlu0 %1311
      %v1313 = vsel %vm1207, %v519, -inf
      %1314 = vmax.xlane.f32.xlu0 %v1313
      %v1315 = vpop.xlane.xlu0 %1314
      %v1316 = vsel %vm1207, %v520, -inf
      %1317 = vmax.xlane.f32.xlu0 %v1316
      %v1318 = vpop.xlane.xlu0 %1317
      %v1319 = vsel %vm1207, %v521, -inf
      %1320 = vmax.xlane.f32.xlu0 %v1319
      %v1321 = vpop.xlane.xlu0 %1320
      %v1322 = vsel %vm1207, %v522, -inf
      %1323 = vmax.xlane.f32.xlu0 %v1322
      %v1324 = vpop.xlane.xlu0 %1323
      %v1325 = vsel %vm1207, %v523, -inf
      %1326 = vmax.xlane.f32.xlu0 %v1325
      %v1327 = vpop.xlane.xlu0 %1326
      %v1328 = vsel %vm1207, %v524, -inf
      %1329 = vmax.xlane.f32.xlu0 %v1328
      %v1330 = vpop.xlane.xlu0 %1329
      %v1331 = vsel %vm1207, %v525, -inf
      %1332 = vmax.xlane.f32.xlu0 %v1331
      %v1333 = vpop.xlane.xlu0 %1332
      %v1334 = vsel %vm1207, %v526, -inf
      %1335 = vmax.xlane.f32.xlu0 %v1334
      %v1336 = vpop.xlane.xlu0 %1335
      %v1337 = vsel %vm1207, %v527, -inf
      %1338 = vmax.xlane.f32.xlu0 %v1337
      %v1339 = vpop.xlane.xlu0 %1338
      %v1340 = vsel %vm1207, %v528, -inf
      %1341 = vmax.xlane.f32.xlu0 %v1340
      %v1342 = vpop.xlane.xlu0 %1341
      %v1343 = vsel %vm1207, %v529, -inf
      %1344 = vmax.xlane.f32.xlu0 %v1343
      %v1345 = vpop.xlane.xlu0 %1344
      %v1346 = vsel %vm1207, %v530, -inf
      %1347 = vmax.xlane.f32.xlu0 %v1346
      %v1348 = vpop.xlane.xlu0 %1347
      %v1349 = vsel %vm1207, %v531, -inf
      %1350 = vmax.xlane.f32.xlu0 %v1349
      %v1351 = vpop.xlane.xlu0 %1350
      %v1352 = vsel %vm1207, %v532, -inf
      %1353 = vmax.xlane.f32.xlu0 %v1352
      %v1354 = vpop.xlane.xlu0 %1353
      %v1355 = vsel %vm1207, %v533, -inf
      %1356 = vmax.xlane.f32.xlu0 %v1355
      %v1357 = vpop.xlane.xlu0 %1356
      %v1358 = vsel %vm1207, %v534, -inf
      %1359 = vmax.xlane.f32.xlu0 %v1358
      %v1360 = vpop.xlane.xlu0 %1359
      %v1361 = vsel %vm1207, %v535, -inf
      %1362 = vmax.xlane.f32.xlu0 %v1361
      %v1363 = vpop.xlane.xlu0 %1362
      %v1364 = vsel %vm1207, %v536, -inf
      %1365 = vmax.xlane.f32.xlu0 %v1364
      %v1366 = vpop.xlane.xlu0 %1365
      %v1367 = vsel %vm1207, %v537, -inf
      %1368 = vmax.xlane.f32.xlu0 %v1367
      %v1369 = vpop.xlane.xlu0 %1368
      %v1370 = vsel %vm1207, %v538, -inf
      %1371 = vmax.xlane.f32.xlu0 %v1370
      %v1372 = vpop.xlane.xlu0 %1371
      %v1373 = vsel %vm1207, %v539, -inf
      %1374 = vmax.xlane.f32.xlu0 %v1373
      %v1375 = vpop.xlane.xlu0 %1374
      %v1376 = vsel %vm1207, %v540, -inf
      %1377 = vmax.xlane.f32.xlu0 %v1376
      %v1378 = vpop.xlane.xlu0 %1377
      %v1379 = vsel %vm1207, %v541, -inf
      %1380 = vmax.xlane.f32.xlu0 %v1379
      %v1381 = vpop.xlane.xlu0 %1380
      %v1382 = vsel %vm1207, %v542, -inf
      %1383 = vmax.xlane.f32.xlu0 %v1382
      %v1384 = vpop.xlane.xlu0 %1383
      %v1385 = vsel %vm1207, %v543, -inf
      %1386 = vmax.xlane.f32.xlu0 %v1385
      %v1387 = vpop.xlane.xlu0 %1386
      %v1388 = vsel %vm1207, %v544, -inf
      %1389 = vmax.xlane.f32.xlu0 %v1388
      %v1390 = vpop.xlane.xlu0 %1389
      %v1391 = vsel %vm1207, %v545, -inf
      %1392 = vmax.xlane.f32.xlu0 %v1391
      %v1393 = vpop.xlane.xlu0 %1392
      %v1394 = vsel %vm1207, %v546, -inf
      %1395 = vmax.xlane.f32.xlu0 %v1394
      %v1396 = vpop.xlane.xlu0 %1395
      %v1397 = vsel %vm1207, %v547, -inf
      %1398 = vmax.xlane.f32.xlu0 %v1397
      %v1399 = vpop.xlane.xlu0 %1398
      %v1400 = vld [vmem:[%s1 + $0x2] sm:$0x1]
      %v1401 = vlaneseq
      %v1402 = vshrl.u32 %v1401, 7
      %v1403 = vsub.s32 0, %v1402
      %v1404 = vrot.slane %v1400, %v1403
      %v1405 = vmul.f32 %v1210, %v1404
      %v1406 = vmul.f32 %v1213, %v1404
      %v1407 = vmul.f32 %v1216, %v1404
      %v1408 = vmul.f32 %v1219, %v1404
      %v1409 = vmul.f32 %v1222, %v1404
      %v1410 = vmul.f32 %v1225, %v1404
      %v1411 = vmul.f32 %v1228, %v1404
      %v1412 = vmul.f32 %v1231, %v1404
      %v1413 = vmul.f32 %v1234, %v1404
      %v1414 = vmul.f32 %v1237, %v1404
      %v1415 = vmul.f32 %v1240, %v1404
      %v1416 = vmul.f32 %v1243, %v1404
      %v1417 = vmul.f32 %v1246, %v1404
      %v1418 = vmul.f32 %v1249, %v1404
      %v1419 = vmul.f32 %v1252, %v1404
      %v1420 = vmul.f32 %v1255, %v1404
      %v1421 = vmul.f32 %v1258, %v1404
      %v1422 = vmul.f32 %v1261, %v1404
      %v1423 = vmul.f32 %v1264, %v1404
      %v1424 = vmul.f32 %v1267, %v1404
      %v1425 = vmul.f32 %v1270, %v1404
      %v1426 = vmul.f32 %v1273, %v1404
      %v1427 = vmul.f32 %v1276, %v1404
      %v1428 = vmul.f32 %v1279, %v1404
      %v1429 = vmul.f32 %v1282, %v1404
      %v1430 = vmul.f32 %v1285, %v1404
      %v1431 = vmul.f32 %v1288, %v1404
      %v1432 = vmul.f32 %v1291, %v1404
      %v1433 = vmul.f32 %v1294, %v1404
      %v1434 = vmul.f32 %v1297, %v1404
      %v1435 = vmul.f32 %v1300, %v1404
      %v1436 = vmul.f32 %v1303, %v1404
      %v1437 = vmul.f32 %v1306, %v1404
      %v1438 = vmul.f32 %v1309, %v1404
      %v1439 = vmul.f32 %v1312, %v1404
      %v1440 = vmul.f32 %v1315, %v1404
      %v1441 = vmul.f32 %v1318, %v1404
      %v1442 = vmul.f32 %v1321, %v1404
      %v1443 = vmul.f32 %v1324, %v1404
      %v1444 = vmul.f32 %v1327, %v1404
      %v1445 = vmul.f32 %v1330, %v1404
      %v1446 = vmul.f32 %v1333, %v1404
      %v1447 = vmul.f32 %v1336, %v1404
      %v1448 = vmul.f32 %v1339, %v1404
      %v1449 = vmul.f32 %v1342, %v1404
      %v1450 = vmul.f32 %v1345, %v1404
      %v1451 = vmul.f32 %v1348, %v1404
      %v1452 = vmul.f32 %v1351, %v1404
      %v1453 = vmul.f32 %v1354, %v1404
      %v1454 = vmul.f32 %v1357, %v1404
      %v1455 = vmul.f32 %v1360, %v1404
      %v1456 = vmul.f32 %v1363, %v1404
      %v1457 = vmul.f32 %v1366, %v1404
      %v1458 = vmul.f32 %v1369, %v1404
      %v1459 = vmul.f32 %v1372, %v1404
      %v1460 = vmul.f32 %v1375, %v1404
      %v1461 = vmul.f32 %v1378, %v1404
      %v1462 = vmul.f32 %v1381, %v1404
      %v1463 = vmul.f32 %v1384, %v1404
      %v1464 = vmul.f32 %v1387, %v1404
      %v1465 = vmul.f32 %v1390, %v1404
      %v1466 = vmul.f32 %v1393, %v1404
      %v1467 = vmul.f32 %v1396, %v1404
      %v1468 = vmul.f32 %v1399, %v1404
      %v1469 = vadd.f32 %v1143, %v1405
      %v1470 = vadd.f32 %v1144, %v1406
      %v1471 = vadd.f32 %v1145, %v1407
      %v1472 = vadd.f32 %v1146, %v1408
      %v1473 = vadd.f32 %v1147, %v1409
      %v1474 = vadd.f32 %v1148, %v1410
      %v1475 = vadd.f32 %v1149, %v1411
      %v1476 = vadd.f32 %v1150, %v1412
      %v1477 = vadd.f32 %v1151, %v1413
      %v1478 = vadd.f32 %v1152, %v1414
      %v1479 = vadd.f32 %v1153, %v1415
      %v1480 = vadd.f32 %v1154, %v1416
      %v1481 = vadd.f32 %v1155, %v1417
      %v1482 = vadd.f32 %v1156, %v1418
      %v1483 = vadd.f32 %v1157, %v1419
      %v1484 = vadd.f32 %v1158, %v1420
      %v1485 = vadd.f32 %v1159, %v1421
      %v1486 = vadd.f32 %v1160, %v1422
      %v1487 = vadd.f32 %v1161, %v1423
      %v1488 = vadd.f32 %v1162, %v1424
      %v1489 = vadd.f32 %v1163, %v1425
      %v1490 = vadd.f32 %v1164, %v1426
      %v1491 = vadd.f32 %v1165, %v1427
      %v1492 = vadd.f32 %v1166, %v1428
      %v1493 = vadd.f32 %v1167, %v1429
      %v1494 = vadd.f32 %v1168, %v1430
      %v1495 = vadd.f32 %v1169, %v1431
      %v1496 = vadd.f32 %v1170, %v1432
      %v1497 = vadd.f32 %v1171, %v1433
      %v1498 = vadd.f32 %v1172, %v1434
      %v1499 = vadd.f32 %v1173, %v1435
      %v1500 = vadd.f32 %v1174, %v1436
      %v1501 = vadd.f32 %v1175, %v1437
      %v1502 = vadd.f32 %v1176, %v1438
      %v1503 = vadd.f32 %v1177, %v1439
      %v1504 = vadd.f32 %v1178, %v1440
      %v1505 = vadd.f32 %v1179, %v1441
      %v1506 = vadd.f32 %v1180, %v1442
      %v1507 = vadd.f32 %v1181, %v1443
      %v1508 = vadd.f32 %v1182, %v1444
      %v1509 = vadd.f32 %v1183, %v1445
      %v1510 = vadd.f32 %v1184, %v1446
      %v1511 = vadd.f32 %v1185, %v1447
      %v1512 = vadd.f32 %v1186, %v1448
      %v1513 = vadd.f32 %v1187, %v1449
      %v1514 = vadd.f32 %v1188, %v1450
      %v1515 = vadd.f32 %v1189, %v1451
      %v1516 = vadd.f32 %v1190, %v1452
      %v1517 = vadd.f32 %v1191, %v1453
      %v1518 = vadd.f32 %v1192, %v1454
      %v1519 = vadd.f32 %v1193, %v1455
      %v1520 = vadd.f32 %v1194, %v1456
      %v1521 = vadd.f32 %v1195, %v1457
      %v1522 = vadd.f32 %v1196, %v1458
      %v1523 = vadd.f32 %v1197, %v1459
      %v1524 = vadd.f32 %v1198, %v1460
      %v1525 = vadd.f32 %v1199, %v1461
      %v1526 = vadd.f32 %v1200, %v1462
      %v1527 = vadd.f32 %v1201, %v1463
      %v1528 = vadd.f32 %v1202, %v1464
      %v1529 = vadd.f32 %v1203, %v1465
      %v1530 = vadd.f32 %v1204, %v1466
      %v1531 = vadd.f32 %v1205, %v1467
      %v1532 = vadd.f32 %v1206, %v1468
      %vm1533 = vcmask 523648
      %v1534 = vsel %vm1533, %v484, -inf
      %1535 = vmax.xlane.f32.xlu0 %v1534
      %v1536 = vpop.xlane.xlu0 %1535
      %v1537 = vsel %vm1533, %v485, -inf
      %1538 = vmax.xlane.f32.xlu0 %v1537
      %v1539 = vpop.xlane.xlu0 %1538
      %v1540 = vsel %vm1533, %v486, -inf
      %1541 = vmax.xlane.f32.xlu0 %v1540
      %v1542 = vpop.xlane.xlu0 %1541
      %v1543 = vsel %vm1533, %v487, -inf
      %1544 = vmax.xlane.f32.xlu0 %v1543
      %v1545 = vpop.xlane.xlu0 %1544
      %v1546 = vsel %vm1533, %v488, -inf
      %1547 = vmax.xlane.f32.xlu0 %v1546
      %v1548 = vpop.xlane.xlu0 %1547
      %v1549 = vsel %vm1533, %v489, -inf
      %1550 = vmax.xlane.f32.xlu0 %v1549
      %v1551 = vpop.xlane.xlu0 %1550
      %v1552 = vsel %vm1533, %v490, -inf
      %1553 = vmax.xlane.f32.xlu0 %v1552
      %v1554 = vpop.xlane.xlu0 %1553
      %v1555 = vsel %vm1533, %v491, -inf
      %1556 = vmax.xlane.f32.xlu0 %v1555
      %v1557 = vpop.xlane.xlu0 %1556
      %v1558 = vsel %vm1533, %v492, -inf
      %1559 = vmax.xlane.f32.xlu0 %v1558
      %v1560 = vpop.xlane.xlu0 %1559
      %v1561 = vsel %vm1533, %v493, -inf
      %1562 = vmax.xlane.f32.xlu0 %v1561
      %v1563 = vpop.xlane.xlu0 %1562
      %v1564 = vsel %vm1533, %v494, -inf
      %1565 = vmax.xlane.f32.xlu0 %v1564
      %v1566 = vpop.xlane.xlu0 %1565
      %v1567 = vsel %vm1533, %v495, -inf
      %1568 = vmax.xlane.f32.xlu0 %v1567
      %v1569 = vpop.xlane.xlu0 %1568
      %v1570 = vsel %vm1533, %v496, -inf
      %1571 = vmax.xlane.f32.xlu0 %v1570
      %v1572 = vpop.xlane.xlu0 %1571
      %v1573 = vsel %vm1533, %v497, -inf
      %1574 = vmax.xlane.f32.xlu0 %v1573
      %v1575 = vpop.xlane.xlu0 %1574
      %v1576 = vsel %vm1533, %v498, -inf
      %1577 = vmax.xlane.f32.xlu0 %v1576
      %v1578 = vpop.xlane.xlu0 %1577
      %v1579 = vsel %vm1533, %v499, -inf
      %1580 = vmax.xlane.f32.xlu0 %v1579
      %v1581 = vpop.xlane.xlu0 %1580
      %v1582 = vsel %vm1533, %v500, -inf
      %1583 = vmax.xlane.f32.xlu0 %v1582
      %v1584 = vpop.xlane.xlu0 %1583
      %v1585 = vsel %vm1533, %v501, -inf
      %1586 = vmax.xlane.f32.xlu0 %v1585
      %v1587 = vpop.xlane.xlu0 %1586
      %v1588 = vsel %vm1533, %v502, -inf
      %1589 = vmax.xlane.f32.xlu0 %v1588
      %v1590 = vpop.xlane.xlu0 %1589
      %v1591 = vsel %vm1533, %v503, -inf
      %1592 = vmax.xlane.f32.xlu0 %v1591
      %v1593 = vpop.xlane.xlu0 %1592
      %v1594 = vsel %vm1533, %v504, -inf
      %1595 = vmax.xlane.f32.xlu0 %v1594
      %v1596 = vpop.xlane.xlu0 %1595
      %v1597 = vsel %vm1533, %v505, -inf
      %1598 = vmax.xlane.f32.xlu0 %v1597
      %v1599 = vpop.xlane.xlu0 %1598
      %v1600 = vsel %vm1533, %v506, -inf
      %1601 = vmax.xlane.f32.xlu0 %v1600
      %v1602 = vpop.xlane.xlu0 %1601
      %v1603 = vsel %vm1533, %v507, -inf
      %1604 = vmax.xlane.f32.xlu0 %v1603
      %v1605 = vpop.xlane.xlu0 %1604
      %v1606 = vsel %vm1533, %v508, -inf
      %1607 = vmax.xlane.f32.xlu0 %v1606
      %v1608 = vpop.xlane.xlu0 %1607
      %v1609 = vsel %vm1533, %v509, -inf
      %1610 = vmax.xlane.f32.xlu0 %v1609
      %v1611 = vpop.xlane.xlu0 %1610
      %v1612 = vsel %vm1533, %v510, -inf
      %1613 = vmax.xlane.f32.xlu0 %v1612
      %v1614 = vpop.xlane.xlu0 %1613
      %v1615 = vsel %vm1533, %v511, -inf
      %1616 = vmax.xlane.f32.xlu0 %v1615
      %v1617 = vpop.xlane.xlu0 %1616
      %v1618 = vsel %vm1533, %v512, -inf
      %1619 = vmax.xlane.f32.xlu0 %v1618
      %v1620 = vpop.xlane.xlu0 %1619
      %v1621 = vsel %vm1533, %v513, -inf
      %1622 = vmax.xlane.f32.xlu0 %v1621
      %v1623 = vpop.xlane.xlu0 %1622
      %v1624 = vsel %vm1533, %v514, -inf
      %1625 = vmax.xlane.f32.xlu0 %v1624
      %v1626 = vpop.xlane.xlu0 %1625
      %v1627 = vsel %vm1533, %v515, -inf
      %1628 = vmax.xlane.f32.xlu0 %v1627
      %v1629 = vpop.xlane.xlu0 %1628
      %v1630 = vsel %vm1533, %v516, -inf
      %1631 = vmax.xlane.f32.xlu0 %v1630
      %v1632 = vpop.xlane.xlu0 %1631
      %v1633 = vsel %vm1533, %v517, -inf
      %1634 = vmax.xlane.f32.xlu0 %v1633
      %v1635 = vpop.xlane.xlu0 %1634
      %v1636 = vsel %vm1533, %v518, -inf
      %1637 = vmax.xlane.f32.xlu0 %v1636
      %v1638 = vpop.xlane.xlu0 %1637
      %v1639 = vsel %vm1533, %v519, -inf
      %1640 = vmax.xlane.f32.xlu0 %v1639
      %v1641 = vpop.xlane.xlu0 %1640
      %v1642 = vsel %vm1533, %v520, -inf
      %1643 = vmax.xlane.f32.xlu0 %v1642
      %v1644 = vpop.xlane.xlu0 %1643
      %v1645 = vsel %vm1533, %v521, -inf
      %1646 = vmax.xlane.f32.xlu0 %v1645
      %v1647 = vpop.xlane.xlu0 %1646
      %v1648 = vsel %vm1533, %v522, -inf
      %1649 = vmax.xlane.f32.xlu0 %v1648
      %v1650 = vpop.xlane.xlu0 %1649
      %v1651 = vsel %vm1533, %v523, -inf
      %1652 = vmax.xlane.f32.xlu0 %v1651
      %v1653 = vpop.xlane.xlu0 %1652
      %v1654 = vsel %vm1533, %v524, -inf
      %1655 = vmax.xlane.f32.xlu0 %v1654
      %v1656 = vpop.xlane.xlu0 %1655
      %v1657 = vsel %vm1533, %v525, -inf
      %1658 = vmax.xlane.f32.xlu0 %v1657
      %v1659 = vpop.xlane.xlu0 %1658
      %v1660 = vsel %vm1533, %v526, -inf
      %1661 = vmax.xlane.f32.xlu0 %v1660
      %v1662 = vpop.xlane.xlu0 %1661
      %v1663 = vsel %vm1533, %v527, -inf
      %1664 = vmax.xlane.f32.xlu0 %v1663
      %v1665 = vpop.xlane.xlu0 %1664
      %v1666 = vsel %vm1533, %v528, -inf
      %1667 = vmax.xlane.f32.xlu0 %v1666
      %v1668 = vpop.xlane.xlu0 %1667
      %v1669 = vsel %vm1533, %v529, -inf
      %1670 = vmax.xlane.f32.xlu0 %v1669
      %v1671 = vpop.xlane.xlu0 %1670
      %v1672 = vsel %vm1533, %v530, -inf
      %1673 = vmax.xlane.f32.xlu0 %v1672
      %v1674 = vpop.xlane.xlu0 %1673
      %v1675 = vsel %vm1533, %v531, -inf
      %1676 = vmax.xlane.f32.xlu0 %v1675
      %v1677 = vpop.xlane.xlu0 %1676
      %v1678 = vsel %vm1533, %v532, -inf
      %1679 = vmax.xlane.f32.xlu0 %v1678
      %v1680 = vpop.xlane.xlu0 %1679
      %v1681 = vsel %vm1533, %v533, -inf
      %1682 = vmax.xlane.f32.xlu0 %v1681
      %v1683 = vpop.xlane.xlu0 %1682
      %v1684 = vsel %vm1533, %v534, -inf
      %1685 = vmax.xlane.f32.xlu0 %v1684
      %v1686 = vpop.xlane.xlu0 %1685
      %v1687 = vsel %vm1533, %v535, -inf
      %1688 = vmax.xlane.f32.xlu0 %v1687
      %v1689 = vpop.xlane.xlu0 %1688
      %v1690 = vsel %vm1533, %v536, -inf
      %1691 = vmax.xlane.f32.xlu0 %v1690
      %v1692 = vpop.xlane.xlu0 %1691
      %v1693 = vsel %vm1533, %v537, -inf
      %1694 = vmax.xlane.f32.xlu0 %v1693
      %v1695 = vpop.xlane.xlu0 %1694
      %v1696 = vsel %vm1533, %v538, -inf
      %1697 = vmax.xlane.f32.xlu0 %v1696
      %v1698 = vpop.xlane.xlu0 %1697
      %v1699 = vsel %vm1533, %v539, -inf
      %1700 = vmax.xlane.f32.xlu0 %v1699
      %v1701 = vpop.xlane.xlu0 %1700
      %v1702 = vsel %vm1533, %v540, -inf
      %1703 = vmax.xlane.f32.xlu0 %v1702
      %v1704 = vpop.xlane.xlu0 %1703
      %v1705 = vsel %vm1533, %v541, -inf
      %1706 = vmax.xlane.f32.xlu0 %v1705
      %v1707 = vpop.xlane.xlu0 %1706
      %v1708 = vsel %vm1533, %v542, -inf
      %1709 = vmax.xlane.f32.xlu0 %v1708
      %v1710 = vpop.xlane.xlu0 %1709
      %v1711 = vsel %vm1533, %v543, -inf
      %1712 = vmax.xlane.f32.xlu0 %v1711
      %v1713 = vpop.xlane.xlu0 %1712
      %v1714 = vsel %vm1533, %v544, -inf
      %1715 = vmax.xlane.f32.xlu0 %v1714
      %v1716 = vpop.xlane.xlu0 %1715
      %v1717 = vsel %vm1533, %v545, -inf
      %1718 = vmax.xlane.f32.xlu0 %v1717
      %v1719 = vpop.xlane.xlu0 %1718
      %v1720 = vsel %vm1533, %v546, -inf
      %1721 = vmax.xlane.f32.xlu0 %v1720
      %v1722 = vpop.xlane.xlu0 %1721
      %v1723 = vsel %vm1533, %v547, -inf
      %1724 = vmax.xlane.f32.xlu0 %v1723
      %v1725 = vpop.xlane.xlu0 %1724
      %v1726 = vld [vmem:[%s1 + $0x3] sm:$0x1]
      %v1727 = vlaneseq
      %v1728 = vshrl.u32 %v1727, 7
      %v1729 = vsub.s32 0, %v1728
      %v1730 = vrot.slane %v1726, %v1729
      %v1731 = vmul.f32 %v1536, %v1730
      %v1732 = vmul.f32 %v1539, %v1730
      %v1733 = vmul.f32 %v1542, %v1730
      %v1734 = vmul.f32 %v1545, %v1730
      %v1735 = vmul.f32 %v1548, %v1730
      %v1736 = vmul.f32 %v1551, %v1730
      %v1737 = vmul.f32 %v1554, %v1730
      %v1738 = vmul.f32 %v1557, %v1730
      %v1739 = vmul.f32 %v1560, %v1730
      %v1740 = vmul.f32 %v1563, %v1730
      %v1741 = vmul.f32 %v1566, %v1730
      %v1742 = vmul.f32 %v1569, %v1730
      %v1743 = vmul.f32 %v1572, %v1730
      %v1744 = vmul.f32 %v1575, %v1730
      %v1745 = vmul.f32 %v1578, %v1730
      %v1746 = vmul.f32 %v1581, %v1730
      %v1747 = vmul.f32 %v1584, %v1730
      %v1748 = vmul.f32 %v1587, %v1730
      %v1749 = vmul.f32 %v1590, %v1730
      %v1750 = vmul.f32 %v1593, %v1730
      %v1751 = vmul.f32 %v1596, %v1730
      %v1752 = vmul.f32 %v1599, %v1730
      %v1753 = vmul.f32 %v1602, %v1730
      %v1754 = vmul.f32 %v1605, %v1730
      %v1755 = vmul.f32 %v1608, %v1730
      %v1756 = vmul.f32 %v1611, %v1730
      %v1757 = vmul.f32 %v1614, %v1730
      %v1758 = vmul.f32 %v1617, %v1730
      %v1759 = vmul.f32 %v1620, %v1730
      %v1760 = vmul.f32 %v1623, %v1730
      %v1761 = vmul.f32 %v1626, %v1730
      %v1762 = vmul.f32 %v1629, %v1730
      %v1763 = vmul.f32 %v1632, %v1730
      %v1764 = vmul.f32 %v1635, %v1730
      %v1765 = vmul.f32 %v1638, %v1730
      %v1766 = vmul.f32 %v1641, %v1730
      %v1767 = vmul.f32 %v1644, %v1730
      %v1768 = vmul.f32 %v1647, %v1730
      %v1769 = vmul.f32 %v1650, %v1730
      %v1770 = vmul.f32 %v1653, %v1730
      %v1771 = vmul.f32 %v1656, %v1730
      %v1772 = vmul.f32 %v1659, %v1730
      %v1773 = vmul.f32 %v1662, %v1730
      %v1774 = vmul.f32 %v1665, %v1730
      %v1775 = vmul.f32 %v1668, %v1730
      %v1776 = vmul.f32 %v1671, %v1730
      %v1777 = vmul.f32 %v1674, %v1730
      %v1778 = vmul.f32 %v1677, %v1730
      %v1779 = vmul.f32 %v1680, %v1730
      %v1780 = vmul.f32 %v1683, %v1730
      %v1781 = vmul.f32 %v1686, %v1730
      %v1782 = vmul.f32 %v1689, %v1730
      %v1783 = vmul.f32 %v1692, %v1730
      %v1784 = vmul.f32 %v1695, %v1730
      %v1785 = vmul.f32 %v1698, %v1730
      %v1786 = vmul.f32 %v1701, %v1730
      %v1787 = vmul.f32 %v1704, %v1730
      %v1788 = vmul.f32 %v1707, %v1730
      %v1789 = vmul.f32 %v1710, %v1730
      %v1790 = vmul.f32 %v1713, %v1730
      %v1791 = vmul.f32 %v1716, %v1730
      %v1792 = vmul.f32 %v1719, %v1730
      %v1793 = vmul.f32 %v1722, %v1730
      %v1794 = vmul.f32 %v1725, %v1730
      %v1795 = vadd.f32 %v1469, %v1731
      %v1796 = vadd.f32 %v1470, %v1732
      %v1797 = vadd.f32 %v1471, %v1733
      %v1798 = vadd.f32 %v1472, %v1734
      %v1799 = vadd.f32 %v1473, %v1735
      %v1800 = vadd.f32 %v1474, %v1736
      %v1801 = vadd.f32 %v1475, %v1737
      %v1802 = vadd.f32 %v1476, %v1738
      %v1803 = vadd.f32 %v1477, %v1739
      %v1804 = vadd.f32 %v1478, %v1740
      %v1805 = vadd.f32 %v1479, %v1741
      %v1806 = vadd.f32 %v1480, %v1742
      %v1807 = vadd.f32 %v1481, %v1743
      %v1808 = vadd.f32 %v1482, %v1744
      %v1809 = vadd.f32 %v1483, %v1745
      %v1810 = vadd.f32 %v1484, %v1746
      %v1811 = vadd.f32 %v1485, %v1747
      %v1812 = vadd.f32 %v1486, %v1748
      %v1813 = vadd.f32 %v1487, %v1749
      %v1814 = vadd.f32 %v1488, %v1750
      %v1815 = vadd.f32 %v1489, %v1751
      %v1816 = vadd.f32 %v1490, %v1752
      %v1817 = vadd.f32 %v1491, %v1753
      %v1818 = vadd.f32 %v1492, %v1754
      %v1819 = vadd.f32 %v1493, %v1755
      %v1820 = vadd.f32 %v1494, %v1756
      %v1821 = vadd.f32 %v1495, %v1757
      %v1822 = vadd.f32 %v1496, %v1758
      %v1823 = vadd.f32 %v1497, %v1759
      %v1824 = vadd.f32 %v1498, %v1760
      %v1825 = vadd.f32 %v1499, %v1761
      %v1826 = vadd.f32 %v1500, %v1762
      %v1827 = vadd.f32 %v1501, %v1763
      %v1828 = vadd.f32 %v1502, %v1764
      %v1829 = vadd.f32 %v1503, %v1765
      %v1830 = vadd.f32 %v1504, %v1766
      %v1831 = vadd.f32 %v1505, %v1767
      %v1832 = vadd.f32 %v1506, %v1768
      %v1833 = vadd.f32 %v1507, %v1769
      %v1834 = vadd.f32 %v1508, %v1770
      %v1835 = vadd.f32 %v1509, %v1771
      %v1836 = vadd.f32 %v1510, %v1772
      %v1837 = vadd.f32 %v1511, %v1773
      %v1838 = vadd.f32 %v1512, %v1774
      %v1839 = vadd.f32 %v1513, %v1775
      %v1840 = vadd.f32 %v1514, %v1776
      %v1841 = vadd.f32 %v1515, %v1777
      %v1842 = vadd.f32 %v1516, %v1778
      %v1843 = vadd.f32 %v1517, %v1779
      %v1844 = vadd.f32 %v1518, %v1780
      %v1845 = vadd.f32 %v1519, %v1781
      %v1846 = vadd.f32 %v1520, %v1782
      %v1847 = vadd.f32 %v1521, %v1783
      %v1848 = vadd.f32 %v1522, %v1784
      %v1849 = vadd.f32 %v1523, %v1785
      %v1850 = vadd.f32 %v1524, %v1786
      %v1851 = vadd.f32 %v1525, %v1787
      %v1852 = vadd.f32 %v1526, %v1788
      %v1853 = vadd.f32 %v1527, %v1789
      %v1854 = vadd.f32 %v1528, %v1790
      %v1855 = vadd.f32 %v1529, %v1791
      %v1856 = vadd.f32 %v1530, %v1792
      %v1857 = vadd.f32 %v1531, %v1793
      %v1858 = vadd.f32 %v1532, %v1794
      %v1859 = vmax.f32 %v1795, 0.0
      %v1860 = vmax.f32 %v1796, 0.0
      %v1861 = vmax.f32 %v1797, 0.0
      %v1862 = vmax.f32 %v1798, 0.0
      %v1863 = vmax.f32 %v1799, 0.0
      %v1864 = vmax.f32 %v1800, 0.0
      %v1865 = vmax.f32 %v1801, 0.0
      %v1866 = vmax.f32 %v1802, 0.0
      %v1867 = vmax.f32 %v1803, 0.0
      %v1868 = vmax.f32 %v1804, 0.0
      %v1869 = vmax.f32 %v1805, 0.0
      %v1870 = vmax.f32 %v1806, 0.0
      %v1871 = vmax.f32 %v1807, 0.0
      %v1872 = vmax.f32 %v1808, 0.0
      %v1873 = vmax.f32 %v1809, 0.0
      %v1874 = vmax.f32 %v1810, 0.0
      %v1875 = vmax.f32 %v1811, 0.0
      %v1876 = vmax.f32 %v1812, 0.0
      %v1877 = vmax.f32 %v1813, 0.0
      %v1878 = vmax.f32 %v1814, 0.0
      %v1879 = vmax.f32 %v1815, 0.0
      %v1880 = vmax.f32 %v1816, 0.0
      %v1881 = vmax.f32 %v1817, 0.0
      %v1882 = vmax.f32 %v1818, 0.0
      %v1883 = vmax.f32 %v1819, 0.0
      %v1884 = vmax.f32 %v1820, 0.0
      %v1885 = vmax.f32 %v1821, 0.0
      %v1886 = vmax.f32 %v1822, 0.0
      %v1887 = vmax.f32 %v1823, 0.0
      %v1888 = vmax.f32 %v1824, 0.0
      %v1889 = vmax.f32 %v1825, 0.0
      %v1890 = vmax.f32 %v1826, 0.0
      %v1891 = vmax.f32 %v1827, 0.0
      %v1892 = vmax.f32 %v1828, 0.0
      %v1893 = vmax.f32 %v1829, 0.0
      %v1894 = vmax.f32 %v1830, 0.0
      %v1895 = vmax.f32 %v1831, 0.0
      %v1896 = vmax.f32 %v1832, 0.0
      %v1897 = vmax.f32 %v1833, 0.0
      %v1898 = vmax.f32 %v1834, 0.0
      %v1899 = vmax.f32 %v1835, 0.0
      %v1900 = vmax.f32 %v1836, 0.0
      %v1901 = vmax.f32 %v1837, 0.0
      %v1902 = vmax.f32 %v1838, 0.0
      %v1903 = vmax.f32 %v1839, 0.0
      %v1904 = vmax.f32 %v1840, 0.0
      %v1905 = vmax.f32 %v1841, 0.0
      %v1906 = vmax.f32 %v1842, 0.0
      %v1907 = vmax.f32 %v1843, 0.0
      %v1908 = vmax.f32 %v1844, 0.0
      %v1909 = vmax.f32 %v1845, 0.0
      %v1910 = vmax.f32 %v1846, 0.0
      %v1911 = vmax.f32 %v1847, 0.0
      %v1912 = vmax.f32 %v1848, 0.0
      %v1913 = vmax.f32 %v1849, 0.0
      %v1914 = vmax.f32 %v1850, 0.0
      %v1915 = vmax.f32 %v1851, 0.0
      %v1916 = vmax.f32 %v1852, 0.0
      %v1917 = vmax.f32 %v1853, 0.0
      %v1918 = vmax.f32 %v1854, 0.0
      %v1919 = vmax.f32 %v1855, 0.0
      %v1920 = vmax.f32 %v1856, 0.0
      %v1921 = vmax.f32 %v1857, 0.0
      %v1922 = vmax.f32 %v1858, 0.0
      %v1923 = vpack.c.bf16 %v1860, %v1859
      %v1924 = vpack.c.bf16 %v1862, %v1861
      %v1925 = vpack.c.bf16 %v1864, %v1863
      %v1926 = vpack.c.bf16 %v1866, %v1865
      %v1927 = vpack.c.bf16 %v1868, %v1867
      %v1928 = vpack.c.bf16 %v1870, %v1869
      %v1929 = vpack.c.bf16 %v1872, %v1871
      %v1930 = vpack.c.bf16 %v1874, %v1873
      %v1931 = vpack.c.bf16 %v1876, %v1875
      %v1932 = vpack.c.bf16 %v1878, %v1877
      %v1933 = vpack.c.bf16 %v1880, %v1879
      %v1934 = vpack.c.bf16 %v1882, %v1881
      %v1935 = vpack.c.bf16 %v1884, %v1883
      %v1936 = vpack.c.bf16 %v1886, %v1885
      %v1937 = vpack.c.bf16 %v1888, %v1887
      %v1938 = vpack.c.bf16 %v1890, %v1889
      %v1939 = vpack.c.bf16 %v1892, %v1891
      %v1940 = vpack.c.bf16 %v1894, %v1893
      %v1941 = vpack.c.bf16 %v1896, %v1895
      %v1942 = vpack.c.bf16 %v1898, %v1897
      %v1943 = vpack.c.bf16 %v1900, %v1899
      %v1944 = vpack.c.bf16 %v1902, %v1901
      %v1945 = vpack.c.bf16 %v1904, %v1903
      %v1946 = vpack.c.bf16 %v1906, %v1905
      %v1947 = vpack.c.bf16 %v1908, %v1907
      %v1948 = vpack.c.bf16 %v1910, %v1909
      %v1949 = vpack.c.bf16 %v1912, %v1911
      %v1950 = vpack.c.bf16 %v1914, %v1913
      %v1951 = vpack.c.bf16 %v1916, %v1915
      %v1952 = vpack.c.bf16 %v1918, %v1917
      %v1953 = vpack.c.bf16 %v1920, %v1919
      %v1954 = vpack.c.bf16 %v1922, %v1921
      %v1955 = vld [vmem:[%s3] sm:$0x3]
      %v1956 = vld [vmem:[%s4] sm:$0x1]
      %v1958 = vlaneseq
      %v1959 = vshrl.u32 %v1958, 7
      %v1960 = vsub.s32 0, %v1959
      %v1961 = vrot.slane %v1956, %v1960
      %vm1963 = vcmask 31744
      %v1965 = vsel %vm1963, %v1923, 0
      %v1968 = vsel %vm1963, %v1924, 0
      %v1971 = vsel %vm1963, %v1925, 0
      %v1974 = vsel %vm1963, %v1926, 0
      %v1977 = vsel %vm1963, %v1927, 0
      %v1980 = vsel %vm1963, %v1928, 0
      %v1983 = vsel %vm1963, %v1929, 0
      %v1986 = vsel %vm1963, %v1930, 0
      %v1989 = vsel %vm1963, %v1931, 0
      %v1992 = vsel %vm1963, %v1932, 0
      %v1995 = vsel %vm1963, %v1933, 0
      %v1998 = vsel %vm1963, %v1934, 0
      %v2001 = vsel %vm1963, %v1935, 0
      %v2004 = vsel %vm1963, %v1936, 0
      %v2007 = vsel %vm1963, %v1937, 0
      %v2010 = vsel %vm1963, %v1938, 0
      %v2013 = vsel %vm1963, %v1939, 0
      %v2016 = vsel %vm1963, %v1940, 0
      %v2019 = vsel %vm1963, %v1941, 0
      %v2022 = vsel %vm1963, %v1942, 0
      %v2025 = vsel %vm1963, %v1943, 0
      %v2028 = vsel %vm1963, %v1944, 0
      %v2031 = vsel %vm1963, %v1945, 0
      %v2034 = vsel %vm1963, %v1946, 0
      %v2037 = vsel %vm1963, %v1947, 0
      %v2040 = vsel %vm1963, %v1948, 0
      %v2043 = vsel %vm1963, %v1949, 0
      %v2046 = vsel %vm1963, %v1950, 0
      %v2049 = vsel %vm1963, %v1951, 0
      %v2052 = vsel %vm1963, %v1952, 0
      %v2055 = vsel %vm1963, %v1953, 0
      %v2058 = vsel %vm1963, %v1954, 0
      %vm2060 = vcmask 1041408
      %v2062 = vsel %vm2060, %v1955, 0
      %2064 = vmatprep.subr.bf16.mxu0 0
      %2065 = vmatpush1.bf16.msra.mxu0 %v2062
      %2066 = vmatprep.subr.bf16.mxu0 0
      %2067 = vmatpush1.bf16.msra.mxu0 0
      %2068 = vmatprep.subr.bf16.mxu0 0
      %2069 = vmatpush1.bf16.msra.mxu0 0
      %2070 = vmatprep.subr.bf16.mxu0 0
      %2071 = vmatpush1.bf16.msra.mxu0 0
      %2072 = vmatprep.subr.bf16.mxu0 0
      %2073 = vmatpush1.bf16.msra.mxu0 0
      %2074 = vmatprep.subr.bf16.mxu0 0
      %2075 = vmatpush1.bf16.msra.mxu0 0
      %2076 = vmatprep.subr.bf16.mxu0 0
      %2077 = vmatpush1.bf16.msra.mxu0 0
      %2078 = vmatprep.subr.bf16.mxu0 0
      %2079 = vmatpush1.bf16.msra.mxu0 0
      %2080 = vmatprep.subr.bf16.mxu0 0
      %2081 = vmatpush1.bf16.msra.mxu0 0
      %2082 = vmatprep.subr.bf16.mxu0 0
      %2083 = vmatpush1.bf16.msra.mxu0 0
      %2084 = vmatprep.subr.bf16.mxu0 0
      %2085 = vmatpush1.bf16.msra.mxu0 0
      %2086 = vmatprep.subr.bf16.mxu0 0
      %2087 = vmatpush1.bf16.msra.mxu0 0
      %2088 = vmatprep.subr.bf16.mxu0 0
      %2089 = vmatpush1.bf16.msra.mxu0 0
      %2090 = vmatprep.subr.bf16.mxu0 0
      %2091 = vmatpush1.bf16.msra.mxu0 0
      %2092 = vmatprep.subr.bf16.mxu0 0
      %2093 = vmatpush1.bf16.msra.mxu0 0
      %2094 = vmatprep.subr.bf16.mxu0 0
      %2095 = vmatpush1.bf16.msra.mxu0 0
      %2096 = vmatprep.mubr.bf16.mxu0 0
      %2097 = vmatmul.mubr.bf16.gmra.mrb[0].mxu0 %v1965
      %v2098 = vpop.f32.mrb[0].mxu0
      %v2099 = vadd.f32 %v1961, %v2098
      %v2100 = vpop.f32.mrb[0].mxu0
      %v2101 = vpop.f32.mrb[0].mxu0
      %v2102 = vadd.f32 %v1961, %v2101
      %v2103 = vpop.f32.mrb[0].mxu0
      %2104 = vmatprep.mubr.bf16.mxu0 0
      %2105 = vmatmul.mubr.bf16.gmra.mrb[0].mxu0 %v1968
      %v2106 = vpop.f32.mrb[0].mxu0
      %v2107 = vadd.f32 %v1961, %v2106
      %v2108 = vpop.f32.mrb[0].mxu0
      %v2109 = vpop.f32.mrb[0].mxu0
      %v2110 = vadd.f32 %v1961, %v2109
      %v2111 = vpop.f32.mrb[0].mxu0
      %2112 = vmatprep.mubr.bf16.mxu0 0
      %2113 = vmatmul.mubr.bf16.gmra.mrb[0].mxu0 %v1971
      %v2114 = vpop.f32.mrb[0].mxu0
      %v2115 = vadd.f32 %v1961, %v2114
      %v2116 = vpop.f32.mrb[0].mxu0
      %v2117 = vpop.f32.mrb[0].mxu0
      %v2118 = vadd.f32 %v1961, %v2117
      %v2119 = vpop.f32.mrb[0].mxu0
      %2120 = vmatprep.mubr.bf16.mxu0 0
      %2121 = vmatmul.mubr.bf16.gmra.mrb[0].mxu0 %v1974
      %v2122 = vpop.f32.mrb[0].mxu0
      %v2123 = vadd.f32 %v1961, %v2122
      %v2124 = vpop.f32.mrb[0].mxu0
      %v2125 = vpop.f32.mrb[0].mxu0
      %v2126 = vadd.f32 %v1961, %v2125
      %v2127 = vpop.f32.mrb[0].mxu0
      %2128 = vmatprep.mubr.bf16.mxu0 0
      %2129 = vmatmul.mubr.bf16.gmra.mrb[0].mxu0 %v1977
      %v2130 = vpop.f32.mrb[0].mxu0
      %v2131 = vadd.f32 %v1961, %v2130
      %v2132 = vpop.f32.mrb[0].mxu0
      %v2133 = vpop.f32.mrb[0].mxu0
      %v2134 = vadd.f32 %v1961, %v2133
      %v2135 = vpop.f32.mrb[0].mxu0
      %2136 = vmatprep.mubr.bf16.mxu0 0
      %2137 = vmatmul.mubr.bf16.gmra.mrb[0].mxu0 %v1980
      %v2138 = vpop.f32.mrb[0].mxu0
      %v2139 = vadd.f32 %v1961, %v2138
      %v2140 = vpop.f32.mrb[0].mxu0
      %v2141 = vpop.f32.mrb[0].mxu0
      %v2142 = vadd.f32 %v1961, %v2141
      %v2143 = vpop.f32.mrb[0].mxu0
      %2144 = vmatprep.mubr.bf16.mxu0 0
      %2145 = vmatmul.mubr.bf16.gmra.mrb[0].mxu0 %v1983
      %v2146 = vpop.f32.mrb[0].mxu0
      %v2147 = vadd.f32 %v1961, %v2146
      %v2148 = vpop.f32.mrb[0].mxu0
      %v2149 = vpop.f32.mrb[0].mxu0
      %v2150 = vadd.f32 %v1961, %v2149
      %v2151 = vpop.f32.mrb[0].mxu0
      %2152 = vmatprep.mubr.bf16.mxu0 0
      %2153 = vmatmul.mubr.bf16.gmra.mrb[0].mxu0 %v1986
      %v2154 = vpop.f32.mrb[0].mxu0
      %v2155 = vadd.f32 %v1961, %v2154
      %v2156 = vpop.f32.mrb[0].mxu0
      %v2157 = vpop.f32.mrb[0].mxu0
      %v2158 = vadd.f32 %v1961, %v2157
      %v2159 = vpop.f32.mrb[0].mxu0
      %2160 = vmatprep.mubr.bf16.mxu0 0
      %2161 = vmatmul.mubr.bf16.gmra.mrb[0].mxu0 %v1989
      %v2162 = vpop.f32.mrb[0].mxu0
      %v2163 = vadd.f32 %v1961, %v2162
      %v2164 = vpop.f32.mrb[0].mxu0
      %v2165 = vpop.f32.mrb[0].mxu0
      %v2166 = vadd.f32 %v1961, %v2165
      %v2167 = vpop.f32.mrb[0].mxu0
      %2168 = vmatprep.mubr.bf16.mxu0 0
      %2169 = vmatmul.mubr.bf16.gmra.mrb[0].mxu0 %v1992
      %v2170 = vpop.f32.mrb[0].mxu0
      %v2171 = vadd.f32 %v1961, %v2170
      %v2172 = vpop.f32.mrb[0].mxu0
      %v2173 = vpop.f32.mrb[0].mxu0
      %v2174 = vadd.f32 %v1961, %v2173
      %v2175 = vpop.f32.mrb[0].mxu0
      %2176 = vmatprep.mubr.bf16.mxu0 0
      %2177 = vmatmul.mubr.bf16.gmra.mrb[0].mxu0 %v1995
      %v2178 = vpop.f32.mrb[0].mxu0
      %v2179 = vadd.f32 %v1961, %v2178
      %v2180 = vpop.f32.mrb[0].mxu0
      %v2181 = vpop.f32.mrb[0].mxu0
      %v2182 = vadd.f32 %v1961, %v2181
      %v2183 = vpop.f32.mrb[0].mxu0
      %2184 = vmatprep.mubr.bf16.mxu0 0
      %2185 = vmatmul.mubr.bf16.gmra.mrb[0].mxu0 %v1998
      %v2186 = vpop.f32.mrb[0].mxu0
      %v2187 = vadd.f32 %v1961, %v2186
      %v2188 = vpop.f32.mrb[0].mxu0
      %v2189 = vpop.f32.mrb[0].mxu0
      %v2190 = vadd.f32 %v1961, %v2189
      %v2191 = vpop.f32.mrb[0].mxu0
      %2192 = vmatprep.mubr.bf16.mxu0 0
      %2193 = vmatmul.mubr.bf16.gmra.mrb[0].mxu0 %v2001
      %v2194 = vpop.f32.mrb[0].mxu0
      %v2195 = vadd.f32 %v1961, %v2194
      %v2196 = vpop.f32.mrb[0].mxu0
      %v2197 = vpop.f32.mrb[0].mxu0
      %v2198 = vadd.f32 %v1961, %v2197
      %v2199 = vpop.f32.mrb[0].mxu0
      %2200 = vmatprep.mubr.bf16.mxu0 0
      %2201 = vmatmul.mubr.bf16.gmra.mrb[0].mxu0 %v2004
      %v2202 = vpop.f32.mrb[0].mxu0
      %v2203 = vadd.f32 %v1961, %v2202
      %v2204 = vpop.f32.mrb[0].mxu0
      %v2205 = vpop.f32.mrb[0].mxu0
      %v2206 = vadd.f32 %v1961, %v2205
      %v2207 = vpop.f32.mrb[0].mxu0
      %2208 = vmatprep.mubr.bf16.mxu0 0
      %2209 = vmatmul.mubr.bf16.gmra.mrb[0].mxu0 %v2007
      %v2210 = vpop.f32.mrb[0].mxu0
      %v2211 = vadd.f32 %v1961, %v2210
      %v2212 = vpop.f32.mrb[0].mxu0
      %v2213 = vpop.f32.mrb[0].mxu0
      %v2214 = vadd.f32 %v1961, %v2213
      %v2215 = vpop.f32.mrb[0].mxu0
      %2216 = vmatprep.mubr.bf16.mxu0 0
      %2217 = vmatmul.mubr.bf16.gmra.mrb[0].mxu0 %v2010
      %v2218 = vpop.f32.mrb[0].mxu0
      %v2219 = vadd.f32 %v1961, %v2218
      %v2220 = vpop.f32.mrb[0].mxu0
      %v2221 = vpop.f32.mrb[0].mxu0
      %v2222 = vadd.f32 %v1961, %v2221
      %v2223 = vpop.f32.mrb[0].mxu0
      %2224 = vmatprep.mubr.bf16.mxu0 0
      %2225 = vmatmul.mubr.bf16.gmra.mrb[0].mxu0 %v2013
      %v2226 = vpop.f32.mrb[0].mxu0
      %v2227 = vadd.f32 %v1961, %v2226
      %v2228 = vpop.f32.mrb[0].mxu0
      %v2229 = vpop.f32.mrb[0].mxu0
      %v2230 = vadd.f32 %v1961, %v2229
      %v2231 = vpop.f32.mrb[0].mxu0
      %2232 = vmatprep.mubr.bf16.mxu0 0
      %2233 = vmatmul.mubr.bf16.gmra.mrb[0].mxu0 %v2016
      %v2234 = vpop.f32.mrb[0].mxu0
      %v2235 = vadd.f32 %v1961, %v2234
      %v2236 = vpop.f32.mrb[0].mxu0
      %v2237 = vpop.f32.mrb[0].mxu0
      %v2238 = vadd.f32 %v1961, %v2237
      %v2239 = vpop.f32.mrb[0].mxu0
      %2240 = vmatprep.mubr.bf16.mxu0 0
      %2241 = vmatmul.mubr.bf16.gmra.mrb[0].mxu0 %v2019
      %v2242 = vpop.f32.mrb[0].mxu0
      %v2243 = vadd.f32 %v1961, %v2242
      %v2244 = vpop.f32.mrb[0].mxu0
      %v2245 = vpop.f32.mrb[0].mxu0
      %v2246 = vadd.f32 %v1961, %v2245
      %v2247 = vpop.f32.mrb[0].mxu0
      %2248 = vmatprep.mubr.bf16.mxu0 0
      %2249 = vmatmul.mubr.bf16.gmra.mrb[0].mxu0 %v2022
      %v2250 = vpop.f32.mrb[0].mxu0
      %v2251 = vadd.f32 %v1961, %v2250
      %v2252 = vpop.f32.mrb[0].mxu0
      %v2253 = vpop.f32.mrb[0].mxu0
      %v2254 = vadd.f32 %v1961, %v2253
      %v2255 = vpop.f32.mrb[0].mxu0
      %2256 = vmatprep.mubr.bf16.mxu0 0
      %2257 = vmatmul.mubr.bf16.gmra.mrb[0].mxu0 %v2025
      %v2258 = vpop.f32.mrb[0].mxu0
      %v2259 = vadd.f32 %v1961, %v2258
      %v2260 = vpop.f32.mrb[0].mxu0
      %v2261 = vpop.f32.mrb[0].mxu0
      %v2262 = vadd.f32 %v1961, %v2261
      %v2263 = vpop.f32.mrb[0].mxu0
      %2264 = vmatprep.mubr.bf16.mxu0 0
      %2265 = vmatmul.mubr.bf16.gmra.mrb[0].mxu0 %v2028
      %v2266 = vpop.f32.mrb[0].mxu0
      %v2267 = vadd.f32 %v1961, %v2266
      %v2268 = vpop.f32.mrb[0].mxu0
      %v2269 = vpop.f32.mrb[0].mxu0
      %v2270 = vadd.f32 %v1961, %v2269
      %v2271 = vpop.f32.mrb[0].mxu0
      %2272 = vmatprep.mubr.bf16.mxu0 0
      %2273 = vmatmul.mubr.bf16.gmra.mrb[0].mxu0 %v2031
      %v2274 = vpop.f32.mrb[0].mxu0
      %v2275 = vadd.f32 %v1961, %v2274
      %v2276 = vpop.f32.mrb[0].mxu0
      %v2277 = vpop.f32.mrb[0].mxu0
      %v2278 = vadd.f32 %v1961, %v2277
      %v2279 = vpop.f32.mrb[0].mxu0
      %2280 = vmatprep.mubr.bf16.mxu0 0
      %2281 = vmatmul.mubr.bf16.gmra.mrb[0].mxu0 %v2034
      %v2282 = vpop.f32.mrb[0].mxu0
      %v2283 = vadd.f32 %v1961, %v2282
      %v2284 = vpop.f32.mrb[0].mxu0
      %v2285 = vpop.f32.mrb[0].mxu0
      %v2286 = vadd.f32 %v1961, %v2285
      %v2287 = vpop.f32.mrb[0].mxu0
      %2288 = vmatprep.mubr.bf16.mxu0 0
      %2289 = vmatmul.mubr.bf16.gmra.mrb[0].mxu0 %v2037
      %v2290 = vpop.f32.mrb[0].mxu0
      %v2291 = vadd.f32 %v1961, %v2290
      %v2292 = vpop.f32.mrb[0].mxu0
      %v2293 = vpop.f32.mrb[0].mxu0
      %v2294 = vadd.f32 %v1961, %v2293
      %v2295 = vpop.f32.mrb[0].mxu0
      %2296 = vmatprep.mubr.bf16.mxu0 0
      %2297 = vmatmul.mubr.bf16.gmra.mrb[0].mxu0 %v2040
      %v2298 = vpop.f32.mrb[0].mxu0
      %v2299 = vadd.f32 %v1961, %v2298
      %v2300 = vpop.f32.mrb[0].mxu0
      %v2301 = vpop.f32.mrb[0].mxu0
      %v2302 = vadd.f32 %v1961, %v2301
      %v2303 = vpop.f32.mrb[0].mxu0
      %2304 = vmatprep.mubr.bf16.mxu0 0
      %2305 = vmatmul.mubr.bf16.gmra.mrb[0].mxu0 %v2043
      %v2306 = vpop.f32.mrb[0].mxu0
      %v2307 = vadd.f32 %v1961, %v2306
      %v2308 = vpop.f32.mrb[0].mxu0
      %v2309 = vpop.f32.mrb[0].mxu0
      %v2310 = vadd.f32 %v1961, %v2309
      %v2311 = vpop.f32.mrb[0].mxu0
      %2312 = vmatprep.mubr.bf16.mxu0 0
      %2313 = vmatmul.mubr.bf16.gmra.mrb[0].mxu0 %v2046
      %v2314 = vpop.f32.mrb[0].mxu0
      %v2315 = vadd.f32 %v1961, %v2314
      %v2316 = vpop.f32.mrb[0].mxu0
      %v2317 = vpop.f32.mrb[0].mxu0
      %v2318 = vadd.f32 %v1961, %v2317
      %v2319 = vpop.f32.mrb[0].mxu0
      %2320 = vmatprep.mubr.bf16.mxu0 0
      %2321 = vmatmul.mubr.bf16.gmra.mrb[0].mxu0 %v2049
      %v2322 = vpop.f32.mrb[0].mxu0
      %v2323 = vadd.f32 %v1961, %v2322
      %v2324 = vpop.f32.mrb[0].mxu0
      %v2325 = vpop.f32.mrb[0].mxu0
      %v2326 = vadd.f32 %v1961, %v2325
      %v2327 = vpop.f32.mrb[0].mxu0
      %2328 = vmatprep.mubr.bf16.mxu0 0
      %2329 = vmatmul.mubr.bf16.gmra.mrb[0].mxu0 %v2052
      %v2330 = vpop.f32.mrb[0].mxu0
      %v2331 = vadd.f32 %v1961, %v2330
      %v2332 = vpop.f32.mrb[0].mxu0
      %v2333 = vpop.f32.mrb[0].mxu0
      %v2334 = vadd.f32 %v1961, %v2333
      %v2335 = vpop.f32.mrb[0].mxu0
      %2336 = vmatprep.mubr.bf16.mxu0 0
      %2337 = vmatmul.mubr.bf16.gmra.mrb[0].mxu0 %v2055
      %v2338 = vpop.f32.mrb[0].mxu0
      %v2339 = vadd.f32 %v1961, %v2338
      %v2340 = vpop.f32.mrb[0].mxu0
      %v2341 = vpop.f32.mrb[0].mxu0
      %v2342 = vadd.f32 %v1961, %v2341
      %v2343 = vpop.f32.mrb[0].mxu0
      %2344 = vmatprep.mubr.bf16.mxu0 0
      %2345 = vmatmul.mubr.bf16.gmra.mrb[0].mxu0 %v2058
      %v2346 = vpop.f32.mrb[0].mxu0
      %v2347 = vadd.f32 %v1961, %v2346
      %v2348 = vpop.f32.mrb[0].mxu0
      %v2349 = vpop.f32.mrb[0].mxu0
      %v2350 = vadd.f32 %v1961, %v2349
      %v2351 = vpop.f32.mrb[0].mxu0
      %2352 = vdwg.mxu0
      %v2353 = vmax.f32 %v2099, 0.0
      %v2354 = vmax.f32 %v2102, 0.0
      %v2355 = vmax.f32 %v2107, 0.0
      %v2356 = vmax.f32 %v2110, 0.0
      %v2357 = vmax.f32 %v2115, 0.0
      %v2358 = vmax.f32 %v2118, 0.0
      %v2359 = vmax.f32 %v2123, 0.0
      %v2360 = vmax.f32 %v2126, 0.0
      %v2361 = vmax.f32 %v2131, 0.0
      %v2362 = vmax.f32 %v2134, 0.0
      %v2363 = vmax.f32 %v2139, 0.0
      %v2364 = vmax.f32 %v2142, 0.0
      %v2365 = vmax.f32 %v2147, 0.0
      %v2366 = vmax.f32 %v2150, 0.0
      %v2367 = vmax.f32 %v2155, 0.0
      %v2368 = vmax.f32 %v2158, 0.0
      %v2369 = vmax.f32 %v2163, 0.0
      %v2370 = vmax.f32 %v2166, 0.0
      %v2371 = vmax.f32 %v2171, 0.0
      %v2372 = vmax.f32 %v2174, 0.0
      %v2373 = vmax.f32 %v2179, 0.0
      %v2374 = vmax.f32 %v2182, 0.0
      %v2375 = vmax.f32 %v2187, 0.0
      %v2376 = vmax.f32 %v2190, 0.0
      %v2377 = vmax.f32 %v2195, 0.0
      %v2378 = vmax.f32 %v2198, 0.0
      %v2379 = vmax.f32 %v2203, 0.0
      %v2380 = vmax.f32 %v2206, 0.0
      %v2381 = vmax.f32 %v2211, 0.0
      %v2382 = vmax.f32 %v2214, 0.0
      %v2383 = vmax.f32 %v2219, 0.0
      %v2384 = vmax.f32 %v2222, 0.0
      %v2385 = vmax.f32 %v2227, 0.0
      %v2386 = vmax.f32 %v2230, 0.0
      %v2387 = vmax.f32 %v2235, 0.0
      %v2388 = vmax.f32 %v2238, 0.0
      %v2389 = vmax.f32 %v2243, 0.0
      %v2390 = vmax.f32 %v2246, 0.0
      %v2391 = vmax.f32 %v2251, 0.0
      %v2392 = vmax.f32 %v2254, 0.0
      %v2393 = vmax.f32 %v2259, 0.0
      %v2394 = vmax.f32 %v2262, 0.0
      %v2395 = vmax.f32 %v2267, 0.0
      %v2396 = vmax.f32 %v2270, 0.0
      %v2397 = vmax.f32 %v2275, 0.0
      %v2398 = vmax.f32 %v2278, 0.0
      %v2399 = vmax.f32 %v2283, 0.0
      %v2400 = vmax.f32 %v2286, 0.0
      %v2401 = vmax.f32 %v2291, 0.0
      %v2402 = vmax.f32 %v2294, 0.0
      %v2403 = vmax.f32 %v2299, 0.0
      %v2404 = vmax.f32 %v2302, 0.0
      %v2405 = vmax.f32 %v2307, 0.0
      %v2406 = vmax.f32 %v2310, 0.0
      %v2407 = vmax.f32 %v2315, 0.0
      %v2408 = vmax.f32 %v2318, 0.0
      %v2409 = vmax.f32 %v2323, 0.0
      %v2410 = vmax.f32 %v2326, 0.0
      %v2411 = vmax.f32 %v2331, 0.0
      %v2412 = vmax.f32 %v2334, 0.0
      %v2413 = vmax.f32 %v2339, 0.0
      %v2414 = vmax.f32 %v2342, 0.0
      %v2415 = vmax.f32 %v2347, 0.0
      %v2416 = vmax.f32 %v2350, 0.0
      %v2417 = vmul.f32 %v2353, %v484
      %v2418 = vmul.f32 %v2354, %v485
      %v2419 = vmul.f32 %v2355, %v486
      %v2420 = vmul.f32 %v2356, %v487
      %v2421 = vmul.f32 %v2357, %v488
      %v2422 = vmul.f32 %v2358, %v489
      %v2423 = vmul.f32 %v2359, %v490
      %v2424 = vmul.f32 %v2360, %v491
      %v2425 = vmul.f32 %v2361, %v492
      %v2426 = vmul.f32 %v2362, %v493
      %v2427 = vmul.f32 %v2363, %v494
      %v2428 = vmul.f32 %v2364, %v495
      %v2429 = vmul.f32 %v2365, %v496
      %v2430 = vmul.f32 %v2366, %v497
      %v2431 = vmul.f32 %v2367, %v498
      %v2432 = vmul.f32 %v2368, %v499
      %v2433 = vmul.f32 %v2369, %v500
      %v2434 = vmul.f32 %v2370, %v501
      %v2435 = vmul.f32 %v2371, %v502
      %v2436 = vmul.f32 %v2372, %v503
      %v2437 = vmul.f32 %v2373, %v504
      %v2438 = vmul.f32 %v2374, %v505
      %v2439 = vmul.f32 %v2375, %v506
      %v2440 = vmul.f32 %v2376, %v507
      %v2441 = vmul.f32 %v2377, %v508
      %v2442 = vmul.f32 %v2378, %v509
      %v2443 = vmul.f32 %v2379, %v510
      %v2444 = vmul.f32 %v2380, %v511
      %v2445 = vmul.f32 %v2381, %v512
      %v2446 = vmul.f32 %v2382, %v513
      %v2447 = vmul.f32 %v2383, %v514
      %v2448 = vmul.f32 %v2384, %v515
      %v2449 = vmul.f32 %v2385, %v516
      %v2450 = vmul.f32 %v2386, %v517
      %v2451 = vmul.f32 %v2387, %v518
      %v2452 = vmul.f32 %v2388, %v519
      %v2453 = vmul.f32 %v2389, %v520
      %v2454 = vmul.f32 %v2390, %v521
      %v2455 = vmul.f32 %v2391, %v522
      %v2456 = vmul.f32 %v2392, %v523
      %v2457 = vmul.f32 %v2393, %v524
      %v2458 = vmul.f32 %v2394, %v525
      %v2459 = vmul.f32 %v2395, %v526
      %v2460 = vmul.f32 %v2396, %v527
      %v2461 = vmul.f32 %v2397, %v528
      %v2462 = vmul.f32 %v2398, %v529
      %v2463 = vmul.f32 %v2399, %v530
      %v2464 = vmul.f32 %v2400, %v531
      %v2465 = vmul.f32 %v2401, %v532
      %v2466 = vmul.f32 %v2402, %v533
      %v2467 = vmul.f32 %v2403, %v534
      %v2468 = vmul.f32 %v2404, %v535
      %v2469 = vmul.f32 %v2405, %v536
      %v2470 = vmul.f32 %v2406, %v537
      %v2471 = vmul.f32 %v2407, %v538
      %v2472 = vmul.f32 %v2408, %v539
      %v2473 = vmul.f32 %v2409, %v540
      %v2474 = vmul.f32 %v2410, %v541
      %v2475 = vmul.f32 %v2411, %v542
      %v2476 = vmul.f32 %v2412, %v543
      %v2477 = vmul.f32 %v2413, %v544
      %v2478 = vmul.f32 %v2414, %v545
      %v2479 = vmul.f32 %v2415, %v546
      %v2480 = vmul.f32 %v2416, %v547
      %v2545 = vunpack.c.l.b16 %v420
      %v2546 = vunpack.c.l.b16 %v421
      %v2547 = vunpack.c.l.b16 %v422
      %v2548 = vunpack.c.l.b16 %v423
      %v2549 = vunpack.c.l.b16 %v424
      %v2550 = vunpack.c.l.b16 %v425
      %v2551 = vunpack.c.l.b16 %v426
      %v2552 = vunpack.c.l.b16 %v427
      %v2553 = vunpack.c.l.b16 %v428
      %v2554 = vunpack.c.l.b16 %v429
      %v2555 = vunpack.c.l.b16 %v430
      %v2556 = vunpack.c.l.b16 %v431
      %v2557 = vunpack.c.l.b16 %v432
      %v2558 = vunpack.c.l.b16 %v433
      %v2559 = vunpack.c.l.b16 %v434
      %v2560 = vunpack.c.l.b16 %v435
      %v2561 = vunpack.c.l.b16 %v436
      %v2562 = vunpack.c.l.b16 %v437
      %v2563 = vunpack.c.l.b16 %v438
      %v2564 = vunpack.c.l.b16 %v439
      %v2565 = vunpack.c.l.b16 %v440
      %v2566 = vunpack.c.l.b16 %v441
      %v2567 = vunpack.c.l.b16 %v442
      %v2568 = vunpack.c.l.b16 %v443
      %v2569 = vunpack.c.l.b16 %v444
      %v2570 = vunpack.c.l.b16 %v445
      %v2571 = vunpack.c.l.b16 %v446
      %v2572 = vunpack.c.l.b16 %v447
      %v2573 = vunpack.c.l.b16 %v448
      %v2574 = vunpack.c.l.b16 %v449
      %v2575 = vunpack.c.l.b16 %v450
      %v2576 = vunpack.c.l.b16 %v451
      %v2577 = vunpack.c.l.b16 %v452
      %v2578 = vunpack.c.l.b16 %v453
      %v2579 = vunpack.c.l.b16 %v454
      %v2580 = vunpack.c.l.b16 %v455
      %v2581 = vunpack.c.l.b16 %v456
      %v2582 = vunpack.c.l.b16 %v457
      %v2583 = vunpack.c.l.b16 %v458
      %v2584 = vunpack.c.l.b16 %v459
      %v2585 = vunpack.c.l.b16 %v460
      %v2586 = vunpack.c.l.b16 %v461
      %v2587 = vunpack.c.l.b16 %v462
      %v2588 = vunpack.c.l.b16 %v463
      %v2589 = vunpack.c.l.b16 %v464
      %v2590 = vunpack.c.l.b16 %v465
      %v2591 = vunpack.c.l.b16 %v466
      %v2592 = vunpack.c.l.b16 %v467
      %v2593 = vunpack.c.l.b16 %v468
      %v2594 = vunpack.c.l.b16 %v469
      %v2595 = vunpack.c.l.b16 %v470
      %v2596 = vunpack.c.l.b16 %v471
      %v2597 = vunpack.c.l.b16 %v472
      %v2598 = vunpack.c.l.b16 %v473
      %v2599 = vunpack.c.l.b16 %v474
      %v2600 = vunpack.c.l.b16 %v475
      %v2601 = vunpack.c.l.b16 %v476
      %v2602 = vunpack.c.l.b16 %v477
      %v2603 = vunpack.c.l.b16 %v478
      %v2604 = vunpack.c.l.b16 %v479
      %v2605 = vunpack.c.l.b16 %v480
      %v2606 = vunpack.c.l.b16 %v481
      %v2607 = vunpack.c.l.b16 %v482
      %v2608 = vunpack.c.l.b16 %v483
      %v2609 = vpack.c.b16 %v2546, %v2545
      %v2610 = vpack.c.b16 %v2548, %v2547
      %v2611 = vpack.c.b16 %v2550, %v2549
      %v2612 = vpack.c.b16 %v2552, %v2551
      %v2613 = vpack.c.b16 %v2554, %v2553
      %v2614 = vpack.c.b16 %v2556, %v2555
      %v2615 = vpack.c.b16 %v2558, %v2557
      %v2616 = vpack.c.b16 %v2560, %v2559
      %v2617 = vpack.c.b16 %v2562, %v2561
      %v2618 = vpack.c.b16 %v2564, %v2563
      %v2619 = vpack.c.b16 %v2566, %v2565
      %v2620 = vpack.c.b16 %v2568, %v2567
      %v2621 = vpack.c.b16 %v2570, %v2569
      %v2622 = vpack.c.b16 %v2572, %v2571
      %v2623 = vpack.c.b16 %v2574, %v2573
      %v2624 = vpack.c.b16 %v2576, %v2575
      %v2625 = vpack.c.b16 %v2578, %v2577
      %v2626 = vpack.c.b16 %v2580, %v2579
      %v2627 = vpack.c.b16 %v2582, %v2581
      %v2628 = vpack.c.b16 %v2584, %v2583
      %v2629 = vpack.c.b16 %v2586, %v2585
      %v2630 = vpack.c.b16 %v2588, %v2587
      %v2631 = vpack.c.b16 %v2590, %v2589
      %v2632 = vpack.c.b16 %v2592, %v2591
      %v2633 = vpack.c.b16 %v2594, %v2593
      %v2634 = vpack.c.b16 %v2596, %v2595
      %v2635 = vpack.c.b16 %v2598, %v2597
      %v2636 = vpack.c.b16 %v2600, %v2599
      %v2637 = vpack.c.b16 %v2602, %v2601
      %v2638 = vpack.c.b16 %v2604, %v2603
      %v2639 = vpack.c.b16 %v2606, %v2605
      %v2640 = vpack.c.b16 %v2608, %v2607
      %vm2673 = vcmask 523264
      %2674 = vst.msk [vmem:[#allocation2] sm:$0xff] %vm2673, %v2609
      %2675 = vst.msk [vmem:[#allocation2 + $0x8] sm:$0xff] %vm2673, %v2610
      %2676 = vst.msk [vmem:[#allocation2 + $0x10] sm:$0xff] %vm2673, %v2611
      %2677 = vst.msk [vmem:[#allocation2 + $0x18] sm:$0xff] %vm2673, %v2612
      %2678 = vst.msk [vmem:[#allocation2 + $0x20] sm:$0xff] %vm2673, %v2613
      %2679 = vst.msk [vmem:[#allocation2 + $0x28] sm:$0xff] %vm2673, %v2614
      %2680 = vst.msk [vmem:[#allocation2 + $0x30] sm:$0xff] %vm2673, %v2615
      %2681 = vst.msk [vmem:[#allocation2 + $0x38] sm:$0xff] %vm2673, %v2616
      %2682 = vst.msk [vmem:[#allocation2 + $0x40] sm:$0xff] %vm2673, %v2617
      %2683 = vst.msk [vmem:[#allocation2 + $0x48] sm:$0xff] %vm2673, %v2618
      %2684 = vst.msk [vmem:[#allocation2 + $0x50] sm:$0xff] %vm2673, %v2619
      %2685 = vst.msk [vmem:[#allocation2 + $0x58] sm:$0xff] %vm2673, %v2620
      %2686 = vst.msk [vmem:[#allocation2 + $0x60] sm:$0xff] %vm2673, %v2621
      %2687 = vst.msk [vmem:[#allocation2 + $0x68] sm:$0xff] %vm2673, %v2622
      %2688 = vst.msk [vmem:[#allocation2 + $0x70] sm:$0xff] %vm2673, %v2623
      %2689 = vst.msk [vmem:[#allocation2 + $0x78] sm:$0xff] %vm2673, %v2624
      %2690 = vst.msk [vmem:[#allocation2 + $0x80] sm:$0xff] %vm2673, %v2625
      %2691 = vst.msk [vmem:[#allocation2 + $0x88] sm:$0xff] %vm2673, %v2626
      %2692 = vst.msk [vmem:[#allocation2 + $0x90] sm:$0xff] %vm2673, %v2627
      %2693 = vst.msk [vmem:[#allocation2 + $0x98] sm:$0xff] %vm2673, %v2628
      %2694 = vst.msk [vmem:[#allocation2 + $0xa0] sm:$0xff] %vm2673, %v2629
      %2695 = vst.msk [vmem:[#allocation2 + $0xa8] sm:$0xff] %vm2673, %v2630
      %2696 = vst.msk [vmem:[#allocation2 + $0xb0] sm:$0xff] %vm2673, %v2631
      %2697 = vst.msk [vmem:[#allocation2 + $0xb8] sm:$0xff] %vm2673, %v2632
      %2698 = vst.msk [vmem:[#allocation2 + $0xc0] sm:$0xff] %vm2673, %v2633
      %2699 = vst.msk [vmem:[#allocation2 + $0xc8] sm:$0xff] %vm2673, %v2634
      %2700 = vst.msk [vmem:[#allocation2 + $0xd0] sm:$0xff] %vm2673, %v2635
      %2701 = vst.msk [vmem:[#allocation2 + $0xd8] sm:$0xff] %vm2673, %v2636
      %2702 = vst.msk [vmem:[#allocation2 + $0xe0] sm:$0xff] %vm2673, %v2637
      %2703 = vst.msk [vmem:[#allocation2 + $0xe8] sm:$0xff] %vm2673, %v2638
      %2704 = vst.msk [vmem:[#allocation2 + $0xf0] sm:$0xff] %vm2673, %v2639
      %2705 = vst.msk [vmem:[#allocation2 + $0xf8] sm:$0xff] %vm2673, %v2640
      %v2706 = vpack.c.bf16 %v2418, %v2417
      %v2707 = vpack.c.bf16 %v2420, %v2419
      %v2708 = vpack.c.bf16 %v2422, %v2421
      %v2709 = vpack.c.bf16 %v2424, %v2423
      %v2710 = vpack.c.bf16 %v2426, %v2425
      %v2711 = vpack.c.bf16 %v2428, %v2427
      %v2712 = vpack.c.bf16 %v2430, %v2429
      %v2713 = vpack.c.bf16 %v2432, %v2431
      %v2714 = vpack.c.bf16 %v2434, %v2433
      %v2715 = vpack.c.bf16 %v2436, %v2435
      %v2716 = vpack.c.bf16 %v2438, %v2437
      %v2717 = vpack.c.bf16 %v2440, %v2439
      %v2718 = vpack.c.bf16 %v2442, %v2441
      %v2719 = vpack.c.bf16 %v2444, %v2443
      %v2720 = vpack.c.bf16 %v2446, %v2445
      %v2721 = vpack.c.bf16 %v2448, %v2447
      %v2722 = vpack.c.bf16 %v2450, %v2449
      %v2723 = vpack.c.bf16 %v2452, %v2451
      %v2724 = vpack.c.bf16 %v2454, %v2453
      %v2725 = vpack.c.bf16 %v2456, %v2455
      %v2726 = vpack.c.bf16 %v2458, %v2457
      %v2727 = vpack.c.bf16 %v2460, %v2459
      %v2728 = vpack.c.bf16 %v2462, %v2461
      %v2729 = vpack.c.bf16 %v2464, %v2463
      %v2730 = vpack.c.bf16 %v2466, %v2465
      %v2731 = vpack.c.bf16 %v2468, %v2467
      %v2732 = vpack.c.bf16 %v2470, %v2469
      %v2733 = vpack.c.bf16 %v2472, %v2471
      %v2734 = vpack.c.bf16 %v2474, %v2473
      %v2735 = vpack.c.bf16 %v2476, %v2475
      %v2736 = vpack.c.bf16 %v2478, %v2477
      %v2737 = vpack.c.bf16 %v2480, %v2479
      %2770 = vrot.lane.b32.xlu0 %v2706, 64
      %v2771 = vpop.permute.xlu0 %2770
      %2772 = vrot.lane.b32.xlu0 %v2707, 64
      %v2773 = vpop.permute.xlu0 %2772
      %2774 = vrot.lane.b32.xlu0 %v2708, 64
      %v2775 = vpop.permute.xlu0 %2774
      %2776 = vrot.lane.b32.xlu0 %v2709, 64
      %v2777 = vpop.permute.xlu0 %2776
      %2778 = vrot.lane.b32.xlu0 %v2710, 64
      %v2779 = vpop.permute.xlu0 %2778
      %2780 = vrot.lane.b32.xlu0 %v2711, 64
      %v2781 = vpop.permute.xlu0 %2780
      %2782 = vrot.lane.b32.xlu0 %v2712, 64
      %v2783 = vpop.permute.xlu0 %2782
      %2784 = vrot.lane.b32.xlu0 %v2713, 64
      %v2785 = vpop.permute.xlu0 %2784
      %2786 = vrot.lane.b32.xlu0 %v2714, 64
      %v2787 = vpop.permute.xlu0 %2786
      %2788 = vrot.lane.b32.xlu0 %v2715, 64
      %v2789 = vpop.permute.xlu0 %2788
      %2790 = vrot.lane.b32.xlu0 %v2716, 64
      %v2791 = vpop.permute.xlu0 %2790
      %2792 = vrot.lane.b32.xlu0 %v2717, 64
      %v2793 = vpop.permute.xlu0 %2792
      %2794 = vrot.lane.b32.xlu0 %v2718, 64
      %v2795 = vpop.permute.xlu0 %2794
      %2796 = vrot.lane.b32.xlu0 %v2719, 64
      %v2797 = vpop.permute.xlu0 %2796
      %2798 = vrot.lane.b32.xlu0 %v2720, 64
      %v2799 = vpop.permute.xlu0 %2798
      %2800 = vrot.lane.b32.xlu0 %v2721, 64
      %v2801 = vpop.permute.xlu0 %2800
      %2802 = vrot.lane.b32.xlu0 %v2722, 64
      %v2803 = vpop.permute.xlu0 %2802
      %2804 = vrot.lane.b32.xlu0 %v2723, 64
      %v2805 = vpop.permute.xlu0 %2804
      %2806 = vrot.lane.b32.xlu0 %v2724, 64
      %v2807 = vpop.permute.xlu0 %2806
      %2808 = vrot.lane.b32.xlu0 %v2725, 64
      %v2809 = vpop.permute.xlu0 %2808
      %2810 = vrot.lane.b32.xlu0 %v2726, 64
      %v2811 = vpop.permute.xlu0 %2810
      %2812 = vrot.lane.b32.xlu0 %v2727, 64
      %v2813 = vpop.permute.xlu0 %2812
      %2814 = vrot.lane.b32.xlu0 %v2728, 64
      %v2815 = vpop.permute.xlu0 %2814
      %2816 = vrot.lane.b32.xlu0 %v2729, 64
      %v2817 = vpop.permute.xlu0 %2816
      %2818 = vrot.lane.b32.xlu0 %v2730, 64
      %v2819 = vpop.permute.xlu0 %2818
      %2820 = vrot.lane.b32.xlu0 %v2731, 64
      %v2821 = vpop.permute.xlu0 %2820
      %2822 = vrot.lane.b32.xlu0 %v2732, 64
      %v2823 = vpop.permute.xlu0 %2822
      %2824 = vrot.lane.b32.xlu0 %v2733, 64
      %v2825 = vpop.permute.xlu0 %2824
      %2826 = vrot.lane.b32.xlu0 %v2734, 64
      %v2827 = vpop.permute.xlu0 %2826
      %2828 = vrot.lane.b32.xlu0 %v2735, 64
      %v2829 = vpop.permute.xlu0 %2828
      %2830 = vrot.lane.b32.xlu0 %v2736, 64
      %v2831 = vpop.permute.xlu0 %2830
      %2832 = vrot.lane.b32.xlu0 %v2737, 64
      %v2833 = vpop.permute.xlu0 %2832
      %vm2866 = vcmask 1048064
      %2867 = vst.msk [vmem:[#allocation2] sm:$0xff] %vm2866, %v2771
      %2868 = vst.msk [vmem:[#allocation2 + $0x8] sm:$0xff] %vm2866, %v2773
      %2869 = vst.msk [vmem:[#allocation2 + $0x10] sm:$0xff] %vm2866, %v2775
      %2870 = vst.msk [vmem:[#allocation2 + $0x18] sm:$0xff] %vm2866, %v2777
      %2871 = vst.msk [vmem:[#allocation2 + $0x20] sm:$0xff] %vm2866, %v2779
      %2872 = vst.msk [vmem:[#allocation2 + $0x28] sm:$0xff] %vm2866, %v2781
      %2873 = vst.msk [vmem:[#allocation2 + $0x30] sm:$0xff] %vm2866, %v2783
      %2874 = vst.msk [vmem:[#allocation2 + $0x38] sm:$0xff] %vm2866, %v2785
      %2875 = vst.msk [vmem:[#allocation2 + $0x40] sm:$0xff] %vm2866, %v2787
      %2876 = vst.msk [vmem:[#allocation2 + $0x48] sm:$0xff] %vm2866, %v2789
      %2877 = vst.msk [vmem:[#allocation2 + $0x50] sm:$0xff] %vm2866, %v2791
      %2878 = vst.msk [vmem:[#allocation2 + $0x58] sm:$0xff] %vm2866, %v2793
      %2879 = vst.msk [vmem:[#allocation2 + $0x60] sm:$0xff] %vm2866, %v2795
      %2880 = vst.msk [vmem:[#allocation2 + $0x68] sm:$0xff] %vm2866, %v2797
      %2881 = vst.msk [vmem:[#allocation2 + $0x70] sm:$0xff] %vm2866, %v2799
      %2882 = vst.msk [vmem:[#allocation2 + $0x78] sm:$0xff] %vm2866, %v2801
      %2883 = vst.msk [vmem:[#allocation2 + $0x80] sm:$0xff] %vm2866, %v2803
      %2884 = vst.msk [vmem:[#allocation2 + $0x88] sm:$0xff] %vm2866, %v2805
      %2885 = vst.msk [vmem:[#allocation2 + $0x90] sm:$0xff] %vm2866, %v2807
      %2886 = vst.msk [vmem:[#allocation2 + $0x98] sm:$0xff] %vm2866, %v2809
      %2887 = vst.msk [vmem:[#allocation2 + $0xa0] sm:$0xff] %vm2866, %v2811
      %2888 = vst.msk [vmem:[#allocation2 + $0xa8] sm:$0xff] %vm2866, %v2813
      %2889 = vst.msk [vmem:[#allocation2 + $0xb0] sm:$0xff] %vm2866, %v2815
      %2890 = vst.msk [vmem:[#allocation2 + $0xb8] sm:$0xff] %vm2866, %v2817
      %2891 = vst.msk [vmem:[#allocation2 + $0xc0] sm:$0xff] %vm2866, %v2819
      %2892 = vst.msk [vmem:[#allocation2 + $0xc8] sm:$0xff] %vm2866, %v2821
      %2893 = vst.msk [vmem:[#allocation2 + $0xd0] sm:$0xff] %vm2866, %v2823
      %2894 = vst.msk [vmem:[#allocation2 + $0xd8] sm:$0xff] %vm2866, %v2825
      %2895 = vst.msk [vmem:[#allocation2 + $0xe0] sm:$0xff] %vm2866, %v2827
      %2896 = vst.msk [vmem:[#allocation2 + $0xe8] sm:$0xff] %vm2866, %v2829
      %2897 = vst.msk [vmem:[#allocation2 + $0xf0] sm:$0xff] %vm2866, %v2831
      %2898 = vst.msk [vmem:[#allocation2 + $0xf8] sm:$0xff] %vm2866, %v2833
      %v2899 = vld [vmem:[#allocation2] sm:$0xff]
      %v2900 = vld [vmem:[#allocation2 + $0x8] sm:$0xff]
      %v2901 = vld [vmem:[#allocation2 + $0x10] sm:$0xff]
      %v2902 = vld [vmem:[#allocation2 + $0x18] sm:$0xff]
      %v2903 = vld [vmem:[#allocation2 + $0x20] sm:$0xff]
      %v2904 = vld [vmem:[#allocation2 + $0x28] sm:$0xff]
      %v2905 = vld [vmem:[#allocation2 + $0x30] sm:$0xff]
      %v2906 = vld [vmem:[#allocation2 + $0x38] sm:$0xff]
      %v2907 = vld [vmem:[#allocation2 + $0x40] sm:$0xff]
      %v2908 = vld [vmem:[#allocation2 + $0x48] sm:$0xff]
      %v2909 = vld [vmem:[#allocation2 + $0x50] sm:$0xff]
      %v2910 = vld [vmem:[#allocation2 + $0x58] sm:$0xff]
      %v2911 = vld [vmem:[#allocation2 + $0x60] sm:$0xff]
      %v2912 = vld [vmem:[#allocation2 + $0x68] sm:$0xff]
      %v2913 = vld [vmem:[#allocation2 + $0x70] sm:$0xff]
      %v2914 = vld [vmem:[#allocation2 + $0x78] sm:$0xff]
      %v2915 = vld [vmem:[#allocation2 + $0x80] sm:$0xff]
      %v2916 = vld [vmem:[#allocation2 + $0x88] sm:$0xff]
      %v2917 = vld [vmem:[#allocation2 + $0x90] sm:$0xff]
      %v2918 = vld [vmem:[#allocation2 + $0x98] sm:$0xff]
      %v2919 = vld [vmem:[#allocation2 + $0xa0] sm:$0xff]
      %v2920 = vld [vmem:[#allocation2 + $0xa8] sm:$0xff]
      %v2921 = vld [vmem:[#allocation2 + $0xb0] sm:$0xff]
      %v2922 = vld [vmem:[#allocation2 + $0xb8] sm:$0xff]
      %v2923 = vld [vmem:[#allocation2 + $0xc0] sm:$0xff]
      %v2924 = vld [vmem:[#allocation2 + $0xc8] sm:$0xff]
      %v2925 = vld [vmem:[#allocation2 + $0xd0] sm:$0xff]
      %v2926 = vld [vmem:[#allocation2 + $0xd8] sm:$0xff]
      %v2927 = vld [vmem:[#allocation2 + $0xe0] sm:$0xff]
      %v2928 = vld [vmem:[#allocation2 + $0xe8] sm:$0xff]
      %v2929 = vld [vmem:[#allocation2 + $0xf0] sm:$0xff]
      %v2930 = vld [vmem:[#allocation2 + $0xf8] sm:$0xff]
      %v2931 = vld [vmem:[%s5] sm:$0xff]
      %v2932 = vld [vmem:[%s5 + $0x8] sm:$0xff]
      %v2933 = vld [vmem:[%s5 + $0x10] sm:$0xff]
      %v2934 = vld [vmem:[%s5 + $0x18] sm:$0xff]
      %v2935 = vld [vmem:[%s5 + $0x20] sm:$0xff]
      %v2936 = vld [vmem:[%s5 + $0x28] sm:$0xff]
      %v2937 = vld [vmem:[%s5 + $0x30] sm:$0xff]
      %v2938 = vld [vmem:[%s5 + $0x38] sm:$0xff]
      %v2939 = vld [vmem:[%s5 + $0x40] sm:$0xff]
      %v2940 = vld [vmem:[%s5 + $0x48] sm:$0xff]
      %v2941 = vld [vmem:[%s5 + $0x50] sm:$0xff]
      %v2942 = vld [vmem:[%s5 + $0x58] sm:$0xff]
      %v2943 = vld [vmem:[%s5 + $0x60] sm:$0xff]
      %v2944 = vld [vmem:[%s5 + $0x68] sm:$0xff]
      %v2945 = vld [vmem:[%s5 + $0x70] sm:$0xff]
      %v2946 = vld [vmem:[%s5 + $0x78] sm:$0xff]
      %v2947 = vld [vmem:[%s5 + $0x80] sm:$0xff]
      %v2948 = vld [vmem:[%s5 + $0x88] sm:$0xff]
      %v2949 = vld [vmem:[%s5 + $0x90] sm:$0xff]
      %v2950 = vld [vmem:[%s5 + $0x98] sm:$0xff]
      %v2951 = vld [vmem:[%s5 + $0xa0] sm:$0xff]
      %v2952 = vld [vmem:[%s5 + $0xa8] sm:$0xff]
      %v2953 = vld [vmem:[%s5 + $0xb0] sm:$0xff]
      %v2954 = vld [vmem:[%s5 + $0xb8] sm:$0xff]
      %v2955 = vld [vmem:[%s5 + $0xc0] sm:$0xff]
      %v2956 = vld [vmem:[%s5 + $0xc8] sm:$0xff]
      %v2957 = vld [vmem:[%s5 + $0xd0] sm:$0xff]
      %v2958 = vld [vmem:[%s5 + $0xd8] sm:$0xff]
      %v2959 = vld [vmem:[%s5 + $0xe0] sm:$0xff]
      %v2960 = vld [vmem:[%s5 + $0xe8] sm:$0xff]
      %v2961 = vld [vmem:[%s5 + $0xf0] sm:$0xff]
      %v2962 = vld [vmem:[%s5 + $0xf8] sm:$0xff]
      %v2995 = vunpack.c.l.b16 %v2931
      %v2996 = vunpack.c.h.b16 %v2931
      %v2997 = vunpack.c.l.b16 %v2932
      %v2998 = vunpack.c.h.b16 %v2932
      %v2999 = vunpack.c.l.b16 %v2933
      %v3000 = vunpack.c.h.b16 %v2933
      %v3001 = vunpack.c.l.b16 %v2934
      %v3002 = vunpack.c.h.b16 %v2934
      %v3003 = vunpack.c.l.b16 %v2935
      %v3004 = vunpack.c.h.b16 %v2935
      %v3005 = vunpack.c.l.b16 %v2936
      %v3006 = vunpack.c.h.b16 %v2936
      %v3007 = vunpack.c.l.b16 %v2937
      %v3008 = vunpack.c.h.b16 %v2937
      %v3009 = vunpack.c.l.b16 %v2938
      %v3010 = vunpack.c.h.b16 %v2938
      %v3011 = vunpack.c.l.b16 %v2939
      %v3012 = vunpack.c.h.b16 %v2939
      %v3013 = vunpack.c.l.b16 %v2940
      %v3014 = vunpack.c.h.b16 %v2940
      %v3015 = vunpack.c.l.b16 %v2941
      %v3016 = vunpack.c.h.b16 %v2941
      %v3017 = vunpack.c.l.b16 %v2942
      %v3018 = vunpack.c.h.b16 %v2942
      %v3019 = vunpack.c.l.b16 %v2943
      %v3020 = vunpack.c.h.b16 %v2943
      %v3021 = vunpack.c.l.b16 %v2944
      %v3022 = vunpack.c.h.b16 %v2944
      %v3023 = vunpack.c.l.b16 %v2945
      %v3024 = vunpack.c.h.b16 %v2945
      %v3025 = vunpack.c.l.b16 %v2946
      %v3026 = vunpack.c.h.b16 %v2946
      %v3027 = vunpack.c.l.b16 %v2947
      %v3028 = vunpack.c.h.b16 %v2947
      %v3029 = vunpack.c.l.b16 %v2948
      %v3030 = vunpack.c.h.b16 %v2948
      %v3031 = vunpack.c.l.b16 %v2949
      %v3032 = vunpack.c.h.b16 %v2949
      %v3033 = vunpack.c.l.b16 %v2950
      %v3034 = vunpack.c.h.b16 %v2950
      %v3035 = vunpack.c.l.b16 %v2951
      %v3036 = vunpack.c.h.b16 %v2951
      %v3037 = vunpack.c.l.b16 %v2952
      %v3038 = vunpack.c.h.b16 %v2952
      %v3039 = vunpack.c.l.b16 %v2953
      %v3040 = vunpack.c.h.b16 %v2953
      %v3041 = vunpack.c.l.b16 %v2954
      %v3042 = vunpack.c.h.b16 %v2954
      %v3043 = vunpack.c.l.b16 %v2955
      %v3044 = vunpack.c.h.b16 %v2955
      %v3045 = vunpack.c.l.b16 %v2956
      %v3046 = vunpack.c.h.b16 %v2956
      %v3047 = vunpack.c.l.b16 %v2957
      %v3048 = vunpack.c.h.b16 %v2957
      %v3049 = vunpack.c.l.b16 %v2958
      %v3050 = vunpack.c.h.b16 %v2958
      %v3051 = vunpack.c.l.b16 %v2959
      %v3052 = vunpack.c.h.b16 %v2959
      %v3053 = vunpack.c.l.b16 %v2960
      %v3054 = vunpack.c.h.b16 %v2960
      %v3055 = vunpack.c.l.b16 %v2961
      %v3056 = vunpack.c.h.b16 %v2961
      %v3057 = vunpack.c.l.b16 %v2962
      %v3058 = vunpack.c.h.b16 %v2962
      %v3059 = vpack.c.b16 %v2999, %v2995
      %v3060 = vpack.c.b16 %v3000, %v2996
      %v3061 = vpack.c.b16 %v3001, %v2997
      %v3062 = vpack.c.b16 %v3002, %v2998
      %v3063 = vpack.c.b16 %v3007, %v3003
      %v3064 = vpack.c.b16 %v3008, %v3004
      %v3065 = vpack.c.b16 %v3009, %v3005
      %v3066 = vpack.c.b16 %v3010, %v3006
      %v3067 = vpack.c.b16 %v3015, %v3011
      %v3068 = vpack.c.b16 %v3016, %v3012
      %v3069 = vpack.c.b16 %v3017, %v3013
      %v3070 = vpack.c.b16 %v3018, %v3014
      %v3071 = vpack.c.b16 %v3023, %v3019
      %v3072 = vpack.c.b16 %v3024, %v3020
      %v3073 = vpack.c.b16 %v3025, %v3021
      %v3074 = vpack.c.b16 %v3026, %v3022
      %v3075 = vpack.c.b16 %v3031, %v3027
      %v3076 = vpack.c.b16 %v3032, %v3028
      %v3077 = vpack.c.b16 %v3033, %v3029
      %v3078 = vpack.c.b16 %v3034, %v3030
      %v3079 = vpack.c.b16 %v3039, %v3035
      %v3080 = vpack.c.b16 %v3040, %v3036
      %v3081 = vpack.c.b16 %v3041, %v3037
      %v3082 = vpack.c.b16 %v3042, %v3038
      %v3083 = vpack.c.b16 %v3047, %v3043
      %v3084 = vpack.c.b16 %v3048, %v3044
      %v3085 = vpack.c.b16 %v3049, %v3045
      %v3086 = vpack.c.b16 %v3050, %v3046
      %v3087 = vpack.c.b16 %v3055, %v3051
      %v3088 = vpack.c.b16 %v3056, %v3052
      %v3089 = vpack.c.b16 %v3057, %v3053
      %v3090 = vpack.c.b16 %v3058, %v3054
      %3123 = vmatprep.subr.bf16.mxu0 %v3060
      %3124 = vmatpush1.bf16.msra.mxu0 %v3059
      %3125 = vmatprep.subr.bf16.mxu0 %v3064
      %3126 = vmatpush1.bf16.msra.mxu0 %v3063
      %3127 = vmatprep.subr.bf16.mxu0 %v3068
      %3128 = vmatpush1.bf16.msra.mxu0 %v3067
      %3129 = vmatprep.subr.bf16.mxu0 %v3072
      %3130 = vmatpush1.bf16.msra.mxu0 %v3071
      %3131 = vmatprep.subr.bf16.mxu0 %v3076
      %3132 = vmatpush1.bf16.msra.mxu0 %v3075
      %3133 = vmatprep.subr.bf16.mxu0 %v3080
      %3134 = vmatpush1.bf16.msra.mxu0 %v3079
      %3135 = vmatprep.subr.bf16.mxu0 %v3084
      %3136 = vmatpush1.bf16.msra.mxu0 %v3083
      %3137 = vmatprep.subr.bf16.mxu0 %v3088
      %3138 = vmatpush1.bf16.msra.mxu0 %v3087
      %3139 = vmatprep.subr.bf16.mxu0 0
      %3140 = vmatpush1.bf16.msra.mxu0 0
      %3141 = vmatprep.subr.bf16.mxu0 0
      %3142 = vmatpush1.bf16.msra.mxu0 0
      %3143 = vmatprep.subr.bf16.mxu0 0
      %3144 = vmatpush1.bf16.msra.mxu0 0
      %3145 = vmatprep.subr.bf16.mxu0 0
      %3146 = vmatpush1.bf16.msra.mxu0 0
      %3147 = vmatprep.subr.bf16.mxu0 0
      %3148 = vmatpush1.bf16.msra.mxu0 0
      %3149 = vmatprep.subr.bf16.mxu0 0
      %3150 = vmatpush1.bf16.msra.mxu0 0
      %3151 = vmatprep.subr.bf16.mxu0 0
      %3152 = vmatpush1.bf16.msra.mxu0 0
      %3153 = vmatprep.subr.bf16.mxu0 0
      %3154 = vmatpush1.bf16.msra.mxu0 0
      %3155 = vmatprep.mubr.bf16.mxu0 0
      %3156 = vmatmul.mubr.bf16.gmra.mrb[0].mxu0 %v2899
      %v3157 = vpop.f32.mrb[0].mxu0
      %v3158 = vadd.f32 0.0, %v3157
      %v3159 = vpop.f32.mrb[0].mxu0
      %v3160 = vadd.f32 0.0, %v3159
      %v3161 = vpop.f32.mrb[0].mxu0
      %v3162 = vadd.f32 0.0, %v3161
      %v3163 = vpop.f32.mrb[0].mxu0
      %v3164 = vadd.f32 0.0, %v3163
      %3165 = vmatprep.mubr.bf16.mxu0 0
      %3166 = vmatmul.mubr.bf16.gmra.mrb[0].mxu0 %v2900
      %v3167 = vpop.f32.mrb[0].mxu0
      %v3168 = vadd.f32 0.0, %v3167
      %v3169 = vpop.f32.mrb[0].mxu0
      %v3170 = vadd.f32 0.0, %v3169
      %v3171 = vpop.f32.mrb[0].mxu0
      %v3172 = vadd.f32 0.0, %v3171
      %v3173 = vpop.f32.mrb[0].mxu0
      %v3174 = vadd.f32 0.0, %v3173
      %3175 = vmatprep.mubr.bf16.mxu0 0
      %3176 = vmatmul.mubr.bf16.gmra.mrb[0].mxu0 %v2901
      %v3177 = vpop.f32.mrb[0].mxu0
      %v3178 = vadd.f32 0.0, %v3177
      %v3179 = vpop.f32.mrb[0].mxu0
      %v3180 = vadd.f32 0.0, %v3179
      %v3181 = vpop.f32.mrb[0].mxu0
      %v3182 = vadd.f32 0.0, %v3181
      %v3183 = vpop.f32.mrb[0].mxu0
      %v3184 = vadd.f32 0.0, %v3183
      %3185 = vmatprep.mubr.bf16.mxu0 0
      %3186 = vmatmul.mubr.bf16.gmra.mrb[0].mxu0 %v2902
      %v3187 = vpop.f32.mrb[0].mxu0
      %v3188 = vadd.f32 0.0, %v3187
      %v3189 = vpop.f32.mrb[0].mxu0
      %v3190 = vadd.f32 0.0, %v3189
      %v3191 = vpop.f32.mrb[0].mxu0
      %v3192 = vadd.f32 0.0, %v3191
      %v3193 = vpop.f32.mrb[0].mxu0
      %v3194 = vadd.f32 0.0, %v3193
      %3195 = vmatprep.mubr.bf16.mxu0 0
      %3196 = vmatmul.mubr.bf16.gmra.mrb[0].mxu0 %v2903
      %v3197 = vpop.f32.mrb[0].mxu0
      %v3198 = vadd.f32 0.0, %v3197
      %v3199 = vpop.f32.mrb[0].mxu0
      %v3200 = vadd.f32 0.0, %v3199
      %v3201 = vpop.f32.mrb[0].mxu0
      %v3202 = vadd.f32 0.0, %v3201
      %v3203 = vpop.f32.mrb[0].mxu0
      %v3204 = vadd.f32 0.0, %v3203
      %3205 = vmatprep.mubr.bf16.mxu0 0
      %3206 = vmatmul.mubr.bf16.gmra.mrb[0].mxu0 %v2904
      %v3207 = vpop.f32.mrb[0].mxu0
      %v3208 = vadd.f32 0.0, %v3207
      %v3209 = vpop.f32.mrb[0].mxu0
      %v3210 = vadd.f32 0.0, %v3209
      %v3211 = vpop.f32.mrb[0].mxu0
      %v3212 = vadd.f32 0.0, %v3211
      %v3213 = vpop.f32.mrb[0].mxu0
      %v3214 = vadd.f32 0.0, %v3213
      %3215 = vmatprep.mubr.bf16.mxu0 0
      %3216 = vmatmul.mubr.bf16.gmra.mrb[0].mxu0 %v2905
      %v3217 = vpop.f32.mrb[0].mxu0
      %v3218 = vadd.f32 0.0, %v3217
      %v3219 = vpop.f32.mrb[0].mxu0
      %v3220 = vadd.f32 0.0, %v3219
      %v3221 = vpop.f32.mrb[0].mxu0
      %v3222 = vadd.f32 0.0, %v3221
      %v3223 = vpop.f32.mrb[0].mxu0
      %v3224 = vadd.f32 0.0, %v3223
      %3225 = vmatprep.mubr.bf16.mxu0 0
      %3226 = vmatmul.mubr.bf16.gmra.mrb[0].mxu0 %v2906
      %v3227 = vpop.f32.mrb[0].mxu0
      %v3228 = vadd.f32 0.0, %v3227
      %v3229 = vpop.f32.mrb[0].mxu0
      %v3230 = vadd.f32 0.0, %v3229
      %v3231 = vpop.f32.mrb[0].mxu0
      %v3232 = vadd.f32 0.0, %v3231
      %v3233 = vpop.f32.mrb[0].mxu0
      %v3234 = vadd.f32 0.0, %v3233
      %3235 = vmatprep.mubr.bf16.mxu0 0
      %3236 = vmatmul.mubr.bf16.gmra.mrb[0].mxu0 %v2907
      %v3237 = vpop.f32.mrb[0].mxu0
      %v3238 = vadd.f32 0.0, %v3237
      %v3239 = vpop.f32.mrb[0].mxu0
      %v3240 = vadd.f32 0.0, %v3239
      %v3241 = vpop.f32.mrb[0].mxu0
      %v3242 = vadd.f32 0.0, %v3241
      %v3243 = vpop.f32.mrb[0].mxu0
      %v3244 = vadd.f32 0.0, %v3243
      %3245 = vmatprep.mubr.bf16.mxu0 0
      %3246 = vmatmul.mubr.bf16.gmra.mrb[0].mxu0 %v2908
      %v3247 = vpop.f32.mrb[0].mxu0
      %v3248 = vadd.f32 0.0, %v3247
      %v3249 = vpop.f32.mrb[0].mxu0
      %v3250 = vadd.f32 0.0, %v3249
      %v3251 = vpop.f32.mrb[0].mxu0
      %v3252 = vadd.f32 0.0, %v3251
      %v3253 = vpop.f32.mrb[0].mxu0
      %v3254 = vadd.f32 0.0, %v3253
      %3255 = vmatprep.mubr.bf16.mxu0 0
      %3256 = vmatmul.mubr.bf16.gmra.mrb[0].mxu0 %v2909
      %v3257 = vpop.f32.mrb[0].mxu0
      %v3258 = vadd.f32 0.0, %v3257
      %v3259 = vpop.f32.mrb[0].mxu0
      %v3260 = vadd.f32 0.0, %v3259
      %v3261 = vpop.f32.mrb[0].mxu0
      %v3262 = vadd.f32 0.0, %v3261
      %v3263 = vpop.f32.mrb[0].mxu0
      %v3264 = vadd.f32 0.0, %v3263
      %3265 = vmatprep.mubr.bf16.mxu0 0
      %3266 = vmatmul.mubr.bf16.gmra.mrb[0].mxu0 %v2910
      %v3267 = vpop.f32.mrb[0].mxu0
      %v3268 = vadd.f32 0.0, %v3267
      %v3269 = vpop.f32.mrb[0].mxu0
      %v3270 = vadd.f32 0.0, %v3269
      %v3271 = vpop.f32.mrb[0].mxu0
      %v3272 = vadd.f32 0.0, %v3271
      %v3273 = vpop.f32.mrb[0].mxu0
      %v3274 = vadd.f32 0.0, %v3273
      %3275 = vmatprep.mubr.bf16.mxu0 0
      %3276 = vmatmul.mubr.bf16.gmra.mrb[0].mxu0 %v2911
      %v3277 = vpop.f32.mrb[0].mxu0
      %v3278 = vadd.f32 0.0, %v3277
      %v3279 = vpop.f32.mrb[0].mxu0
      %v3280 = vadd.f32 0.0, %v3279
      %v3281 = vpop.f32.mrb[0].mxu0
      %v3282 = vadd.f32 0.0, %v3281
      %v3283 = vpop.f32.mrb[0].mxu0
      %v3284 = vadd.f32 0.0, %v3283
      %3285 = vmatprep.mubr.bf16.mxu0 0
      %3286 = vmatmul.mubr.bf16.gmra.mrb[0].mxu0 %v2912
      %v3287 = vpop.f32.mrb[0].mxu0
      %v3288 = vadd.f32 0.0, %v3287
      %v3289 = vpop.f32.mrb[0].mxu0
      %v3290 = vadd.f32 0.0, %v3289
      %v3291 = vpop.f32.mrb[0].mxu0
      %v3292 = vadd.f32 0.0, %v3291
      %v3293 = vpop.f32.mrb[0].mxu0
      %v3294 = vadd.f32 0.0, %v3293
      %3295 = vmatprep.mubr.bf16.mxu0 0
      %3296 = vmatmul.mubr.bf16.gmra.mrb[0].mxu0 %v2913
      %v3297 = vpop.f32.mrb[0].mxu0
      %v3298 = vadd.f32 0.0, %v3297
      %v3299 = vpop.f32.mrb[0].mxu0
      %v3300 = vadd.f32 0.0, %v3299
      %v3301 = vpop.f32.mrb[0].mxu0
      %v3302 = vadd.f32 0.0, %v3301
      %v3303 = vpop.f32.mrb[0].mxu0
      %v3304 = vadd.f32 0.0, %v3303
      %3305 = vmatprep.mubr.bf16.mxu0 0
      %3306 = vmatmul.mubr.bf16.gmra.mrb[0].mxu0 %v2914
      %v3307 = vpop.f32.mrb[0].mxu0
      %v3308 = vadd.f32 0.0, %v3307
      %v3309 = vpop.f32.mrb[0].mxu0
      %v3310 = vadd.f32 0.0, %v3309
      %v3311 = vpop.f32.mrb[0].mxu0
      %v3312 = vadd.f32 0.0, %v3311
      %v3313 = vpop.f32.mrb[0].mxu0
      %v3314 = vadd.f32 0.0, %v3313
      %3315 = vmatprep.mubr.bf16.mxu0 0
      %3316 = vmatmul.mubr.bf16.gmra.mrb[0].mxu0 %v2915
      %v3317 = vpop.f32.mrb[0].mxu0
      %v3318 = vadd.f32 0.0, %v3317
      %v3319 = vpop.f32.mrb[0].mxu0
      %v3320 = vadd.f32 0.0, %v3319
      %v3321 = vpop.f32.mrb[0].mxu0
      %v3322 = vadd.f32 0.0, %v3321
      %v3323 = vpop.f32.mrb[0].mxu0
      %v3324 = vadd.f32 0.0, %v3323
      %3325 = vmatprep.mubr.bf16.mxu0 0
      %3326 = vmatmul.mubr.bf16.gmra.mrb[0].mxu0 %v2916
      %v3327 = vpop.f32.mrb[0].mxu0
      %v3328 = vadd.f32 0.0, %v3327
      %v3329 = vpop.f32.mrb[0].mxu0
      %v3330 = vadd.f32 0.0, %v3329
      %v3331 = vpop.f32.mrb[0].mxu0
      %v3332 = vadd.f32 0.0, %v3331
      %v3333 = vpop.f32.mrb[0].mxu0
      %v3334 = vadd.f32 0.0, %v3333
      %3335 = vmatprep.mubr.bf16.mxu0 0
      %3336 = vmatmul.mubr.bf16.gmra.mrb[0].mxu0 %v2917
      %v3337 = vpop.f32.mrb[0].mxu0
      %v3338 = vadd.f32 0.0, %v3337
      %v3339 = vpop.f32.mrb[0].mxu0
      %v3340 = vadd.f32 0.0, %v3339
      %v3341 = vpop.f32.mrb[0].mxu0
      %v3342 = vadd.f32 0.0, %v3341
      %v3343 = vpop.f32.mrb[0].mxu0
      %v3344 = vadd.f32 0.0, %v3343
      %3345 = vmatprep.mubr.bf16.mxu0 0
      %3346 = vmatmul.mubr.bf16.gmra.mrb[0].mxu0 %v2918
      %v3347 = vpop.f32.mrb[0].mxu0
      %v3348 = vadd.f32 0.0, %v3347
      %v3349 = vpop.f32.mrb[0].mxu0
      %v3350 = vadd.f32 0.0, %v3349
      %v3351 = vpop.f32.mrb[0].mxu0
      %v3352 = vadd.f32 0.0, %v3351
      %v3353 = vpop.f32.mrb[0].mxu0
      %v3354 = vadd.f32 0.0, %v3353
      %3355 = vmatprep.mubr.bf16.mxu0 0
      %3356 = vmatmul.mubr.bf16.gmra.mrb[0].mxu0 %v2919
      %v3357 = vpop.f32.mrb[0].mxu0
      %v3358 = vadd.f32 0.0, %v3357
      %v3359 = vpop.f32.mrb[0].mxu0
      %v3360 = vadd.f32 0.0, %v3359
      %v3361 = vpop.f32.mrb[0].mxu0
      %v3362 = vadd.f32 0.0, %v3361
      %v3363 = vpop.f32.mrb[0].mxu0
      %v3364 = vadd.f32 0.0, %v3363
      %3365 = vmatprep.mubr.bf16.mxu0 0
      %3366 = vmatmul.mubr.bf16.gmra.mrb[0].mxu0 %v2920
      %v3367 = vpop.f32.mrb[0].mxu0
      %v3368 = vadd.f32 0.0, %v3367
      %v3369 = vpop.f32.mrb[0].mxu0
      %v3370 = vadd.f32 0.0, %v3369
      %v3371 = vpop.f32.mrb[0].mxu0
      %v3372 = vadd.f32 0.0, %v3371
      %v3373 = vpop.f32.mrb[0].mxu0
      %v3374 = vadd.f32 0.0, %v3373
      %3375 = vmatprep.mubr.bf16.mxu0 0
      %3376 = vmatmul.mubr.bf16.gmra.mrb[0].mxu0 %v2921
      %v3377 = vpop.f32.mrb[0].mxu0
      %v3378 = vadd.f32 0.0, %v3377
      %v3379 = vpop.f32.mrb[0].mxu0
      %v3380 = vadd.f32 0.0, %v3379
      %v3381 = vpop.f32.mrb[0].mxu0
      %v3382 = vadd.f32 0.0, %v3381
      %v3383 = vpop.f32.mrb[0].mxu0
      %v3384 = vadd.f32 0.0, %v3383
      %3385 = vmatprep.mubr.bf16.mxu0 0
      %3386 = vmatmul.mubr.bf16.gmra.mrb[0].mxu0 %v2922
      %v3387 = vpop.f32.mrb[0].mxu0
      %v3388 = vadd.f32 0.0, %v3387
      %v3389 = vpop.f32.mrb[0].mxu0
      %v3390 = vadd.f32 0.0, %v3389
      %v3391 = vpop.f32.mrb[0].mxu0
      %v3392 = vadd.f32 0.0, %v3391
      %v3393 = vpop.f32.mrb[0].mxu0
      %v3394 = vadd.f32 0.0, %v3393
      %3395 = vmatprep.mubr.bf16.mxu0 0
      %3396 = vmatmul.mubr.bf16.gmra.mrb[0].mxu0 %v2923
      %v3397 = vpop.f32.mrb[0].mxu0
      %v3398 = vadd.f32 0.0, %v3397
      %v3399 = vpop.f32.mrb[0].mxu0
      %v3400 = vadd.f32 0.0, %v3399
      %v3401 = vpop.f32.mrb[0].mxu0
      %v3402 = vadd.f32 0.0, %v3401
      %v3403 = vpop.f32.mrb[0].mxu0
      %v3404 = vadd.f32 0.0, %v3403
      %3405 = vmatprep.mubr.bf16.mxu0 0
      %3406 = vmatmul.mubr.bf16.gmra.mrb[0].mxu0 %v2924
      %v3407 = vpop.f32.mrb[0].mxu0
      %v3408 = vadd.f32 0.0, %v3407
      %v3409 = vpop.f32.mrb[0].mxu0
      %v3410 = vadd.f32 0.0, %v3409
      %v3411 = vpop.f32.mrb[0].mxu0
      %v3412 = vadd.f32 0.0, %v3411
      %v3413 = vpop.f32.mrb[0].mxu0
      %v3414 = vadd.f32 0.0, %v3413
      %3415 = vmatprep.mubr.bf16.mxu0 0
      %3416 = vmatmul.mubr.bf16.gmra.mrb[0].mxu0 %v2925
      %v3417 = vpop.f32.mrb[0].mxu0
      %v3418 = vadd.f32 0.0, %v3417
      %v3419 = vpop.f32.mrb[0].mxu0
      %v3420 = vadd.f32 0.0, %v3419
      %v3421 = vpop.f32.mrb[0].mxu0
      %v3422 = vadd.f32 0.0, %v3421
      %v3423 = vpop.f32.mrb[0].mxu0
      %v3424 = vadd.f32 0.0, %v3423
      %3425 = vmatprep.mubr.bf16.mxu0 0
      %3426 = vmatmul.mubr.bf16.gmra.mrb[0].mxu0 %v2926
      %v3427 = vpop.f32.mrb[0].mxu0
      %v3428 = vadd.f32 0.0, %v3427
      %v3429 = vpop.f32.mrb[0].mxu0
      %v3430 = vadd.f32 0.0, %v3429
      %v3431 = vpop.f32.mrb[0].mxu0
      %v3432 = vadd.f32 0.0, %v3431
      %v3433 = vpop.f32.mrb[0].mxu0
      %v3434 = vadd.f32 0.0, %v3433
      %3435 = vmatprep.mubr.bf16.mxu0 0
      %3436 = vmatmul.mubr.bf16.gmra.mrb[0].mxu0 %v2927
      %v3437 = vpop.f32.mrb[0].mxu0
      %v3438 = vadd.f32 0.0, %v3437
      %v3439 = vpop.f32.mrb[0].mxu0
      %v3440 = vadd.f32 0.0, %v3439
      %v3441 = vpop.f32.mrb[0].mxu0
      %v3442 = vadd.f32 0.0, %v3441
      %v3443 = vpop.f32.mrb[0].mxu0
      %v3444 = vadd.f32 0.0, %v3443
      %3445 = vmatprep.mubr.bf16.mxu0 0
      %3446 = vmatmul.mubr.bf16.gmra.mrb[0].mxu0 %v2928
      %v3447 = vpop.f32.mrb[0].mxu0
      %v3448 = vadd.f32 0.0, %v3447
      %v3449 = vpop.f32.mrb[0].mxu0
      %v3450 = vadd.f32 0.0, %v3449
      %v3451 = vpop.f32.mrb[0].mxu0
      %v3452 = vadd.f32 0.0, %v3451
      %v3453 = vpop.f32.mrb[0].mxu0
      %v3454 = vadd.f32 0.0, %v3453
      %3455 = vmatprep.mubr.bf16.mxu0 0
      %3456 = vmatmul.mubr.bf16.gmra.mrb[0].mxu0 %v2929
      %v3457 = vpop.f32.mrb[0].mxu0
      %v3458 = vadd.f32 0.0, %v3457
      %v3459 = vpop.f32.mrb[0].mxu0
      %v3460 = vadd.f32 0.0, %v3459
      %v3461 = vpop.f32.mrb[0].mxu0
      %v3462 = vadd.f32 0.0, %v3461
      %v3463 = vpop.f32.mrb[0].mxu0
      %v3464 = vadd.f32 0.0, %v3463
      %3465 = vmatprep.mubr.bf16.mxu0 0
      %3466 = vmatmul.mubr.bf16.gmra.mrb[0].mxu0 %v2930
      %v3467 = vpop.f32.mrb[0].mxu0
      %v3468 = vadd.f32 0.0, %v3467
      %v3469 = vpop.f32.mrb[0].mxu0
      %v3470 = vadd.f32 0.0, %v3469
      %v3471 = vpop.f32.mrb[0].mxu0
      %v3472 = vadd.f32 0.0, %v3471
      %v3473 = vpop.f32.mrb[0].mxu0
      %v3474 = vadd.f32 0.0, %v3473
      %3475 = vdwg.mxu0
      %3476 = vmatprep.subr.bf16.mxu0 %v3062
      %3477 = vmatpush1.bf16.msra.mxu0 %v3061
      %3478 = vmatprep.subr.bf16.mxu0 %v3066
      %3479 = vmatpush1.bf16.msra.mxu0 %v3065
      %3480 = vmatprep.subr.bf16.mxu0 %v3070
      %3481 = vmatpush1.bf16.msra.mxu0 %v3069
      %3482 = vmatprep.subr.bf16.mxu0 %v3074
      %3483 = vmatpush1.bf16.msra.mxu0 %v3073
      %3484 = vmatprep.subr.bf16.mxu0 %v3078
      %3485 = vmatpush1.bf16.msra.mxu0 %v3077
      %3486 = vmatprep.subr.bf16.mxu0 %v3082
      %3487 = vmatpush1.bf16.msra.mxu0 %v3081
      %3488 = vmatprep.subr.bf16.mxu0 %v3086
      %3489 = vmatpush1.bf16.msra.mxu0 %v3085
      %3490 = vmatprep.subr.bf16.mxu0 %v3090
      %3491 = vmatpush1.bf16.msra.mxu0 %v3089
      %3492 = vmatprep.subr.bf16.mxu0 0
      %3493 = vmatpush1.bf16.msra.mxu0 0
      %3494 = vmatprep.subr.bf16.mxu0 0
      %3495 = vmatpush1.bf16.msra.mxu0 0
      %3496 = vmatprep.subr.bf16.mxu0 0
      %3497 = vmatpush1.bf16.msra.mxu0 0
      %3498 = vmatprep.subr.bf16.mxu0 0
      %3499 = vmatpush1.bf16.msra.mxu0 0
      %3500 = vmatprep.subr.bf16.mxu0 0
      %3501 = vmatpush1.bf16.msra.mxu0 0
      %3502 = vmatprep.subr.bf16.mxu0 0
      %3503 = vmatpush1.bf16.msra.mxu0 0
      %3504 = vmatprep.subr.bf16.mxu0 0
      %3505 = vmatpush1.bf16.msra.mxu0 0
      %3506 = vmatprep.subr.bf16.mxu0 0
      %3507 = vmatpush1.bf16.msra.mxu0 0
      %3508 = vmatprep.mubr.bf16.mxu0 0
      %3509 = vmatmul.mubr.bf16.gmra.mrb[0].mxu0 %v2899
      %v3510 = vpop.f32.mrb[0].mxu0
      %v3511 = vadd.f32 0.0, %v3510
      %v3512 = vpop.f32.mrb[0].mxu0
      %v3513 = vadd.f32 0.0, %v3512
      %v3514 = vpop.f32.mrb[0].mxu0
      %v3515 = vadd.f32 0.0, %v3514
      %v3516 = vpop.f32.mrb[0].mxu0
      %v3517 = vadd.f32 0.0, %v3516
      %3518 = vmatprep.mubr.bf16.mxu0 0
      %3519 = vmatmul.mubr.bf16.gmra.mrb[0].mxu0 %v2900
      %v3520 = vpop.f32.mrb[0].mxu0
      %v3521 = vadd.f32 0.0, %v3520
      %v3522 = vpop.f32.mrb[0].mxu0
      %v3523 = vadd.f32 0.0, %v3522
      %v3524 = vpop.f32.mrb[0].mxu0
      %v3525 = vadd.f32 0.0, %v3524
      %v3526 = vpop.f32.mrb[0].mxu0
      %v3527 = vadd.f32 0.0, %v3526
      %3528 = vmatprep.mubr.bf16.mxu0 0
      %3529 = vmatmul.mubr.bf16.gmra.mrb[0].mxu0 %v2901
      %v3530 = vpop.f32.mrb[0].mxu0
      %v3531 = vadd.f32 0.0, %v3530
      %v3532 = vpop.f32.mrb[0].mxu0
      %v3533 = vadd.f32 0.0, %v3532
      %v3534 = vpop.f32.mrb[0].mxu0
      %v3535 = vadd.f32 0.0, %v3534
      %v3536 = vpop.f32.mrb[0].mxu0
      %v3537 = vadd.f32 0.0, %v3536
      %3538 = vmatprep.mubr.bf16.mxu0 0
      %3539 = vmatmul.mubr.bf16.gmra.mrb[0].mxu0 %v2902
      %v3540 = vpop.f32.mrb[0].mxu0
      %v3541 = vadd.f32 0.0, %v3540
      %v3542 = vpop.f32.mrb[0].mxu0
      %v3543 = vadd.f32 0.0, %v3542
      %v3544 = vpop.f32.mrb[0].mxu0
      %v3545 = vadd.f32 0.0, %v3544
      %v3546 = vpop.f32.mrb[0].mxu0
      %v3547 = vadd.f32 0.0, %v3546
      %3548 = vmatprep.mubr.bf16.mxu0 0
      %3549 = vmatmul.mubr.bf16.gmra.mrb[0].mxu0 %v2903
      %v3550 = vpop.f32.mrb[0].mxu0
      %v3551 = vadd.f32 0.0, %v3550
      %v3552 = vpop.f32.mrb[0].mxu0
      %v3553 = vadd.f32 0.0, %v3552
      %v3554 = vpop.f32.mrb[0].mxu0
      %v3555 = vadd.f32 0.0, %v3554
      %v3556 = vpop.f32.mrb[0].mxu0
      %v3557 = vadd.f32 0.0, %v3556
      %3558 = vmatprep.mubr.bf16.mxu0 0
      %3559 = vmatmul.mubr.bf16.gmra.mrb[0].mxu0 %v2904
      %v3560 = vpop.f32.mrb[0].mxu0
      %v3561 = vadd.f32 0.0, %v3560
      %v3562 = vpop.f32.mrb[0].mxu0
      %v3563 = vadd.f32 0.0, %v3562
      %v3564 = vpop.f32.mrb[0].mxu0
      %v3565 = vadd.f32 0.0, %v3564
      %v3566 = vpop.f32.mrb[0].mxu0
      %v3567 = vadd.f32 0.0, %v3566
      %3568 = vmatprep.mubr.bf16.mxu0 0
      %3569 = vmatmul.mubr.bf16.gmra.mrb[0].mxu0 %v2905
      %v3570 = vpop.f32.mrb[0].mxu0
      %v3571 = vadd.f32 0.0, %v3570
      %v3572 = vpop.f32.mrb[0].mxu0
      %v3573 = vadd.f32 0.0, %v3572
      %v3574 = vpop.f32.mrb[0].mxu0
      %v3575 = vadd.f32 0.0, %v3574
      %v3576 = vpop.f32.mrb[0].mxu0
      %v3577 = vadd.f32 0.0, %v3576
      %3578 = vmatprep.mubr.bf16.mxu0 0
      %3579 = vmatmul.mubr.bf16.gmra.mrb[0].mxu0 %v2906
      %v3580 = vpop.f32.mrb[0].mxu0
      %v3581 = vadd.f32 0.0, %v3580
      %v3582 = vpop.f32.mrb[0].mxu0
      %v3583 = vadd.f32 0.0, %v3582
      %v3584 = vpop.f32.mrb[0].mxu0
      %v3585 = vadd.f32 0.0, %v3584
      %v3586 = vpop.f32.mrb[0].mxu0
      %v3587 = vadd.f32 0.0, %v3586
      %3588 = vmatprep.mubr.bf16.mxu0 0
      %3589 = vmatmul.mubr.bf16.gmra.mrb[0].mxu0 %v2907
      %v3590 = vpop.f32.mrb[0].mxu0
      %v3591 = vadd.f32 0.0, %v3590
      %v3592 = vpop.f32.mrb[0].mxu0
      %v3593 = vadd.f32 0.0, %v3592
      %v3594 = vpop.f32.mrb[0].mxu0
      %v3595 = vadd.f32 0.0, %v3594
      %v3596 = vpop.f32.mrb[0].mxu0
      %v3597 = vadd.f32 0.0, %v3596
      %3598 = vmatprep.mubr.bf16.mxu0 0
      %3599 = vmatmul.mubr.bf16.gmra.mrb[0].mxu0 %v2908
      %v3600 = vpop.f32.mrb[0].mxu0
      %v3601 = vadd.f32 0.0, %v3600
      %v3602 = vpop.f32.mrb[0].mxu0
      %v3603 = vadd.f32 0.0, %v3602
      %v3604 = vpop.f32.mrb[0].mxu0
      %v3605 = vadd.f32 0.0, %v3604
      %v3606 = vpop.f32.mrb[0].mxu0
      %v3607 = vadd.f32 0.0, %v3606
      %3608 = vmatprep.mubr.bf16.mxu0 0
      %3609 = vmatmul.mubr.bf16.gmra.mrb[0].mxu0 %v2909
      %v3610 = vpop.f32.mrb[0].mxu0
      %v3611 = vadd.f32 0.0, %v3610
      %v3612 = vpop.f32.mrb[0].mxu0
      %v3613 = vadd.f32 0.0, %v3612
      %v3614 = vpop.f32.mrb[0].mxu0
      %v3615 = vadd.f32 0.0, %v3614
      %v3616 = vpop.f32.mrb[0].mxu0
      %v3617 = vadd.f32 0.0, %v3616
      %3618 = vmatprep.mubr.bf16.mxu0 0
      %3619 = vmatmul.mubr.bf16.gmra.mrb[0].mxu0 %v2910
      %v3620 = vpop.f32.mrb[0].mxu0
      %v3621 = vadd.f32 0.0, %v3620
      %v3622 = vpop.f32.mrb[0].mxu0
      %v3623 = vadd.f32 0.0, %v3622
      %v3624 = vpop.f32.mrb[0].mxu0
      %v3625 = vadd.f32 0.0, %v3624
      %v3626 = vpop.f32.mrb[0].mxu0
      %v3627 = vadd.f32 0.0, %v3626
      %3628 = vmatprep.mubr.bf16.mxu0 0
      %3629 = vmatmul.mubr.bf16.gmra.mrb[0].mxu0 %v2911
      %v3630 = vpop.f32.mrb[0].mxu0
      %v3631 = vadd.f32 0.0, %v3630
      %v3632 = vpop.f32.mrb[0].mxu0
      %v3633 = vadd.f32 0.0, %v3632
      %v3634 = vpop.f32.mrb[0].mxu0
      %v3635 = vadd.f32 0.0, %v3634
      %v3636 = vpop.f32.mrb[0].mxu0
      %v3637 = vadd.f32 0.0, %v3636
      %3638 = vmatprep.mubr.bf16.mxu0 0
      %3639 = vmatmul.mubr.bf16.gmra.mrb[0].mxu0 %v2912
      %v3640 = vpop.f32.mrb[0].mxu0
      %v3641 = vadd.f32 0.0, %v3640
      %v3642 = vpop.f32.mrb[0].mxu0
      %v3643 = vadd.f32 0.0, %v3642
      %v3644 = vpop.f32.mrb[0].mxu0
      %v3645 = vadd.f32 0.0, %v3644
      %v3646 = vpop.f32.mrb[0].mxu0
      %v3647 = vadd.f32 0.0, %v3646
      %3648 = vmatprep.mubr.bf16.mxu0 0
      %3649 = vmatmul.mubr.bf16.gmra.mrb[0].mxu0 %v2913
      %v3650 = vpop.f32.mrb[0].mxu0
      %v3651 = vadd.f32 0.0, %v3650
      %v3652 = vpop.f32.mrb[0].mxu0
      %v3653 = vadd.f32 0.0, %v3652
      %v3654 = vpop.f32.mrb[0].mxu0
      %v3655 = vadd.f32 0.0, %v3654
      %v3656 = vpop.f32.mrb[0].mxu0
      %v3657 = vadd.f32 0.0, %v3656
      %3658 = vmatprep.mubr.bf16.mxu0 0
      %3659 = vmatmul.mubr.bf16.gmra.mrb[0].mxu0 %v2914
      %v3660 = vpop.f32.mrb[0].mxu0
      %v3661 = vadd.f32 0.0, %v3660
      %v3662 = vpop.f32.mrb[0].mxu0
      %v3663 = vadd.f32 0.0, %v3662
      %v3664 = vpop.f32.mrb[0].mxu0
      %v3665 = vadd.f32 0.0, %v3664
      %v3666 = vpop.f32.mrb[0].mxu0
      %v3667 = vadd.f32 0.0, %v3666
      %3668 = vmatprep.mubr.bf16.mxu0 0
      %3669 = vmatmul.mubr.bf16.gmra.mrb[0].mxu0 %v2915
      %v3670 = vpop.f32.mrb[0].mxu0
      %v3671 = vadd.f32 0.0, %v3670
      %v3672 = vpop.f32.mrb[0].mxu0
      %v3673 = vadd.f32 0.0, %v3672
      %v3674 = vpop.f32.mrb[0].mxu0
      %v3675 = vadd.f32 0.0, %v3674
      %v3676 = vpop.f32.mrb[0].mxu0
      %v3677 = vadd.f32 0.0, %v3676
      %3678 = vmatprep.mubr.bf16.mxu0 0
      %3679 = vmatmul.mubr.bf16.gmra.mrb[0].mxu0 %v2916
      %v3680 = vpop.f32.mrb[0].mxu0
      %v3681 = vadd.f32 0.0, %v3680
      %v3682 = vpop.f32.mrb[0].mxu0
      %v3683 = vadd.f32 0.0, %v3682
      %v3684 = vpop.f32.mrb[0].mxu0
      %v3685 = vadd.f32 0.0, %v3684
      %v3686 = vpop.f32.mrb[0].mxu0
      %v3687 = vadd.f32 0.0, %v3686
      %3688 = vmatprep.mubr.bf16.mxu0 0
      %3689 = vmatmul.mubr.bf16.gmra.mrb[0].mxu0 %v2917
      %v3690 = vpop.f32.mrb[0].mxu0
      %v3691 = vadd.f32 0.0, %v3690
      %v3692 = vpop.f32.mrb[0].mxu0
      %v3693 = vadd.f32 0.0, %v3692
      %v3694 = vpop.f32.mrb[0].mxu0
      %v3695 = vadd.f32 0.0, %v3694
      %v3696 = vpop.f32.mrb[0].mxu0
      %v3697 = vadd.f32 0.0, %v3696
      %3698 = vmatprep.mubr.bf16.mxu0 0
      %3699 = vmatmul.mubr.bf16.gmra.mrb[0].mxu0 %v2918
      %v3700 = vpop.f32.mrb[0].mxu0
      %v3701 = vadd.f32 0.0, %v3700
      %v3702 = vpop.f32.mrb[0].mxu0
      %v3703 = vadd.f32 0.0, %v3702
      %v3704 = vpop.f32.mrb[0].mxu0
      %v3705 = vadd.f32 0.0, %v3704
      %v3706 = vpop.f32.mrb[0].mxu0
      %v3707 = vadd.f32 0.0, %v3706
      %3708 = vmatprep.mubr.bf16.mxu0 0
      %3709 = vmatmul.mubr.bf16.gmra.mrb[0].mxu0 %v2919
      %v3710 = vpop.f32.mrb[0].mxu0
      %v3711 = vadd.f32 0.0, %v3710
      %v3712 = vpop.f32.mrb[0].mxu0
      %v3713 = vadd.f32 0.0, %v3712
      %v3714 = vpop.f32.mrb[0].mxu0
      %v3715 = vadd.f32 0.0, %v3714
      %v3716 = vpop.f32.mrb[0].mxu0
      %v3717 = vadd.f32 0.0, %v3716
      %3718 = vmatprep.mubr.bf16.mxu0 0
      %3719 = vmatmul.mubr.bf16.gmra.mrb[0].mxu0 %v2920
      %v3720 = vpop.f32.mrb[0].mxu0
      %v3721 = vadd.f32 0.0, %v3720
      %v3722 = vpop.f32.mrb[0].mxu0
      %v3723 = vadd.f32 0.0, %v3722
      %v3724 = vpop.f32.mrb[0].mxu0
      %v3725 = vadd.f32 0.0, %v3724
      %v3726 = vpop.f32.mrb[0].mxu0
      %v3727 = vadd.f32 0.0, %v3726
      %3728 = vmatprep.mubr.bf16.mxu0 0
      %3729 = vmatmul.mubr.bf16.gmra.mrb[0].mxu0 %v2921
      %v3730 = vpop.f32.mrb[0].mxu0
      %v3731 = vadd.f32 0.0, %v3730
      %v3732 = vpop.f32.mrb[0].mxu0
      %v3733 = vadd.f32 0.0, %v3732
      %v3734 = vpop.f32.mrb[0].mxu0
      %v3735 = vadd.f32 0.0, %v3734
      %v3736 = vpop.f32.mrb[0].mxu0
      %v3737 = vadd.f32 0.0, %v3736
      %3738 = vmatprep.mubr.bf16.mxu0 0
      %3739 = vmatmul.mubr.bf16.gmra.mrb[0].mxu0 %v2922
      %v3740 = vpop.f32.mrb[0].mxu0
      %v3741 = vadd.f32 0.0, %v3740
      %v3742 = vpop.f32.mrb[0].mxu0
      %v3743 = vadd.f32 0.0, %v3742
      %v3744 = vpop.f32.mrb[0].mxu0
      %v3745 = vadd.f32 0.0, %v3744
      %v3746 = vpop.f32.mrb[0].mxu0
      %v3747 = vadd.f32 0.0, %v3746
      %3748 = vmatprep.mubr.bf16.mxu0 0
      %3749 = vmatmul.mubr.bf16.gmra.mrb[0].mxu0 %v2923
      %v3750 = vpop.f32.mrb[0].mxu0
      %v3751 = vadd.f32 0.0, %v3750
      %v3752 = vpop.f32.mrb[0].mxu0
      %v3753 = vadd.f32 0.0, %v3752
      %v3754 = vpop.f32.mrb[0].mxu0
      %v3755 = vadd.f32 0.0, %v3754
      %v3756 = vpop.f32.mrb[0].mxu0
      %v3757 = vadd.f32 0.0, %v3756
      %3758 = vmatprep.mubr.bf16.mxu0 0
      %3759 = vmatmul.mubr.bf16.gmra.mrb[0].mxu0 %v2924
      %v3760 = vpop.f32.mrb[0].mxu0
      %v3761 = vadd.f32 0.0, %v3760
      %v3762 = vpop.f32.mrb[0].mxu0
      %v3763 = vadd.f32 0.0, %v3762
      %v3764 = vpop.f32.mrb[0].mxu0
      %v3765 = vadd.f32 0.0, %v3764
      %v3766 = vpop.f32.mrb[0].mxu0
      %v3767 = vadd.f32 0.0, %v3766
      %3768 = vmatprep.mubr.bf16.mxu0 0
      %3769 = vmatmul.mubr.bf16.gmra.mrb[0].mxu0 %v2925
      %v3770 = vpop.f32.mrb[0].mxu0
      %v3771 = vadd.f32 0.0, %v3770
      %v3772 = vpop.f32.mrb[0].mxu0
      %v3773 = vadd.f32 0.0, %v3772
      %v3774 = vpop.f32.mrb[0].mxu0
      %v3775 = vadd.f32 0.0, %v3774
      %v3776 = vpop.f32.mrb[0].mxu0
      %v3777 = vadd.f32 0.0, %v3776
      %3778 = vmatprep.mubr.bf16.mxu0 0
      %3779 = vmatmul.mubr.bf16.gmra.mrb[0].mxu0 %v2926
      %v3780 = vpop.f32.mrb[0].mxu0
      %v3781 = vadd.f32 0.0, %v3780
      %v3782 = vpop.f32.mrb[0].mxu0
      %v3783 = vadd.f32 0.0, %v3782
      %v3784 = vpop.f32.mrb[0].mxu0
      %v3785 = vadd.f32 0.0, %v3784
      %v3786 = vpop.f32.mrb[0].mxu0
      %v3787 = vadd.f32 0.0, %v3786
      %3788 = vmatprep.mubr.bf16.mxu0 0
      %3789 = vmatmul.mubr.bf16.gmra.mrb[0].mxu0 %v2927
      %v3790 = vpop.f32.mrb[0].mxu0
      %v3791 = vadd.f32 0.0, %v3790
      %v3792 = vpop.f32.mrb[0].mxu0
      %v3793 = vadd.f32 0.0, %v3792
      %v3794 = vpop.f32.mrb[0].mxu0
      %v3795 = vadd.f32 0.0, %v3794
      %v3796 = vpop.f32.mrb[0].mxu0
      %v3797 = vadd.f32 0.0, %v3796
      %3798 = vmatprep.mubr.bf16.mxu0 0
      %3799 = vmatmul.mubr.bf16.gmra.mrb[0].mxu0 %v2928
      %v3800 = vpop.f32.mrb[0].mxu0
      %v3801 = vadd.f32 0.0, %v3800
      %v3802 = vpop.f32.mrb[0].mxu0
      %v3803 = vadd.f32 0.0, %v3802
      %v3804 = vpop.f32.mrb[0].mxu0
      %v3805 = vadd.f32 0.0, %v3804
      %v3806 = vpop.f32.mrb[0].mxu0
      %v3807 = vadd.f32 0.0, %v3806
      %3808 = vmatprep.mubr.bf16.mxu0 0
      %3809 = vmatmul.mubr.bf16.gmra.mrb[0].mxu0 %v2929
      %v3810 = vpop.f32.mrb[0].mxu0
      %v3811 = vadd.f32 0.0, %v3810
      %v3812 = vpop.f32.mrb[0].mxu0
      %v3813 = vadd.f32 0.0, %v3812
      %v3814 = vpop.f32.mrb[0].mxu0
      %v3815 = vadd.f32 0.0, %v3814
      %v3816 = vpop.f32.mrb[0].mxu0
      %v3817 = vadd.f32 0.0, %v3816
      %3818 = vmatprep.mubr.bf16.mxu0 0
      %3819 = vmatmul.mubr.bf16.gmra.mrb[0].mxu0 %v2930
      %v3820 = vpop.f32.mrb[0].mxu0
      %v3821 = vadd.f32 0.0, %v3820
      %v3822 = vpop.f32.mrb[0].mxu0
      %v3823 = vadd.f32 0.0, %v3822
      %v3824 = vpop.f32.mrb[0].mxu0
      %v3825 = vadd.f32 0.0, %v3824
      %v3826 = vpop.f32.mrb[0].mxu0
      %v3827 = vadd.f32 0.0, %v3826
      %3828 = vdwg.mxu0
      %v3829 = vmul.f32 %v3158, %v3511
      %v3830 = vmul.f32 %v3160, %v3513
      %v3831 = vmul.f32 %v3162, %v3515
      %v3832 = vmul.f32 %v3164, %v3517
      %v3833 = vmul.f32 %v3168, %v3521
      %v3834 = vmul.f32 %v3170, %v3523
      %v3835 = vmul.f32 %v3172, %v3525
      %v3836 = vmul.f32 %v3174, %v3527
      %v3837 = vmul.f32 %v3178, %v3531
      %v3838 = vmul.f32 %v3180, %v3533
      %v3839 = vmul.f32 %v3182, %v3535
      %v3840 = vmul.f32 %v3184, %v3537
      %v3841 = vmul.f32 %v3188, %v3541
      %v3842 = vmul.f32 %v3190, %v3543
      %v3843 = vmul.f32 %v3192, %v3545
      %v3844 = vmul.f32 %v3194, %v3547
      %v3845 = vmul.f32 %v3198, %v3551
      %v3846 = vmul.f32 %v3200, %v3553
      %v3847 = vmul.f32 %v3202, %v3555
      %v3848 = vmul.f32 %v3204, %v3557
      %v3849 = vmul.f32 %v3208, %v3561
      %v3850 = vmul.f32 %v3210, %v3563
      %v3851 = vmul.f32 %v3212, %v3565
      %v3852 = vmul.f32 %v3214, %v3567
      %v3853 = vmul.f32 %v3218, %v3571
      %v3854 = vmul.f32 %v3220, %v3573
      %v3855 = vmul.f32 %v3222, %v3575
      %v3856 = vmul.f32 %v3224, %v3577
      %v3857 = vmul.f32 %v3228, %v3581
      %v3858 = vmul.f32 %v3230, %v3583
      %v3859 = vmul.f32 %v3232, %v3585
      %v3860 = vmul.f32 %v3234, %v3587
      %v3861 = vmul.f32 %v3238, %v3591
      %v3862 = vmul.f32 %v3240, %v3593
      %v3863 = vmul.f32 %v3242, %v3595
      %v3864 = vmul.f32 %v3244, %v3597
      %v3865 = vmul.f32 %v3248, %v3601
      %v3866 = vmul.f32 %v3250, %v3603
      %v3867 = vmul.f32 %v3252, %v3605
      %v3868 = vmul.f32 %v3254, %v3607
      %v3869 = vmul.f32 %v3258, %v3611
      %v3870 = vmul.f32 %v3260, %v3613
      %v3871 = vmul.f32 %v3262, %v3615
      %v3872 = vmul.f32 %v3264, %v3617
      %v3873 = vmul.f32 %v3268, %v3621
      %v3874 = vmul.f32 %v3270, %v3623
      %v3875 = vmul.f32 %v3272, %v3625
      %v3876 = vmul.f32 %v3274, %v3627
      %v3877 = vmul.f32 %v3278, %v3631
      %v3878 = vmul.f32 %v3280, %v3633
      %v3879 = vmul.f32 %v3282, %v3635
      %v3880 = vmul.f32 %v3284, %v3637
      %v3881 = vmul.f32 %v3288, %v3641
      %v3882 = vmul.f32 %v3290, %v3643
      %v3883 = vmul.f32 %v3292, %v3645
      %v3884 = vmul.f32 %v3294, %v3647
      %v3885 = vmul.f32 %v3298, %v3651
      %v3886 = vmul.f32 %v3300, %v3653
      %v3887 = vmul.f32 %v3302, %v3655
      %v3888 = vmul.f32 %v3304, %v3657
      %v3889 = vmul.f32 %v3308, %v3661
      %v3890 = vmul.f32 %v3310, %v3663
      %v3891 = vmul.f32 %v3312, %v3665
      %v3892 = vmul.f32 %v3314, %v3667
      %v3893 = vmul.f32 %v3318, %v3671
      %v3894 = vmul.f32 %v3320, %v3673
      %v3895 = vmul.f32 %v3322, %v3675
      %v3896 = vmul.f32 %v3324, %v3677
      %v3897 = vmul.f32 %v3328, %v3681
      %v3898 = vmul.f32 %v3330, %v3683
      %v3899 = vmul.f32 %v3332, %v3685
      %v3900 = vmul.f32 %v3334, %v3687
      %v3901 = vmul.f32 %v3338, %v3691
      %v3902 = vmul.f32 %v3340, %v3693
      %v3903 = vmul.f32 %v3342, %v3695
      %v3904 = vmul.f32 %v3344, %v3697
      %v3905 = vmul.f32 %v3348, %v3701
      %v3906 = vmul.f32 %v3350, %v3703
      %v3907 = vmul.f32 %v3352, %v3705
      %v3908 = vmul.f32 %v3354, %v3707
      %v3909 = vmul.f32 %v3358, %v3711
      %v3910 = vmul.f32 %v3360, %v3713
      %v3911 = vmul.f32 %v3362, %v3715
      %v3912 = vmul.f32 %v3364, %v3717
      %v3913 = vmul.f32 %v3368, %v3721
      %v3914 = vmul.f32 %v3370, %v3723
      %v3915 = vmul.f32 %v3372, %v3725
      %v3916 = vmul.f32 %v3374, %v3727
      %v3917 = vmul.f32 %v3378, %v3731
      %v3918 = vmul.f32 %v3380, %v3733
      %v3919 = vmul.f32 %v3382, %v3735
      %v3920 = vmul.f32 %v3384, %v3737
      %v3921 = vmul.f32 %v3388, %v3741
      %v3922 = vmul.f32 %v3390, %v3743
      %v3923 = vmul.f32 %v3392, %v3745
      %v3924 = vmul.f32 %v3394, %v3747
      %v3925 = vmul.f32 %v3398, %v3751
      %v3926 = vmul.f32 %v3400, %v3753
      %v3927 = vmul.f32 %v3402, %v3755
      %v3928 = vmul.f32 %v3404, %v3757
      %v3929 = vmul.f32 %v3408, %v3761
      %v3930 = vmul.f32 %v3410, %v3763
      %v3931 = vmul.f32 %v3412, %v3765
      %v3932 = vmul.f32 %v3414, %v3767
      %v3933 = vmul.f32 %v3418, %v3771
      %v3934 = vmul.f32 %v3420, %v3773
      %v3935 = vmul.f32 %v3422, %v3775
      %v3936 = vmul.f32 %v3424, %v3777
      %v3937 = vmul.f32 %v3428, %v3781
      %v3938 = vmul.f32 %v3430, %v3783
      %v3939 = vmul.f32 %v3432, %v3785
      %v3940 = vmul.f32 %v3434, %v3787
      %v3941 = vmul.f32 %v3438, %v3791
      %v3942 = vmul.f32 %v3440, %v3793
      %v3943 = vmul.f32 %v3442, %v3795
      %v3944 = vmul.f32 %v3444, %v3797
      %v3945 = vmul.f32 %v3448, %v3801
      %v3946 = vmul.f32 %v3450, %v3803
      %v3947 = vmul.f32 %v3452, %v3805
      %v3948 = vmul.f32 %v3454, %v3807
      %v3949 = vmul.f32 %v3458, %v3811
      %v3950 = vmul.f32 %v3460, %v3813
      %v3951 = vmul.f32 %v3462, %v3815
      %v3952 = vmul.f32 %v3464, %v3817
      %v3953 = vmul.f32 %v3468, %v3821
      %v3954 = vmul.f32 %v3470, %v3823
      %v3955 = vmul.f32 %v3472, %v3825
      %v3956 = vmul.f32 %v3474, %v3827
      %v3957 = vpack.c.bf16 %v3831, %v3829
      %v3958 = vpack.c.bf16 %v3832, %v3830
      %v3959 = vpack.c.bf16 %v3835, %v3833
      %v3960 = vpack.c.bf16 %v3836, %v3834
      %v3961 = vpack.c.bf16 %v3839, %v3837
      %v3962 = vpack.c.bf16 %v3840, %v3838
      %v3963 = vpack.c.bf16 %v3843, %v3841
      %v3964 = vpack.c.bf16 %v3844, %v3842
      %v3965 = vpack.c.bf16 %v3847, %v3845
      %v3966 = vpack.c.bf16 %v3848, %v3846
      %v3967 = vpack.c.bf16 %v3851, %v3849
      %v3968 = vpack.c.bf16 %v3852, %v3850
      %v3969 = vpack.c.bf16 %v3855, %v3853
      %v3970 = vpack.c.bf16 %v3856, %v3854
      %v3971 = vpack.c.bf16 %v3859, %v3857
      %v3972 = vpack.c.bf16 %v3860, %v3858
      %v3973 = vpack.c.bf16 %v3863, %v3861
      %v3974 = vpack.c.bf16 %v3864, %v3862
      %v3975 = vpack.c.bf16 %v3867, %v3865
      %v3976 = vpack.c.bf16 %v3868, %v3866
      %v3977 = vpack.c.bf16 %v3871, %v3869
      %v3978 = vpack.c.bf16 %v3872, %v3870
      %v3979 = vpack.c.bf16 %v3875, %v3873
      %v3980 = vpack.c.bf16 %v3876, %v3874
      %v3981 = vpack.c.bf16 %v3879, %v3877
      %v3982 = vpack.c.bf16 %v3880, %v3878
      %v3983 = vpack.c.bf16 %v3883, %v3881
      %v3984 = vpack.c.bf16 %v3884, %v3882
      %v3985 = vpack.c.bf16 %v3887, %v3885
      %v3986 = vpack.c.bf16 %v3888, %v3886
      %v3987 = vpack.c.bf16 %v3891, %v3889
      %v3988 = vpack.c.bf16 %v3892, %v3890
      %v3989 = vpack.c.bf16 %v3895, %v3893
      %v3990 = vpack.c.bf16 %v3896, %v3894
      %v3991 = vpack.c.bf16 %v3899, %v3897
      %v3992 = vpack.c.bf16 %v3900, %v3898
      %v3993 = vpack.c.bf16 %v3903, %v3901
      %v3994 = vpack.c.bf16 %v3904, %v3902
      %v3995 = vpack.c.bf16 %v3907, %v3905
      %v3996 = vpack.c.bf16 %v3908, %v3906
      %v3997 = vpack.c.bf16 %v3911, %v3909
      %v3998 = vpack.c.bf16 %v3912, %v3910
      %v3999 = vpack.c.bf16 %v3915, %v3913
      %v4000 = vpack.c.bf16 %v3916, %v3914
      %v4001 = vpack.c.bf16 %v3919, %v3917
      %v4002 = vpack.c.bf16 %v3920, %v3918
      %v4003 = vpack.c.bf16 %v3923, %v3921
      %v4004 = vpack.c.bf16 %v3924, %v3922
      %v4005 = vpack.c.bf16 %v3927, %v3925
      %v4006 = vpack.c.bf16 %v3928, %v3926
      %v4007 = vpack.c.bf16 %v3931, %v3929
      %v4008 = vpack.c.bf16 %v3932, %v3930
      %v4009 = vpack.c.bf16 %v3935, %v3933
      %v4010 = vpack.c.bf16 %v3936, %v3934
      %v4011 = vpack.c.bf16 %v3939, %v3937
      %v4012 = vpack.c.bf16 %v3940, %v3938
      %v4013 = vpack.c.bf16 %v3943, %v3941
      %v4014 = vpack.c.bf16 %v3944, %v3942
      %v4015 = vpack.c.bf16 %v3947, %v3945
      %v4016 = vpack.c.bf16 %v3948, %v3946
      %v4017 = vpack.c.bf16 %v3951, %v3949
      %v4018 = vpack.c.bf16 %v3952, %v3950
      %v4019 = vpack.c.bf16 %v3955, %v3953
      %v4020 = vpack.c.bf16 %v3956, %v3954
      %v4021 = vld [vmem:[%s6] sm:$0xf]
      %v4022 = vld [vmem:[%s6 + $0x4] sm:$0xf]
      %v4023 = vld [vmem:[%s6 + $0x8] sm:$0xf]
      %v4024 = vld [vmem:[%s6 + $0xc] sm:$0xf]
      %v4025 = vld [vmem:[%s6 + $0x10] sm:$0xf]
      %v4026 = vld [vmem:[%s6 + $0x14] sm:$0xf]
      %v4027 = vld [vmem:[%s6 + $0x18] sm:$0xf]
      %v4028 = vld [vmem:[%s6 + $0x1c] sm:$0xf]
      %v4029 = vld [vmem:[%s6 + $0x20] sm:$0xf]
      %v4030 = vld [vmem:[%s6 + $0x24] sm:$0xf]
      %v4031 = vld [vmem:[%s6 + $0x28] sm:$0xf]
      %v4032 = vld [vmem:[%s6 + $0x2c] sm:$0xf]
      %v4033 = vld [vmem:[%s6 + $0x30] sm:$0xf]
      %v4034 = vld [vmem:[%s6 + $0x34] sm:$0xf]
      %v4035 = vld [vmem:[%s6 + $0x38] sm:$0xf]
      %v4036 = vld [vmem:[%s6 + $0x3c] sm:$0xf]
      %v4037 = vld [vmem:[%s6 + $0x40] sm:$0xf]
      %v4038 = vld [vmem:[%s6 + $0x44] sm:$0xf]
      %v4039 = vld [vmem:[%s6 + $0x48] sm:$0xf]
      %v4040 = vld [vmem:[%s6 + $0x4c] sm:$0xf]
      %v4041 = vld [vmem:[%s6 + $0x50] sm:$0xf]
      %v4042 = vld [vmem:[%s6 + $0x54] sm:$0xf]
      %v4043 = vld [vmem:[%s6 + $0x58] sm:$0xf]
      %v4044 = vld [vmem:[%s6 + $0x5c] sm:$0xf]
      %v4045 = vld [vmem:[%s6 + $0x60] sm:$0xf]
      %v4046 = vld [vmem:[%s6 + $0x64] sm:$0xf]
      %v4047 = vld [vmem:[%s6 + $0x68] sm:$0xf]
      %v4048 = vld [vmem:[%s6 + $0x6c] sm:$0xf]
      %v4049 = vld [vmem:[%s6 + $0x70] sm:$0xf]
      %v4050 = vld [vmem:[%s6 + $0x74] sm:$0xf]
      %v4051 = vld [vmem:[%s6 + $0x78] sm:$0xf]
      %v4052 = vld [vmem:[%s6 + $0x7c] sm:$0xf]
      %v4053 = vld [vmem:[%s7] sm:$0x1]
      %v4055 = vlaneseq
      %v4056 = vshrl.u32 %v4055, 7
      %v4057 = vsub.s32 0, %v4056
      %v4058 = vrot.slane %v4053, %v4057
      %v4092 = vunpack.c.l.b16 %v4021
      %v4093 = vunpack.c.l.b16 %v4022
      %v4094 = vunpack.c.l.b16 %v4023
      %v4095 = vunpack.c.l.b16 %v4024
      %v4096 = vunpack.c.l.b16 %v4025
      %v4097 = vunpack.c.l.b16 %v4026
      %v4098 = vunpack.c.l.b16 %v4027
      %v4099 = vunpack.c.l.b16 %v4028
      %v4100 = vunpack.c.l.b16 %v4029
      %v4101 = vunpack.c.l.b16 %v4030
      %v4102 = vunpack.c.l.b16 %v4031
      %v4103 = vunpack.c.l.b16 %v4032
      %v4104 = vunpack.c.l.b16 %v4033
      %v4105 = vunpack.c.l.b16 %v4034
      %v4106 = vunpack.c.l.b16 %v4035
      %v4107 = vunpack.c.l.b16 %v4036
      %v4108 = vunpack.c.l.b16 %v4037
      %v4109 = vunpack.c.l.b16 %v4038
      %v4110 = vunpack.c.l.b16 %v4039
      %v4111 = vunpack.c.l.b16 %v4040
      %v4112 = vunpack.c.l.b16 %v4041
      %v4113 = vunpack.c.l.b16 %v4042
      %v4114 = vunpack.c.l.b16 %v4043
      %v4115 = vunpack.c.l.b16 %v4044
      %v4116 = vunpack.c.l.b16 %v4045
      %v4117 = vunpack.c.l.b16 %v4046
      %v4118 = vunpack.c.l.b16 %v4047
      %v4119 = vunpack.c.l.b16 %v4048
      %v4120 = vunpack.c.l.b16 %v4049
      %v4121 = vunpack.c.l.b16 %v4050
      %v4122 = vunpack.c.l.b16 %v4051
      %v4123 = vunpack.c.l.b16 %v4052
      %v4124 = vpack.c.b16 %v4093, %v4092
      %v4125 = vpack.c.b16 %v4095, %v4094
      %v4126 = vpack.c.b16 %v4097, %v4096
      %v4127 = vpack.c.b16 %v4099, %v4098
      %v4128 = vpack.c.b16 %v4101, %v4100
      %v4129 = vpack.c.b16 %v4103, %v4102
      %v4130 = vpack.c.b16 %v4105, %v4104
      %v4131 = vpack.c.b16 %v4107, %v4106
      %v4132 = vpack.c.b16 %v4109, %v4108
      %v4133 = vpack.c.b16 %v4111, %v4110
      %v4134 = vpack.c.b16 %v4113, %v4112
      %v4135 = vpack.c.b16 %v4115, %v4114
      %v4136 = vpack.c.b16 %v4117, %v4116
      %v4137 = vpack.c.b16 %v4119, %v4118
      %v4138 = vpack.c.b16 %v4121, %v4120
      %v4139 = vpack.c.b16 %v4123, %v4122
      %4156 = vmatprep.subr.bf16.mxu0 0
      %4157 = vmatpush1.bf16.msra.mxu0 %v4124
      %4158 = vmatprep.subr.bf16.mxu0 0
      %4159 = vmatpush1.bf16.msra.mxu0 %v4125
      %4160 = vmatprep.subr.bf16.mxu0 0
      %4161 = vmatpush1.bf16.msra.mxu0 %v4126
      %4162 = vmatprep.subr.bf16.mxu0 0
      %4163 = vmatpush1.bf16.msra.mxu0 %v4127
      %4164 = vmatprep.subr.bf16.mxu0 0
      %4165 = vmatpush1.bf16.msra.mxu0 %v4128
      %4166 = vmatprep.subr.bf16.mxu0 0
      %4167 = vmatpush1.bf16.msra.mxu0 %v4129
      %4168 = vmatprep.subr.bf16.mxu0 0
      %4169 = vmatpush1.bf16.msra.mxu0 %v4130
      %4170 = vmatprep.subr.bf16.mxu0 0
      %4171 = vmatpush1.bf16.msra.mxu0 %v4131
      %4172 = vmatprep.subr.bf16.mxu0 0
      %4173 = vmatpush1.bf16.msra.mxu0 %v4132
      %4174 = vmatprep.subr.bf16.mxu0 0
      %4175 = vmatpush1.bf16.msra.mxu0 %v4133
      %4176 = vmatprep.subr.bf16.mxu0 0
      %4177 = vmatpush1.bf16.msra.mxu0 %v4134
      %4178 = vmatprep.subr.bf16.mxu0 0
      %4179 = vmatpush1.bf16.msra.mxu0 %v4135
      %4180 = vmatprep.subr.bf16.mxu0 0
      %4181 = vmatpush1.bf16.msra.mxu0 %v4136
      %4182 = vmatprep.subr.bf16.mxu0 0
      %4183 = vmatpush1.bf16.msra.mxu0 %v4137
      %4184 = vmatprep.subr.bf16.mxu0 0
      %4185 = vmatpush1.bf16.msra.mxu0 %v4138
      %4186 = vmatprep.subr.bf16.mxu0 0
      %4187 = vmatpush1.bf16.msra.mxu0 %v4139
      %4188 = vmatprep.mubr.bf16.mxu0 %v3958
      %4189 = vmatmul.mubr.bf16.gmra.mrb[0].mxu0 %v3957
      %v4190 = vpop.f32.mrb[0].mxu0
      %v4191 = vadd.f32 %v4058, %v4190
      %v4192 = vpop.f32.mrb[0].mxu0
      %v4193 = vpop.f32.mrb[0].mxu0
      %v4194 = vadd.f32 %v4058, %v4193
      %v4195 = vpop.f32.mrb[0].mxu0
      %4196 = vmatprep.mubr.bf16.mxu0 %v3960
      %4197 = vmatmul.mubr.bf16.gmra.mrb[0].mxu0 %v3959
      %v4198 = vpop.f32.mrb[0].mxu0
      %v4199 = vadd.f32 %v4058, %v4198
      %v4200 = vpop.f32.mrb[0].mxu0
      %v4201 = vpop.f32.mrb[0].mxu0
      %v4202 = vadd.f32 %v4058, %v4201
      %v4203 = vpop.f32.mrb[0].mxu0
      %4204 = vmatprep.mubr.bf16.mxu0 %v3962
      %4205 = vmatmul.mubr.bf16.gmra.mrb[0].mxu0 %v3961
      %v4206 = vpop.f32.mrb[0].mxu0
      %v4207 = vadd.f32 %v4058, %v4206
      %v4208 = vpop.f32.mrb[0].mxu0
      %v4209 = vpop.f32.mrb[0].mxu0
      %v4210 = vadd.f32 %v4058, %v4209
      %v4211 = vpop.f32.mrb[0].mxu0
      %4212 = vmatprep.mubr.bf16.mxu0 %v3964
      %4213 = vmatmul.mubr.bf16.gmra.mrb[0].mxu0 %v3963
      %v4214 = vpop.f32.mrb[0].mxu0
      %v4215 = vadd.f32 %v4058, %v4214
      %v4216 = vpop.f32.mrb[0].mxu0
      %v4217 = vpop.f32.mrb[0].mxu0
      %v4218 = vadd.f32 %v4058, %v4217
      %v4219 = vpop.f32.mrb[0].mxu0
      %4220 = vmatprep.mubr.bf16.mxu0 %v3966
      %4221 = vmatmul.mubr.bf16.gmra.mrb[0].mxu0 %v3965
      %v4222 = vpop.f32.mrb[0].mxu0
      %v4223 = vadd.f32 %v4058, %v4222
      %v4224 = vpop.f32.mrb[0].mxu0
      %v4225 = vpop.f32.mrb[0].mxu0
      %v4226 = vadd.f32 %v4058, %v4225
      %v4227 = vpop.f32.mrb[0].mxu0
      %4228 = vmatprep.mubr.bf16.mxu0 %v3968
      %4229 = vmatmul.mubr.bf16.gmra.mrb[0].mxu0 %v3967
      %v4230 = vpop.f32.mrb[0].mxu0
      %v4231 = vadd.f32 %v4058, %v4230
      %v4232 = vpop.f32.mrb[0].mxu0
      %v4233 = vpop.f32.mrb[0].mxu0
      %v4234 = vadd.f32 %v4058, %v4233
      %v4235 = vpop.f32.mrb[0].mxu0
      %4236 = vmatprep.mubr.bf16.mxu0 %v3970
      %4237 = vmatmul.mubr.bf16.gmra.mrb[0].mxu0 %v3969
      %v4238 = vpop.f32.mrb[0].mxu0
      %v4239 = vadd.f32 %v4058, %v4238
      %v4240 = vpop.f32.mrb[0].mxu0
      %v4241 = vpop.f32.mrb[0].mxu0
      %v4242 = vadd.f32 %v4058, %v4241
      %v4243 = vpop.f32.mrb[0].mxu0
      %4244 = vmatprep.mubr.bf16.mxu0 %v3972
      %4245 = vmatmul.mubr.bf16.gmra.mrb[0].mxu0 %v3971
      %v4246 = vpop.f32.mrb[0].mxu0
      %v4247 = vadd.f32 %v4058, %v4246
      %v4248 = vpop.f32.mrb[0].mxu0
      %v4249 = vpop.f32.mrb[0].mxu0
      %v4250 = vadd.f32 %v4058, %v4249
      %v4251 = vpop.f32.mrb[0].mxu0
      %4252 = vmatprep.mubr.bf16.mxu0 %v3974
      %4253 = vmatmul.mubr.bf16.gmra.mrb[0].mxu0 %v3973
      %v4254 = vpop.f32.mrb[0].mxu0
      %v4255 = vadd.f32 %v4058, %v4254
      %v4256 = vpop.f32.mrb[0].mxu0
      %v4257 = vpop.f32.mrb[0].mxu0
      %v4258 = vadd.f32 %v4058, %v4257
      %v4259 = vpop.f32.mrb[0].mxu0
      %4260 = vmatprep.mubr.bf16.mxu0 %v3976
      %4261 = vmatmul.mubr.bf16.gmra.mrb[0].mxu0 %v3975
      %v4262 = vpop.f32.mrb[0].mxu0
      %v4263 = vadd.f32 %v4058, %v4262
      %v4264 = vpop.f32.mrb[0].mxu0
      %v4265 = vpop.f32.mrb[0].mxu0
      %v4266 = vadd.f32 %v4058, %v4265
      %v4267 = vpop.f32.mrb[0].mxu0
      %4268 = vmatprep.mubr.bf16.mxu0 %v3978
      %4269 = vmatmul.mubr.bf16.gmra.mrb[0].mxu0 %v3977
      %v4270 = vpop.f32.mrb[0].mxu0
      %v4271 = vadd.f32 %v4058, %v4270
      %v4272 = vpop.f32.mrb[0].mxu0
      %v4273 = vpop.f32.mrb[0].mxu0
      %v4274 = vadd.f32 %v4058, %v4273
      %v4275 = vpop.f32.mrb[0].mxu0
      %4276 = vmatprep.mubr.bf16.mxu0 %v3980
      %4277 = vmatmul.mubr.bf16.gmra.mrb[0].mxu0 %v3979
      %v4278 = vpop.f32.mrb[0].mxu0
      %v4279 = vadd.f32 %v4058, %v4278
      %v4280 = vpop.f32.mrb[0].mxu0
      %v4281 = vpop.f32.mrb[0].mxu0
      %v4282 = vadd.f32 %v4058, %v4281
      %v4283 = vpop.f32.mrb[0].mxu0
      %4284 = vmatprep.mubr.bf16.mxu0 %v3982
      %4285 = vmatmul.mubr.bf16.gmra.mrb[0].mxu0 %v3981
      %v4286 = vpop.f32.mrb[0].mxu0
      %v4287 = vadd.f32 %v4058, %v4286
      %v4288 = vpop.f32.mrb[0].mxu0
      %v4289 = vpop.f32.mrb[0].mxu0
      %v4290 = vadd.f32 %v4058, %v4289
      %v4291 = vpop.f32.mrb[0].mxu0
      %4292 = vmatprep.mubr.bf16.mxu0 %v3984
      %4293 = vmatmul.mubr.bf16.gmra.mrb[0].mxu0 %v3983
      %v4294 = vpop.f32.mrb[0].mxu0
      %v4295 = vadd.f32 %v4058, %v4294
      %v4296 = vpop.f32.mrb[0].mxu0
      %v4297 = vpop.f32.mrb[0].mxu0
      %v4298 = vadd.f32 %v4058, %v4297
      %v4299 = vpop.f32.mrb[0].mxu0
      %4300 = vmatprep.mubr.bf16.mxu0 %v3986
      %4301 = vmatmul.mubr.bf16.gmra.mrb[0].mxu0 %v3985
      %v4302 = vpop.f32.mrb[0].mxu0
      %v4303 = vadd.f32 %v4058, %v4302
      %v4304 = vpop.f32.mrb[0].mxu0
      %v4305 = vpop.f32.mrb[0].mxu0
      %v4306 = vadd.f32 %v4058, %v4305
      %v4307 = vpop.f32.mrb[0].mxu0
      %4308 = vmatprep.mubr.bf16.mxu0 %v3988
      %4309 = vmatmul.mubr.bf16.gmra.mrb[0].mxu0 %v3987
      %v4310 = vpop.f32.mrb[0].mxu0
      %v4311 = vadd.f32 %v4058, %v4310
      %v4312 = vpop.f32.mrb[0].mxu0
      %v4313 = vpop.f32.mrb[0].mxu0
      %v4314 = vadd.f32 %v4058, %v4313
      %v4315 = vpop.f32.mrb[0].mxu0
      %4316 = vmatprep.mubr.bf16.mxu0 %v3990
      %4317 = vmatmul.mubr.bf16.gmra.mrb[0].mxu0 %v3989
      %v4318 = vpop.f32.mrb[0].mxu0
      %v4319 = vadd.f32 %v4058, %v4318
      %v4320 = vpop.f32.mrb[0].mxu0
      %v4321 = vpop.f32.mrb[0].mxu0
      %v4322 = vadd.f32 %v4058, %v4321
      %v4323 = vpop.f32.mrb[0].mxu0
      %4324 = vmatprep.mubr.bf16.mxu0 %v3992
      %4325 = vmatmul.mubr.bf16.gmra.mrb[0].mxu0 %v3991
      %v4326 = vpop.f32.mrb[0].mxu0
      %v4327 = vadd.f32 %v4058, %v4326
      %v4328 = vpop.f32.mrb[0].mxu0
      %v4329 = vpop.f32.mrb[0].mxu0
      %v4330 = vadd.f32 %v4058, %v4329
      %v4331 = vpop.f32.mrb[0].mxu0
      %4332 = vmatprep.mubr.bf16.mxu0 %v3994
      %4333 = vmatmul.mubr.bf16.gmra.mrb[0].mxu0 %v3993
      %v4334 = vpop.f32.mrb[0].mxu0
      %v4335 = vadd.f32 %v4058, %v4334
      %v4336 = vpop.f32.mrb[0].mxu0
      %v4337 = vpop.f32.mrb[0].mxu0
      %v4338 = vadd.f32 %v4058, %v4337
      %v4339 = vpop.f32.mrb[0].mxu0
      %4340 = vmatprep.mubr.bf16.mxu0 %v3996
      %4341 = vmatmul.mubr.bf16.gmra.mrb[0].mxu0 %v3995
      %v4342 = vpop.f32.mrb[0].mxu0
      %v4343 = vadd.f32 %v4058, %v4342
      %v4344 = vpop.f32.mrb[0].mxu0
      %v4345 = vpop.f32.mrb[0].mxu0
      %v4346 = vadd.f32 %v4058, %v4345
      %v4347 = vpop.f32.mrb[0].mxu0
      %4348 = vmatprep.mubr.bf16.mxu0 %v3998
      %4349 = vmatmul.mubr.bf16.gmra.mrb[0].mxu0 %v3997
      %v4350 = vpop.f32.mrb[0].mxu0
      %v4351 = vadd.f32 %v4058, %v4350
      %v4352 = vpop.f32.mrb[0].mxu0
      %v4353 = vpop.f32.mrb[0].mxu0
      %v4354 = vadd.f32 %v4058, %v4353
      %v4355 = vpop.f32.mrb[0].mxu0
      %4356 = vmatprep.mubr.bf16.mxu0 %v4000
      %4357 = vmatmul.mubr.bf16.gmra.mrb[0].mxu0 %v3999
      %v4358 = vpop.f32.mrb[0].mxu0
      %v4359 = vadd.f32 %v4058, %v4358
      %v4360 = vpop.f32.mrb[0].mxu0
      %v4361 = vpop.f32.mrb[0].mxu0
      %v4362 = vadd.f32 %v4058, %v4361
      %v4363 = vpop.f32.mrb[0].mxu0
      %4364 = vmatprep.mubr.bf16.mxu0 %v4002
      %4365 = vmatmul.mubr.bf16.gmra.mrb[0].mxu0 %v4001
      %v4366 = vpop.f32.mrb[0].mxu0
      %v4367 = vadd.f32 %v4058, %v4366
      %v4368 = vpop.f32.mrb[0].mxu0
      %v4369 = vpop.f32.mrb[0].mxu0
      %v4370 = vadd.f32 %v4058, %v4369
      %v4371 = vpop.f32.mrb[0].mxu0
      %4372 = vmatprep.mubr.bf16.mxu0 %v4004
      %4373 = vmatmul.mubr.bf16.gmra.mrb[0].mxu0 %v4003
      %v4374 = vpop.f32.mrb[0].mxu0
      %v4375 = vadd.f32 %v4058, %v4374
      %v4376 = vpop.f32.mrb[0].mxu0
      %v4377 = vpop.f32.mrb[0].mxu0
      %v4378 = vadd.f32 %v4058, %v4377
      %v4379 = vpop.f32.mrb[0].mxu0
      %4380 = vmatprep.mubr.bf16.mxu0 %v4006
      %4381 = vmatmul.mubr.bf16.gmra.mrb[0].mxu0 %v4005
      %v4382 = vpop.f32.mrb[0].mxu0
      %v4383 = vadd.f32 %v4058, %v4382
      %v4384 = vpop.f32.mrb[0].mxu0
      %v4385 = vpop.f32.mrb[0].mxu0
      %v4386 = vadd.f32 %v4058, %v4385
      %v4387 = vpop.f32.mrb[0].mxu0
      %4388 = vmatprep.mubr.bf16.mxu0 %v4008
      %4389 = vmatmul.mubr.bf16.gmra.mrb[0].mxu0 %v4007
      %v4390 = vpop.f32.mrb[0].mxu0
      %v4391 = vadd.f32 %v4058, %v4390
      %v4392 = vpop.f32.mrb[0].mxu0
      %v4393 = vpop.f32.mrb[0].mxu0
      %v4394 = vadd.f32 %v4058, %v4393
      %v4395 = vpop.f32.mrb[0].mxu0
      %4396 = vmatprep.mubr.bf16.mxu0 %v4010
      %4397 = vmatmul.mubr.bf16.gmra.mrb[0].mxu0 %v4009
      %v4398 = vpop.f32.mrb[0].mxu0
      %v4399 = vadd.f32 %v4058, %v4398
      %v4400 = vpop.f32.mrb[0].mxu0
      %v4401 = vpop.f32.mrb[0].mxu0
      %v4402 = vadd.f32 %v4058, %v4401
      %v4403 = vpop.f32.mrb[0].mxu0
      %4404 = vmatprep.mubr.bf16.mxu0 %v4012
      %4405 = vmatmul.mubr.bf16.gmra.mrb[0].mxu0 %v4011
      %v4406 = vpop.f32.mrb[0].mxu0
      %v4407 = vadd.f32 %v4058, %v4406
      %v4408 = vpop.f32.mrb[0].mxu0
      %v4409 = vpop.f32.mrb[0].mxu0
      %v4410 = vadd.f32 %v4058, %v4409
      %v4411 = vpop.f32.mrb[0].mxu0
      %4412 = vmatprep.mubr.bf16.mxu0 %v4014
      %4413 = vmatmul.mubr.bf16.gmra.mrb[0].mxu0 %v4013
      %v4414 = vpop.f32.mrb[0].mxu0
      %v4415 = vadd.f32 %v4058, %v4414
      %v4416 = vpop.f32.mrb[0].mxu0
      %v4417 = vpop.f32.mrb[0].mxu0
      %v4418 = vadd.f32 %v4058, %v4417
      %v4419 = vpop.f32.mrb[0].mxu0
      %4420 = vmatprep.mubr.bf16.mxu0 %v4016
      %4421 = vmatmul.mubr.bf16.gmra.mrb[0].mxu0 %v4015
      %v4422 = vpop.f32.mrb[0].mxu0
      %v4423 = vadd.f32 %v4058, %v4422
      %v4424 = vpop.f32.mrb[0].mxu0
      %v4425 = vpop.f32.mrb[0].mxu0
      %v4426 = vadd.f32 %v4058, %v4425
      %v4427 = vpop.f32.mrb[0].mxu0
      %4428 = vmatprep.mubr.bf16.mxu0 %v4018
      %4429 = vmatmul.mubr.bf16.gmra.mrb[0].mxu0 %v4017
      %v4430 = vpop.f32.mrb[0].mxu0
      %v4431 = vadd.f32 %v4058, %v4430
      %v4432 = vpop.f32.mrb[0].mxu0
      %v4433 = vpop.f32.mrb[0].mxu0
      %v4434 = vadd.f32 %v4058, %v4433
      %v4435 = vpop.f32.mrb[0].mxu0
      %4436 = vmatprep.mubr.bf16.mxu0 %v4020
      %4437 = vmatmul.mubr.bf16.gmra.mrb[0].mxu0 %v4019
      %v4438 = vpop.f32.mrb[0].mxu0
      %v4439 = vadd.f32 %v4058, %v4438
      %v4440 = vpop.f32.mrb[0].mxu0
      %v4441 = vpop.f32.mrb[0].mxu0
      %v4442 = vadd.f32 %v4058, %v4441
      %v4443 = vpop.f32.mrb[0].mxu0
      %4444 = vdwg.mxu0
      %v4445 = vmax.f32 %v4191, 0.0
      %v4446 = vmax.f32 %v4194, 0.0
      %v4447 = vmax.f32 %v4199, 0.0
      %v4448 = vmax.f32 %v4202, 0.0
      %v4449 = vmax.f32 %v4207, 0.0
      %v4450 = vmax.f32 %v4210, 0.0
      %v4451 = vmax.f32 %v4215, 0.0
      %v4452 = vmax.f32 %v4218, 0.0
      %v4453 = vmax.f32 %v4223, 0.0
      %v4454 = vmax.f32 %v4226, 0.0
      %v4455 = vmax.f32 %v4231, 0.0
      %v4456 = vmax.f32 %v4234, 0.0
      %v4457 = vmax.f32 %v4239, 0.0
      %v4458 = vmax.f32 %v4242, 0.0
      %v4459 = vmax.f32 %v4247, 0.0
      %v4460 = vmax.f32 %v4250, 0.0
      %v4461 = vmax.f32 %v4255, 0.0
      %v4462 = vmax.f32 %v4258, 0.0
      %v4463 = vmax.f32 %v4263, 0.0
      %v4464 = vmax.f32 %v4266, 0.0
      %v4465 = vmax.f32 %v4271, 0.0
      %v4466 = vmax.f32 %v4274, 0.0
      %v4467 = vmax.f32 %v4279, 0.0
      %v4468 = vmax.f32 %v4282, 0.0
      %v4469 = vmax.f32 %v4287, 0.0
      %v4470 = vmax.f32 %v4290, 0.0
      %v4471 = vmax.f32 %v4295, 0.0
      %v4472 = vmax.f32 %v4298, 0.0
      %v4473 = vmax.f32 %v4303, 0.0
      %v4474 = vmax.f32 %v4306, 0.0
      %v4475 = vmax.f32 %v4311, 0.0
      %v4476 = vmax.f32 %v4314, 0.0
      %v4477 = vmax.f32 %v4319, 0.0
      %v4478 = vmax.f32 %v4322, 0.0
      %v4479 = vmax.f32 %v4327, 0.0
      %v4480 = vmax.f32 %v4330, 0.0
      %v4481 = vmax.f32 %v4335, 0.0
      %v4482 = vmax.f32 %v4338, 0.0
      %v4483 = vmax.f32 %v4343, 0.0
      %v4484 = vmax.f32 %v4346, 0.0
      %v4485 = vmax.f32 %v4351, 0.0
      %v4486 = vmax.f32 %v4354, 0.0
      %v4487 = vmax.f32 %v4359, 0.0
      %v4488 = vmax.f32 %v4362, 0.0
      %v4489 = vmax.f32 %v4367, 0.0
      %v4490 = vmax.f32 %v4370, 0.0
      %v4491 = vmax.f32 %v4375, 0.0
      %v4492 = vmax.f32 %v4378, 0.0
      %v4493 = vmax.f32 %v4383, 0.0
      %v4494 = vmax.f32 %v4386, 0.0
      %v4495 = vmax.f32 %v4391, 0.0
      %v4496 = vmax.f32 %v4394, 0.0
      %v4497 = vmax.f32 %v4399, 0.0
      %v4498 = vmax.f32 %v4402, 0.0
      %v4499 = vmax.f32 %v4407, 0.0
      %v4500 = vmax.f32 %v4410, 0.0
      %v4501 = vmax.f32 %v4415, 0.0
      %v4502 = vmax.f32 %v4418, 0.0
      %v4503 = vmax.f32 %v4423, 0.0
      %v4504 = vmax.f32 %v4426, 0.0
      %v4505 = vmax.f32 %v4431, 0.0
      %v4506 = vmax.f32 %v4434, 0.0
      %v4507 = vmax.f32 %v4439, 0.0
      %v4508 = vmax.f32 %v4442, 0.0
      %v4509 = vpack.c.bf16 %v4446, %v4445
      %v4510 = vpack.c.bf16 %v4448, %v4447
      %v4511 = vpack.c.bf16 %v4450, %v4449
      %v4512 = vpack.c.bf16 %v4452, %v4451
      %v4513 = vpack.c.bf16 %v4454, %v4453
      %v4514 = vpack.c.bf16 %v4456, %v4455
      %v4515 = vpack.c.bf16 %v4458, %v4457
      %v4516 = vpack.c.bf16 %v4460, %v4459
      %v4517 = vpack.c.bf16 %v4462, %v4461
      %v4518 = vpack.c.bf16 %v4464, %v4463
      %v4519 = vpack.c.bf16 %v4466, %v4465
      %v4520 = vpack.c.bf16 %v4468, %v4467
      %v4521 = vpack.c.bf16 %v4470, %v4469
      %v4522 = vpack.c.bf16 %v4472, %v4471
      %v4523 = vpack.c.bf16 %v4474, %v4473
      %v4524 = vpack.c.bf16 %v4476, %v4475
      %v4525 = vpack.c.bf16 %v4478, %v4477
      %v4526 = vpack.c.bf16 %v4480, %v4479
      %v4527 = vpack.c.bf16 %v4482, %v4481
      %v4528 = vpack.c.bf16 %v4484, %v4483
      %v4529 = vpack.c.bf16 %v4486, %v4485
      %v4530 = vpack.c.bf16 %v4488, %v4487
      %v4531 = vpack.c.bf16 %v4490, %v4489
      %v4532 = vpack.c.bf16 %v4492, %v4491
      %v4533 = vpack.c.bf16 %v4494, %v4493
      %v4534 = vpack.c.bf16 %v4496, %v4495
      %v4535 = vpack.c.bf16 %v4498, %v4497
      %v4536 = vpack.c.bf16 %v4500, %v4499
      %v4537 = vpack.c.bf16 %v4502, %v4501
      %v4538 = vpack.c.bf16 %v4504, %v4503
      %v4539 = vpack.c.bf16 %v4506, %v4505
      %v4540 = vpack.c.bf16 %v4508, %v4507
      %v4541 = vld [vmem:[%s8] sm:$0xf]
      %v4542 = vld [vmem:[%s8 + $0x4] sm:$0xf]
      %v4543 = vld [vmem:[%s8 + $0x8] sm:$0xf]
      %v4544 = vld [vmem:[%s8 + $0xc] sm:$0xf]
      %v4545 = vld [vmem:[%s8 + $0x10] sm:$0xf]
      %v4546 = vld [vmem:[%s8 + $0x14] sm:$0xf]
      %v4547 = vld [vmem:[%s8 + $0x18] sm:$0xf]
      %v4548 = vld [vmem:[%s8 + $0x1c] sm:$0xf]
      %v4549 = vld [vmem:[%s9] sm:$0x1]
      %v4551 = vlaneseq
      %v4552 = vshrl.u32 %v4551, 7
      %v4553 = vsub.s32 0, %v4552
      %v4554 = vrot.slane %v4549, %v4553
      %v4564 = vunpack.c.l.b16 %v4541
      %v4565 = vunpack.c.l.b16 %v4542
      %v4566 = vunpack.c.l.b16 %v4543
      %v4567 = vunpack.c.l.b16 %v4544
      %v4568 = vunpack.c.l.b16 %v4545
      %v4569 = vunpack.c.l.b16 %v4546
      %v4570 = vunpack.c.l.b16 %v4547
      %v4571 = vunpack.c.l.b16 %v4548
      %v4572 = vpack.c.b16 %v4565, %v4564
      %v4573 = vpack.c.b16 %v4567, %v4566
      %v4574 = vpack.c.b16 %v4569, %v4568
      %v4575 = vpack.c.b16 %v4571, %v4570
      %v4581 = vsel %vm2673, %v4509, 0
      %v4584 = vsel %vm2673, %v4510, 0
      %v4587 = vsel %vm2673, %v4511, 0
      %v4590 = vsel %vm2673, %v4512, 0
      %v4593 = vsel %vm2673, %v4513, 0
      %v4596 = vsel %vm2673, %v4514, 0
      %v4599 = vsel %vm2673, %v4515, 0
      %v4602 = vsel %vm2673, %v4516, 0
      %v4605 = vsel %vm2673, %v4517, 0
      %v4608 = vsel %vm2673, %v4518, 0
      %v4611 = vsel %vm2673, %v4519, 0
      %v4614 = vsel %vm2673, %v4520, 0
      %v4617 = vsel %vm2673, %v4521, 0
      %v4620 = vsel %vm2673, %v4522, 0
      %v4623 = vsel %vm2673, %v4523, 0
      %v4626 = vsel %vm2673, %v4524, 0
      %v4629 = vsel %vm2673, %v4525, 0
      %v4632 = vsel %vm2673, %v4526, 0
      %v4635 = vsel %vm2673, %v4527, 0
      %v4638 = vsel %vm2673, %v4528, 0
      %v4641 = vsel %vm2673, %v4529, 0
      %v4644 = vsel %vm2673, %v4530, 0
      %v4647 = vsel %vm2673, %v4531, 0
      %v4650 = vsel %vm2673, %v4532, 0
      %v4653 = vsel %vm2673, %v4533, 0
      %v4656 = vsel %vm2673, %v4534, 0
      %v4659 = vsel %vm2673, %v4535, 0
      %v4662 = vsel %vm2673, %v4536, 0
      %v4665 = vsel %vm2673, %v4537, 0
      %v4668 = vsel %vm2673, %v4538, 0
      %v4671 = vsel %vm2673, %v4539, 0
      %v4674 = vsel %vm2673, %v4540, 0
      %4676 = vmatprep.subr.bf16.mxu0 0
      %4677 = vmatpush1.bf16.msra.mxu0 %v4572
      %4678 = vmatprep.subr.bf16.mxu0 0
      %4679 = vmatpush1.bf16.msra.mxu0 %v4573
      %4680 = vmatprep.subr.bf16.mxu0 0
      %4681 = vmatpush1.bf16.msra.mxu0 %v4574
      %4682 = vmatprep.subr.bf16.mxu0 0
      %4683 = vmatpush1.bf16.msra.mxu0 %v4575
      %4684 = vmatprep.subr.bf16.mxu0 0
      %4685 = vmatpush1.bf16.msra.mxu0 0
      %4686 = vmatprep.subr.bf16.mxu0 0
      %4687 = vmatpush1.bf16.msra.mxu0 0
      %4688 = vmatprep.subr.bf16.mxu0 0
      %4689 = vmatpush1.bf16.msra.mxu0 0
      %4690 = vmatprep.subr.bf16.mxu0 0
      %4691 = vmatpush1.bf16.msra.mxu0 0
      %4692 = vmatprep.subr.bf16.mxu0 0
      %4693 = vmatpush1.bf16.msra.mxu0 0
      %4694 = vmatprep.subr.bf16.mxu0 0
      %4695 = vmatpush1.bf16.msra.mxu0 0
      %4696 = vmatprep.subr.bf16.mxu0 0
      %4697 = vmatpush1.bf16.msra.mxu0 0
      %4698 = vmatprep.subr.bf16.mxu0 0
      %4699 = vmatpush1.bf16.msra.mxu0 0
      %4700 = vmatprep.subr.bf16.mxu0 0
      %4701 = vmatpush1.bf16.msra.mxu0 0
      %4702 = vmatprep.subr.bf16.mxu0 0
      %4703 = vmatpush1.bf16.msra.mxu0 0
      %4704 = vmatprep.subr.bf16.mxu0 0
      %4705 = vmatpush1.bf16.msra.mxu0 0
      %4706 = vmatprep.subr.bf16.mxu0 0
      %4707 = vmatpush1.bf16.msra.mxu0 0
      %4708 = vmatprep.mubr.bf16.mxu0 0
      %4709 = vmatmul.mubr.bf16.gmra.mrb[0].mxu0 %v4581
      %v4710 = vpop.f32.mrb[0].mxu0
      %v4711 = vadd.f32 %v4554, %v4710
      %v4712 = vpop.f32.mrb[0].mxu0
      %v4713 = vpop.f32.mrb[0].mxu0
      %v4714 = vadd.f32 %v4554, %v4713
      %v4715 = vpop.f32.mrb[0].mxu0
      %4716 = vmatprep.mubr.bf16.mxu0 0
      %4717 = vmatmul.mubr.bf16.gmra.mrb[0].mxu0 %v4584
      %v4718 = vpop.f32.mrb[0].mxu0
      %v4719 = vadd.f32 %v4554, %v4718
      %v4720 = vpop.f32.mrb[0].mxu0
      %v4721 = vpop.f32.mrb[0].mxu0
      %v4722 = vadd.f32 %v4554, %v4721
      %v4723 = vpop.f32.mrb[0].mxu0
      %4724 = vmatprep.mubr.bf16.mxu0 0
      %4725 = vmatmul.mubr.bf16.gmra.mrb[0].mxu0 %v4587
      %v4726 = vpop.f32.mrb[0].mxu0
      %v4727 = vadd.f32 %v4554, %v4726
      %v4728 = vpop.f32.mrb[0].mxu0
      %v4729 = vpop.f32.mrb[0].mxu0
      %v4730 = vadd.f32 %v4554, %v4729
      %v4731 = vpop.f32.mrb[0].mxu0
      %4732 = vmatprep.mubr.bf16.mxu0 0
      %4733 = vmatmul.mubr.bf16.gmra.mrb[0].mxu0 %v4590
      %v4734 = vpop.f32.mrb[0].mxu0
      %v4735 = vadd.f32 %v4554, %v4734
      %v4736 = vpop.f32.mrb[0].mxu0
      %v4737 = vpop.f32.mrb[0].mxu0
      %v4738 = vadd.f32 %v4554, %v4737
      %v4739 = vpop.f32.mrb[0].mxu0
      %4740 = vmatprep.mubr.bf16.mxu0 0
      %4741 = vmatmul.mubr.bf16.gmra.mrb[0].mxu0 %v4593
      %v4742 = vpop.f32.mrb[0].mxu0
      %v4743 = vadd.f32 %v4554, %v4742
      %v4744 = vpop.f32.mrb[0].mxu0
      %v4745 = vpop.f32.mrb[0].mxu0
      %v4746 = vadd.f32 %v4554, %v4745
      %v4747 = vpop.f32.mrb[0].mxu0
      %4748 = vmatprep.mubr.bf16.mxu0 0
      %4749 = vmatmul.mubr.bf16.gmra.mrb[0].mxu0 %v4596
      %v4750 = vpop.f32.mrb[0].mxu0
      %v4751 = vadd.f32 %v4554, %v4750
      %v4752 = vpop.f32.mrb[0].mxu0
      %v4753 = vpop.f32.mrb[0].mxu0
      %v4754 = vadd.f32 %v4554, %v4753
      %v4755 = vpop.f32.mrb[0].mxu0
      %4756 = vmatprep.mubr.bf16.mxu0 0
      %4757 = vmatmul.mubr.bf16.gmra.mrb[0].mxu0 %v4599
      %v4758 = vpop.f32.mrb[0].mxu0
      %v4759 = vadd.f32 %v4554, %v4758
      %v4760 = vpop.f32.mrb[0].mxu0
      %v4761 = vpop.f32.mrb[0].mxu0
      %v4762 = vadd.f32 %v4554, %v4761
      %v4763 = vpop.f32.mrb[0].mxu0
      %4764 = vmatprep.mubr.bf16.mxu0 0
      %4765 = vmatmul.mubr.bf16.gmra.mrb[0].mxu0 %v4602
      %v4766 = vpop.f32.mrb[0].mxu0
      %v4767 = vadd.f32 %v4554, %v4766
      %v4768 = vpop.f32.mrb[0].mxu0
      %v4769 = vpop.f32.mrb[0].mxu0
      %v4770 = vadd.f32 %v4554, %v4769
      %v4771 = vpop.f32.mrb[0].mxu0
      %4772 = vmatprep.mubr.bf16.mxu0 0
      %4773 = vmatmul.mubr.bf16.gmra.mrb[0].mxu0 %v4605
      %v4774 = vpop.f32.mrb[0].mxu0
      %v4775 = vadd.f32 %v4554, %v4774
      %v4776 = vpop.f32.mrb[0].mxu0
      %v4777 = vpop.f32.mrb[0].mxu0
      %v4778 = vadd.f32 %v4554, %v4777
      %v4779 = vpop.f32.mrb[0].mxu0
      %4780 = vmatprep.mubr.bf16.mxu0 0
      %4781 = vmatmul.mubr.bf16.gmra.mrb[0].mxu0 %v4608
      %v4782 = vpop.f32.mrb[0].mxu0
      %v4783 = vadd.f32 %v4554, %v4782
      %v4784 = vpop.f32.mrb[0].mxu0
      %v4785 = vpop.f32.mrb[0].mxu0
      %v4786 = vadd.f32 %v4554, %v4785
      %v4787 = vpop.f32.mrb[0].mxu0
      %4788 = vmatprep.mubr.bf16.mxu0 0
      %4789 = vmatmul.mubr.bf16.gmra.mrb[0].mxu0 %v4611
      %v4790 = vpop.f32.mrb[0].mxu0
      %v4791 = vadd.f32 %v4554, %v4790
      %v4792 = vpop.f32.mrb[0].mxu0
      %v4793 = vpop.f32.mrb[0].mxu0
      %v4794 = vadd.f32 %v4554, %v4793
      %v4795 = vpop.f32.mrb[0].mxu0
      %4796 = vmatprep.mubr.bf16.mxu0 0
      %4797 = vmatmul.mubr.bf16.gmra.mrb[0].mxu0 %v4614
      %v4798 = vpop.f32.mrb[0].mxu0
      %v4799 = vadd.f32 %v4554, %v4798
      %v4800 = vpop.f32.mrb[0].mxu0
      %v4801 = vpop.f32.mrb[0].mxu0
      %v4802 = vadd.f32 %v4554, %v4801
      %v4803 = vpop.f32.mrb[0].mxu0
      %4804 = vmatprep.mubr.bf16.mxu0 0
      %4805 = vmatmul.mubr.bf16.gmra.mrb[0].mxu0 %v4617
      %v4806 = vpop.f32.mrb[0].mxu0
      %v4807 = vadd.f32 %v4554, %v4806
      %v4808 = vpop.f32.mrb[0].mxu0
      %v4809 = vpop.f32.mrb[0].mxu0
      %v4810 = vadd.f32 %v4554, %v4809
      %v4811 = vpop.f32.mrb[0].mxu0
      %4812 = vmatprep.mubr.bf16.mxu0 0
      %4813 = vmatmul.mubr.bf16.gmra.mrb[0].mxu0 %v4620
      %v4814 = vpop.f32.mrb[0].mxu0
      %v4815 = vadd.f32 %v4554, %v4814
      %v4816 = vpop.f32.mrb[0].mxu0
      %v4817 = vpop.f32.mrb[0].mxu0
      %v4818 = vadd.f32 %v4554, %v4817
      %v4819 = vpop.f32.mrb[0].mxu0
      %4820 = vmatprep.mubr.bf16.mxu0 0
      %4821 = vmatmul.mubr.bf16.gmra.mrb[0].mxu0 %v4623
      %v4822 = vpop.f32.mrb[0].mxu0
      %v4823 = vadd.f32 %v4554, %v4822
      %v4824 = vpop.f32.mrb[0].mxu0
      %v4825 = vpop.f32.mrb[0].mxu0
      %v4826 = vadd.f32 %v4554, %v4825
      %v4827 = vpop.f32.mrb[0].mxu0
      %4828 = vmatprep.mubr.bf16.mxu0 0
      %4829 = vmatmul.mubr.bf16.gmra.mrb[0].mxu0 %v4626
      %v4830 = vpop.f32.mrb[0].mxu0
      %v4831 = vadd.f32 %v4554, %v4830
      %v4832 = vpop.f32.mrb[0].mxu0
      %v4833 = vpop.f32.mrb[0].mxu0
      %v4834 = vadd.f32 %v4554, %v4833
      %v4835 = vpop.f32.mrb[0].mxu0
      %4836 = vmatprep.mubr.bf16.mxu0 0
      %4837 = vmatmul.mubr.bf16.gmra.mrb[0].mxu0 %v4629
      %v4838 = vpop.f32.mrb[0].mxu0
      %v4839 = vadd.f32 %v4554, %v4838
      %v4840 = vpop.f32.mrb[0].mxu0
      %v4841 = vpop.f32.mrb[0].mxu0
      %v4842 = vadd.f32 %v4554, %v4841
      %v4843 = vpop.f32.mrb[0].mxu0
      %4844 = vmatprep.mubr.bf16.mxu0 0
      %4845 = vmatmul.mubr.bf16.gmra.mrb[0].mxu0 %v4632
      %v4846 = vpop.f32.mrb[0].mxu0
      %v4847 = vadd.f32 %v4554, %v4846
      %v4848 = vpop.f32.mrb[0].mxu0
      %v4849 = vpop.f32.mrb[0].mxu0
      %v4850 = vadd.f32 %v4554, %v4849
      %v4851 = vpop.f32.mrb[0].mxu0
      %4852 = vmatprep.mubr.bf16.mxu0 0
      %4853 = vmatmul.mubr.bf16.gmra.mrb[0].mxu0 %v4635
      %v4854 = vpop.f32.mrb[0].mxu0
      %v4855 = vadd.f32 %v4554, %v4854
      %v4856 = vpop.f32.mrb[0].mxu0
      %v4857 = vpop.f32.mrb[0].mxu0
      %v4858 = vadd.f32 %v4554, %v4857
      %v4859 = vpop.f32.mrb[0].mxu0
      %4860 = vmatprep.mubr.bf16.mxu0 0
      %4861 = vmatmul.mubr.bf16.gmra.mrb[0].mxu0 %v4638
      %v4862 = vpop.f32.mrb[0].mxu0
      %v4863 = vadd.f32 %v4554, %v4862
      %v4864 = vpop.f32.mrb[0].mxu0
      %v4865 = vpop.f32.mrb[0].mxu0
      %v4866 = vadd.f32 %v4554, %v4865
      %v4867 = vpop.f32.mrb[0].mxu0
      %4868 = vmatprep.mubr.bf16.mxu0 0
      %4869 = vmatmul.mubr.bf16.gmra.mrb[0].mxu0 %v4641
      %v4870 = vpop.f32.mrb[0].mxu0
      %v4871 = vadd.f32 %v4554, %v4870
      %v4872 = vpop.f32.mrb[0].mxu0
      %v4873 = vpop.f32.mrb[0].mxu0
      %v4874 = vadd.f32 %v4554, %v4873
      %v4875 = vpop.f32.mrb[0].mxu0
      %4876 = vmatprep.mubr.bf16.mxu0 0
      %4877 = vmatmul.mubr.bf16.gmra.mrb[0].mxu0 %v4644
      %v4878 = vpop.f32.mrb[0].mxu0
      %v4879 = vadd.f32 %v4554, %v4878
      %v4880 = vpop.f32.mrb[0].mxu0
      %v4881 = vpop.f32.mrb[0].mxu0
      %v4882 = vadd.f32 %v4554, %v4881
      %v4883 = vpop.f32.mrb[0].mxu0
      %4884 = vmatprep.mubr.bf16.mxu0 0
      %4885 = vmatmul.mubr.bf16.gmra.mrb[0].mxu0 %v4647
      %v4886 = vpop.f32.mrb[0].mxu0
      %v4887 = vadd.f32 %v4554, %v4886
      %v4888 = vpop.f32.mrb[0].mxu0
      %v4889 = vpop.f32.mrb[0].mxu0
      %v4890 = vadd.f32 %v4554, %v4889
      %v4891 = vpop.f32.mrb[0].mxu0
      %4892 = vmatprep.mubr.bf16.mxu0 0
      %4893 = vmatmul.mubr.bf16.gmra.mrb[0].mxu0 %v4650
      %v4894 = vpop.f32.mrb[0].mxu0
      %v4895 = vadd.f32 %v4554, %v4894
      %v4896 = vpop.f32.mrb[0].mxu0
      %v4897 = vpop.f32.mrb[0].mxu0
      %v4898 = vadd.f32 %v4554, %v4897
      %v4899 = vpop.f32.mrb[0].mxu0
      %4900 = vmatprep.mubr.bf16.mxu0 0
      %4901 = vmatmul.mubr.bf16.gmra.mrb[0].mxu0 %v4653
      %v4902 = vpop.f32.mrb[0].mxu0
      %v4903 = vadd.f32 %v4554, %v4902
      %v4904 = vpop.f32.mrb[0].mxu0
      %v4905 = vpop.f32.mrb[0].mxu0
      %v4906 = vadd.f32 %v4554, %v4905
      %v4907 = vpop.f32.mrb[0].mxu0
      %4908 = vmatprep.mubr.bf16.mxu0 0
      %4909 = vmatmul.mubr.bf16.gmra.mrb[0].mxu0 %v4656
      %v4910 = vpop.f32.mrb[0].mxu0
      %v4911 = vadd.f32 %v4554, %v4910
      %v4912 = vpop.f32.mrb[0].mxu0
      %v4913 = vpop.f32.mrb[0].mxu0
      %v4914 = vadd.f32 %v4554, %v4913
      %v4915 = vpop.f32.mrb[0].mxu0
      %4916 = vmatprep.mubr.bf16.mxu0 0
      %4917 = vmatmul.mubr.bf16.gmra.mrb[0].mxu0 %v4659
      %v4918 = vpop.f32.mrb[0].mxu0
      %v4919 = vadd.f32 %v4554, %v4918
      %v4920 = vpop.f32.mrb[0].mxu0
      %v4921 = vpop.f32.mrb[0].mxu0
      %v4922 = vadd.f32 %v4554, %v4921
      %v4923 = vpop.f32.mrb[0].mxu0
      %4924 = vmatprep.mubr.bf16.mxu0 0
      %4925 = vmatmul.mubr.bf16.gmra.mrb[0].mxu0 %v4662
      %v4926 = vpop.f32.mrb[0].mxu0
      %v4927 = vadd.f32 %v4554, %v4926
      %v4928 = vpop.f32.mrb[0].mxu0
      %v4929 = vpop.f32.mrb[0].mxu0
      %v4930 = vadd.f32 %v4554, %v4929
      %v4931 = vpop.f32.mrb[0].mxu0
      %4932 = vmatprep.mubr.bf16.mxu0 0
      %4933 = vmatmul.mubr.bf16.gmra.mrb[0].mxu0 %v4665
      %v4934 = vpop.f32.mrb[0].mxu0
      %v4935 = vadd.f32 %v4554, %v4934
      %v4936 = vpop.f32.mrb[0].mxu0
      %v4937 = vpop.f32.mrb[0].mxu0
      %v4938 = vadd.f32 %v4554, %v4937
      %v4939 = vpop.f32.mrb[0].mxu0
      %4940 = vmatprep.mubr.bf16.mxu0 0
      %4941 = vmatmul.mubr.bf16.gmra.mrb[0].mxu0 %v4668
      %v4942 = vpop.f32.mrb[0].mxu0
      %v4943 = vadd.f32 %v4554, %v4942
      %v4944 = vpop.f32.mrb[0].mxu0
      %v4945 = vpop.f32.mrb[0].mxu0
      %v4946 = vadd.f32 %v4554, %v4945
      %v4947 = vpop.f32.mrb[0].mxu0
      %4948 = vmatprep.mubr.bf16.mxu0 0
      %4949 = vmatmul.mubr.bf16.gmra.mrb[0].mxu0 %v4671
      %v4950 = vpop.f32.mrb[0].mxu0
      %v4951 = vadd.f32 %v4554, %v4950
      %v4952 = vpop.f32.mrb[0].mxu0
      %v4953 = vpop.f32.mrb[0].mxu0
      %v4954 = vadd.f32 %v4554, %v4953
      %v4955 = vpop.f32.mrb[0].mxu0
      %4956 = vmatprep.mubr.bf16.mxu0 0
      %4957 = vmatmul.mubr.bf16.gmra.mrb[0].mxu0 %v4674
      %v4958 = vpop.f32.mrb[0].mxu0
      %v4959 = vadd.f32 %v4554, %v4958
      %v4960 = vpop.f32.mrb[0].mxu0
      %v4961 = vpop.f32.mrb[0].mxu0
      %v4962 = vadd.f32 %v4554, %v4961
      %v4963 = vpop.f32.mrb[0].mxu0
      %4964 = vdwg.mxu0
      %v4965 = vmax.f32 %v4711, 0.0
      %v4966 = vmax.f32 %v4714, 0.0
      %v4967 = vmax.f32 %v4719, 0.0
      %v4968 = vmax.f32 %v4722, 0.0
      %v4969 = vmax.f32 %v4727, 0.0
      %v4970 = vmax.f32 %v4730, 0.0
      %v4971 = vmax.f32 %v4735, 0.0
      %v4972 = vmax.f32 %v4738, 0.0
      %v4973 = vmax.f32 %v4743, 0.0
      %v4974 = vmax.f32 %v4746, 0.0
      %v4975 = vmax.f32 %v4751, 0.0
      %v4976 = vmax.f32 %v4754, 0.0
      %v4977 = vmax.f32 %v4759, 0.0
      %v4978 = vmax.f32 %v4762, 0.0
      %v4979 = vmax.f32 %v4767, 0.0
      %v4980 = vmax.f32 %v4770, 0.0
      %v4981 = vmax.f32 %v4775, 0.0
      %v4982 = vmax.f32 %v4778, 0.0
      %v4983 = vmax.f32 %v4783, 0.0
      %v4984 = vmax.f32 %v4786, 0.0
      %v4985 = vmax.f32 %v4791, 0.0
      %v4986 = vmax.f32 %v4794, 0.0
      %v4987 = vmax.f32 %v4799, 0.0
      %v4988 = vmax.f32 %v4802, 0.0
      %v4989 = vmax.f32 %v4807, 0.0
      %v4990 = vmax.f32 %v4810, 0.0
      %v4991 = vmax.f32 %v4815, 0.0
      %v4992 = vmax.f32 %v4818, 0.0
      %v4993 = vmax.f32 %v4823, 0.0
      %v4994 = vmax.f32 %v4826, 0.0
      %v4995 = vmax.f32 %v4831, 0.0
      %v4996 = vmax.f32 %v4834, 0.0
      %v4997 = vmax.f32 %v4839, 0.0
      %v4998 = vmax.f32 %v4842, 0.0
      %v4999 = vmax.f32 %v4847, 0.0
      %v5000 = vmax.f32 %v4850, 0.0
      %v5001 = vmax.f32 %v4855, 0.0
      %v5002 = vmax.f32 %v4858, 0.0
      %v5003 = vmax.f32 %v4863, 0.0
      %v5004 = vmax.f32 %v4866, 0.0
      %v5005 = vmax.f32 %v4871, 0.0
      %v5006 = vmax.f32 %v4874, 0.0
      %v5007 = vmax.f32 %v4879, 0.0
      %v5008 = vmax.f32 %v4882, 0.0
      %v5009 = vmax.f32 %v4887, 0.0
      %v5010 = vmax.f32 %v4890, 0.0
      %v5011 = vmax.f32 %v4895, 0.0
      %v5012 = vmax.f32 %v4898, 0.0
      %v5013 = vmax.f32 %v4903, 0.0
      %v5014 = vmax.f32 %v4906, 0.0
      %v5015 = vmax.f32 %v4911, 0.0
      %v5016 = vmax.f32 %v4914, 0.0
      %v5017 = vmax.f32 %v4919, 0.0
      %v5018 = vmax.f32 %v4922, 0.0
      %v5019 = vmax.f32 %v4927, 0.0
      %v5020 = vmax.f32 %v4930, 0.0
      %v5021 = vmax.f32 %v4935, 0.0
      %v5022 = vmax.f32 %v4938, 0.0
      %v5023 = vmax.f32 %v4943, 0.0
      %v5024 = vmax.f32 %v4946, 0.0
      %v5025 = vmax.f32 %v4951, 0.0
      %v5026 = vmax.f32 %v4954, 0.0
      %v5027 = vmax.f32 %v4959, 0.0
      %v5028 = vmax.f32 %v4962, 0.0
      %v5029 = vld [vmem:[%s10] sm:$0x1]
      %v5031 = vlaneseq
      %v5032 = vshrl.u32 %v5031, 7
      %v5033 = vsub.s32 0, %v5032
      %v5034 = vrot.slane %v5029, %v5033
      %v5036 = vmul.f32 %v4965, %v5034
      %v5037 = vmul.f32 %v4966, %v5034
      %v5038 = vmul.f32 %v4967, %v5034
      %v5039 = vmul.f32 %v4968, %v5034
      %v5040 = vmul.f32 %v4969, %v5034
      %v5041 = vmul.f32 %v4970, %v5034
      %v5042 = vmul.f32 %v4971, %v5034
      %v5043 = vmul.f32 %v4972, %v5034
      %v5044 = vmul.f32 %v4973, %v5034
      %v5045 = vmul.f32 %v4974, %v5034
      %v5046 = vmul.f32 %v4975, %v5034
      %v5047 = vmul.f32 %v4976, %v5034
      %v5048 = vmul.f32 %v4977, %v5034
      %v5049 = vmul.f32 %v4978, %v5034
      %v5050 = vmul.f32 %v4979, %v5034
      %v5051 = vmul.f32 %v4980, %v5034
      %v5052 = vmul.f32 %v4981, %v5034
      %v5053 = vmul.f32 %v4982, %v5034
      %v5054 = vmul.f32 %v4983, %v5034
      %v5055 = vmul.f32 %v4984, %v5034
      %v5056 = vmul.f32 %v4985, %v5034
      %v5057 = vmul.f32 %v4986, %v5034
      %v5058 = vmul.f32 %v4987, %v5034
      %v5059 = vmul.f32 %v4988, %v5034
      %v5060 = vmul.f32 %v4989, %v5034
      %v5061 = vmul.f32 %v4990, %v5034
      %v5062 = vmul.f32 %v4991, %v5034
      %v5063 = vmul.f32 %v4992, %v5034
      %v5064 = vmul.f32 %v4993, %v5034
      %v5065 = vmul.f32 %v4994, %v5034
      %v5066 = vmul.f32 %v4995, %v5034
      %v5067 = vmul.f32 %v4996, %v5034
      %v5068 = vmul.f32 %v4997, %v5034
      %v5069 = vmul.f32 %v4998, %v5034
      %v5070 = vmul.f32 %v4999, %v5034
      %v5071 = vmul.f32 %v5000, %v5034
      %v5072 = vmul.f32 %v5001, %v5034
      %v5073 = vmul.f32 %v5002, %v5034
      %v5074 = vmul.f32 %v5003, %v5034
      %v5075 = vmul.f32 %v5004, %v5034
      %v5076 = vmul.f32 %v5005, %v5034
      %v5077 = vmul.f32 %v5006, %v5034
      %v5078 = vmul.f32 %v5007, %v5034
      %v5079 = vmul.f32 %v5008, %v5034
      %v5080 = vmul.f32 %v5009, %v5034
      %v5081 = vmul.f32 %v5010, %v5034
      %v5082 = vmul.f32 %v5011, %v5034
      %v5083 = vmul.f32 %v5012, %v5034
      %v5084 = vmul.f32 %v5013, %v5034
      %v5085 = vmul.f32 %v5014, %v5034
      %v5086 = vmul.f32 %v5015, %v5034
      %v5087 = vmul.f32 %v5016, %v5034
      %v5088 = vmul.f32 %v5017, %v5034
      %v5089 = vmul.f32 %v5018, %v5034
      %v5090 = vmul.f32 %v5019, %v5034
      %v5091 = vmul.f32 %v5020, %v5034
      %v5092 = vmul.f32 %v5021, %v5034
      %v5093 = vmul.f32 %v5022, %v5034
      %v5094 = vmul.f32 %v5023, %v5034
      %v5095 = vmul.f32 %v5024, %v5034
      %v5096 = vmul.f32 %v5025, %v5034
      %v5097 = vmul.f32 %v5026, %v5034
      %v5098 = vmul.f32 %v5027, %v5034
      %v5099 = vmul.f32 %v5028, %v5034
      %vm5100 = vcmask 261120
      %v5101 = vsel %vm5100, %v5036, 0.0
      %5102 = vadd.xlane.f32.xlu0 %v5101
      %v5103 = vpop.xlane.xlu0 %5102
      %v5104 = vsel %vm5100, %v5037, 0.0
      %5105 = vadd.xlane.f32.xlu0 %v5104
      %v5106 = vpop.xlane.xlu0 %5105
      %v5107 = vsel %vm5100, %v5038, 0.0
      %5108 = vadd.xlane.f32.xlu0 %v5107
      %v5109 = vpop.xlane.xlu0 %5108
      %v5110 = vsel %vm5100, %v5039, 0.0
      %5111 = vadd.xlane.f32.xlu0 %v5110
      %v5112 = vpop.xlane.xlu0 %5111
      %v5113 = vsel %vm5100, %v5040, 0.0
      %5114 = vadd.xlane.f32.xlu0 %v5113
      %v5115 = vpop.xlane.xlu0 %5114
      %v5116 = vsel %vm5100, %v5041, 0.0
      %5117 = vadd.xlane.f32.xlu0 %v5116
      %v5118 = vpop.xlane.xlu0 %5117
      %v5119 = vsel %vm5100, %v5042, 0.0
      %5120 = vadd.xlane.f32.xlu0 %v5119
      %v5121 = vpop.xlane.xlu0 %5120
      %v5122 = vsel %vm5100, %v5043, 0.0
      %5123 = vadd.xlane.f32.xlu0 %v5122
      %v5124 = vpop.xlane.xlu0 %5123
      %v5125 = vsel %vm5100, %v5044, 0.0
      %5126 = vadd.xlane.f32.xlu0 %v5125
      %v5127 = vpop.xlane.xlu0 %5126
      %v5128 = vsel %vm5100, %v5045, 0.0
      %5129 = vadd.xlane.f32.xlu0 %v5128
      %v5130 = vpop.xlane.xlu0 %5129
      %v5131 = vsel %vm5100, %v5046, 0.0
      %5132 = vadd.xlane.f32.xlu0 %v5131
      %v5133 = vpop.xlane.xlu0 %5132
      %v5134 = vsel %vm5100, %v5047, 0.0
      %5135 = vadd.xlane.f32.xlu0 %v5134
      %v5136 = vpop.xlane.xlu0 %5135
      %v5137 = vsel %vm5100, %v5048, 0.0
      %5138 = vadd.xlane.f32.xlu0 %v5137
      %v5139 = vpop.xlane.xlu0 %5138
      %v5140 = vsel %vm5100, %v5049, 0.0
      %5141 = vadd.xlane.f32.xlu0 %v5140
      %v5142 = vpop.xlane.xlu0 %5141
      %v5143 = vsel %vm5100, %v5050, 0.0
      %5144 = vadd.xlane.f32.xlu0 %v5143
      %v5145 = vpop.xlane.xlu0 %5144
      %v5146 = vsel %vm5100, %v5051, 0.0
      %5147 = vadd.xlane.f32.xlu0 %v5146
      %v5148 = vpop.xlane.xlu0 %5147
      %v5149 = vsel %vm5100, %v5052, 0.0
      %5150 = vadd.xlane.f32.xlu0 %v5149
      %v5151 = vpop.xlane.xlu0 %5150
      %v5152 = vsel %vm5100, %v5053, 0.0
      %5153 = vadd.xlane.f32.xlu0 %v5152
      %v5154 = vpop.xlane.xlu0 %5153
      %v5155 = vsel %vm5100, %v5054, 0.0
      %5156 = vadd.xlane.f32.xlu0 %v5155
      %v5157 = vpop.xlane.xlu0 %5156
      %v5158 = vsel %vm5100, %v5055, 0.0
      %5159 = vadd.xlane.f32.xlu0 %v5158
      %v5160 = vpop.xlane.xlu0 %5159
      %v5161 = vsel %vm5100, %v5056, 0.0
      %5162 = vadd.xlane.f32.xlu0 %v5161
      %v5163 = vpop.xlane.xlu0 %5162
      %v5164 = vsel %vm5100, %v5057, 0.0
      %5165 = vadd.xlane.f32.xlu0 %v5164
      %v5166 = vpop.xlane.xlu0 %5165
      %v5167 = vsel %vm5100, %v5058, 0.0
      %5168 = vadd.xlane.f32.xlu0 %v5167
      %v5169 = vpop.xlane.xlu0 %5168
      %v5170 = vsel %vm5100, %v5059, 0.0
      %5171 = vadd.xlane.f32.xlu0 %v5170
      %v5172 = vpop.xlane.xlu0 %5171
      %v5173 = vsel %vm5100, %v5060, 0.0
      %5174 = vadd.xlane.f32.xlu0 %v5173
      %v5175 = vpop.xlane.xlu0 %5174
      %v5176 = vsel %vm5100, %v5061, 0.0
      %5177 = vadd.xlane.f32.xlu0 %v5176
      %v5178 = vpop.xlane.xlu0 %5177
      %v5179 = vsel %vm5100, %v5062, 0.0
      %5180 = vadd.xlane.f32.xlu0 %v5179
      %v5181 = vpop.xlane.xlu0 %5180
      %v5182 = vsel %vm5100, %v5063, 0.0
      %5183 = vadd.xlane.f32.xlu0 %v5182
      %v5184 = vpop.xlane.xlu0 %5183
      %v5185 = vsel %vm5100, %v5064, 0.0
      %5186 = vadd.xlane.f32.xlu0 %v5185
      %v5187 = vpop.xlane.xlu0 %5186
      %v5188 = vsel %vm5100, %v5065, 0.0
      %5189 = vadd.xlane.f32.xlu0 %v5188
      %v5190 = vpop.xlane.xlu0 %5189
      %v5191 = vsel %vm5100, %v5066, 0.0
      %5192 = vadd.xlane.f32.xlu0 %v5191
      %v5193 = vpop.xlane.xlu0 %5192
      %v5194 = vsel %vm5100, %v5067, 0.0
      %5195 = vadd.xlane.f32.xlu0 %v5194
      %v5196 = vpop.xlane.xlu0 %5195
      %v5197 = vsel %vm5100, %v5068, 0.0
      %5198 = vadd.xlane.f32.xlu0 %v5197
      %v5199 = vpop.xlane.xlu0 %5198
      %v5200 = vsel %vm5100, %v5069, 0.0
      %5201 = vadd.xlane.f32.xlu0 %v5200
      %v5202 = vpop.xlane.xlu0 %5201
      %v5203 = vsel %vm5100, %v5070, 0.0
      %5204 = vadd.xlane.f32.xlu0 %v5203
      %v5205 = vpop.xlane.xlu0 %5204
      %v5206 = vsel %vm5100, %v5071, 0.0
      %5207 = vadd.xlane.f32.xlu0 %v5206
      %v5208 = vpop.xlane.xlu0 %5207
      %v5209 = vsel %vm5100, %v5072, 0.0
      %5210 = vadd.xlane.f32.xlu0 %v5209
      %v5211 = vpop.xlane.xlu0 %5210
      %v5212 = vsel %vm5100, %v5073, 0.0
      %5213 = vadd.xlane.f32.xlu0 %v5212
      %v5214 = vpop.xlane.xlu0 %5213
      %v5215 = vsel %vm5100, %v5074, 0.0
      %5216 = vadd.xlane.f32.xlu0 %v5215
      %v5217 = vpop.xlane.xlu0 %5216
      %v5218 = vsel %vm5100, %v5075, 0.0
      %5219 = vadd.xlane.f32.xlu0 %v5218
      %v5220 = vpop.xlane.xlu0 %5219
      %v5221 = vsel %vm5100, %v5076, 0.0
      %5222 = vadd.xlane.f32.xlu0 %v5221
      %v5223 = vpop.xlane.xlu0 %5222
      %v5224 = vsel %vm5100, %v5077, 0.0
      %5225 = vadd.xlane.f32.xlu0 %v5224
      %v5226 = vpop.xlane.xlu0 %5225
      %v5227 = vsel %vm5100, %v5078, 0.0
      %5228 = vadd.xlane.f32.xlu0 %v5227
      %v5229 = vpop.xlane.xlu0 %5228
      %v5230 = vsel %vm5100, %v5079, 0.0
      %5231 = vadd.xlane.f32.xlu0 %v5230
      %v5232 = vpop.xlane.xlu0 %5231
      %v5233 = vsel %vm5100, %v5080, 0.0
      %5234 = vadd.xlane.f32.xlu0 %v5233
      %v5235 = vpop.xlane.xlu0 %5234
      %v5236 = vsel %vm5100, %v5081, 0.0
      %5237 = vadd.xlane.f32.xlu0 %v5236
      %v5238 = vpop.xlane.xlu0 %5237
      %v5239 = vsel %vm5100, %v5082, 0.0
      %5240 = vadd.xlane.f32.xlu0 %v5239
      %v5241 = vpop.xlane.xlu0 %5240
      %v5242 = vsel %vm5100, %v5083, 0.0
      %5243 = vadd.xlane.f32.xlu0 %v5242
      %v5244 = vpop.xlane.xlu0 %5243
      %v5245 = vsel %vm5100, %v5084, 0.0
      %5246 = vadd.xlane.f32.xlu0 %v5245
      %v5247 = vpop.xlane.xlu0 %5246
      %v5248 = vsel %vm5100, %v5085, 0.0
      %5249 = vadd.xlane.f32.xlu0 %v5248
      %v5250 = vpop.xlane.xlu0 %5249
      %v5251 = vsel %vm5100, %v5086, 0.0
      %5252 = vadd.xlane.f32.xlu0 %v5251
      %v5253 = vpop.xlane.xlu0 %5252
      %v5254 = vsel %vm5100, %v5087, 0.0
      %5255 = vadd.xlane.f32.xlu0 %v5254
      %v5256 = vpop.xlane.xlu0 %5255
      %v5257 = vsel %vm5100, %v5088, 0.0
      %5258 = vadd.xlane.f32.xlu0 %v5257
      %v5259 = vpop.xlane.xlu0 %5258
      %v5260 = vsel %vm5100, %v5089, 0.0
      %5261 = vadd.xlane.f32.xlu0 %v5260
      %v5262 = vpop.xlane.xlu0 %5261
      %v5263 = vsel %vm5100, %v5090, 0.0
      %5264 = vadd.xlane.f32.xlu0 %v5263
      %v5265 = vpop.xlane.xlu0 %5264
      %v5266 = vsel %vm5100, %v5091, 0.0
      %5267 = vadd.xlane.f32.xlu0 %v5266
      %v5268 = vpop.xlane.xlu0 %5267
      %v5269 = vsel %vm5100, %v5092, 0.0
      %5270 = vadd.xlane.f32.xlu0 %v5269
      %v5271 = vpop.xlane.xlu0 %5270
      %v5272 = vsel %vm5100, %v5093, 0.0
      %5273 = vadd.xlane.f32.xlu0 %v5272
      %v5274 = vpop.xlane.xlu0 %5273
      %v5275 = vsel %vm5100, %v5094, 0.0
      %5276 = vadd.xlane.f32.xlu0 %v5275
      %v5277 = vpop.xlane.xlu0 %5276
      %v5278 = vsel %vm5100, %v5095, 0.0
      %5279 = vadd.xlane.f32.xlu0 %v5278
      %v5280 = vpop.xlane.xlu0 %5279
      %v5281 = vsel %vm5100, %v5096, 0.0
      %5282 = vadd.xlane.f32.xlu0 %v5281
      %v5283 = vpop.xlane.xlu0 %5282
      %v5284 = vsel %vm5100, %v5097, 0.0
      %5285 = vadd.xlane.f32.xlu0 %v5284
      %v5286 = vpop.xlane.xlu0 %5285
      %v5287 = vsel %vm5100, %v5098, 0.0
      %5288 = vadd.xlane.f32.xlu0 %v5287
      %v5289 = vpop.xlane.xlu0 %5288
      %v5290 = vsel %vm5100, %v5099, 0.0
      %5291 = vadd.xlane.f32.xlu0 %v5290
      %v5292 = vpop.xlane.xlu0 %5291
      %v5293 = vld [vmem:[#allocation3] sm:$0x1]
      %v5295 = vlaneseq
      %v5296 = vshrl.u32 %v5295, 7
      %v5297 = vsub.s32 0, %v5296
      %v5298 = vrot.slane %v5293, %v5297
      %v5300 = vadd.f32 %v5103, %v5298
      %v5301 = vadd.f32 %v5106, %v5298
      %v5302 = vadd.f32 %v5109, %v5298
      %v5303 = vadd.f32 %v5112, %v5298
      %v5304 = vadd.f32 %v5115, %v5298
      %v5305 = vadd.f32 %v5118, %v5298
      %v5306 = vadd.f32 %v5121, %v5298
      %v5307 = vadd.f32 %v5124, %v5298
      %v5308 = vadd.f32 %v5127, %v5298
      %v5309 = vadd.f32 %v5130, %v5298
      %v5310 = vadd.f32 %v5133, %v5298
      %v5311 = vadd.f32 %v5136, %v5298
      %v5312 = vadd.f32 %v5139, %v5298
      %v5313 = vadd.f32 %v5142, %v5298
      %v5314 = vadd.f32 %v5145, %v5298
      %v5315 = vadd.f32 %v5148, %v5298
      %v5316 = vadd.f32 %v5151, %v5298
      %v5317 = vadd.f32 %v5154, %v5298
      %v5318 = vadd.f32 %v5157, %v5298
      %v5319 = vadd.f32 %v5160, %v5298
      %v5320 = vadd.f32 %v5163, %v5298
      %v5321 = vadd.f32 %v5166, %v5298
      %v5322 = vadd.f32 %v5169, %v5298
      %v5323 = vadd.f32 %v5172, %v5298
      %v5324 = vadd.f32 %v5175, %v5298
      %v5325 = vadd.f32 %v5178, %v5298
      %v5326 = vadd.f32 %v5181, %v5298
      %v5327 = vadd.f32 %v5184, %v5298
      %v5328 = vadd.f32 %v5187, %v5298
      %v5329 = vadd.f32 %v5190, %v5298
      %v5330 = vadd.f32 %v5193, %v5298
      %v5331 = vadd.f32 %v5196, %v5298
      %v5332 = vadd.f32 %v5199, %v5298
      %v5333 = vadd.f32 %v5202, %v5298
      %v5334 = vadd.f32 %v5205, %v5298
      %v5335 = vadd.f32 %v5208, %v5298
      %v5336 = vadd.f32 %v5211, %v5298
      %v5337 = vadd.f32 %v5214, %v5298
      %v5338 = vadd.f32 %v5217, %v5298
      %v5339 = vadd.f32 %v5220, %v5298
      %v5340 = vadd.f32 %v5223, %v5298
      %v5341 = vadd.f32 %v5226, %v5298
      %v5342 = vadd.f32 %v5229, %v5298
      %v5343 = vadd.f32 %v5232, %v5298
      %v5344 = vadd.f32 %v5235, %v5298
      %v5345 = vadd.f32 %v5238, %v5298
      %v5346 = vadd.f32 %v5241, %v5298
      %v5347 = vadd.f32 %v5244, %v5298
      %v5348 = vadd.f32 %v5247, %v5298
      %v5349 = vadd.f32 %v5250, %v5298
      %v5350 = vadd.f32 %v5253, %v5298
      %v5351 = vadd.f32 %v5256, %v5298
      %v5352 = vadd.f32 %v5259, %v5298
      %v5353 = vadd.f32 %v5262, %v5298
      %v5354 = vadd.f32 %v5265, %v5298
      %v5355 = vadd.f32 %v5268, %v5298
      %v5356 = vadd.f32 %v5271, %v5298
      %v5357 = vadd.f32 %v5274, %v5298
      %v5358 = vadd.f32 %v5277, %v5298
      %v5359 = vadd.f32 %v5280, %v5298
      %v5360 = vadd.f32 %v5283, %v5298
      %v5361 = vadd.f32 %v5286, %v5298
      %v5362 = vadd.f32 %v5289, %v5298
      %v5363 = vadd.f32 %v5292, %v5298
      %vm5364 = vcmask 7168
      %5365 = vst.msk [vmem:[%s417] sm:$0xff] %vm5364, %v5300
      %5366 = vst.msk [vmem:[%s417 + $0x8] sm:$0xff] %vm5364, %v5301
      %5367 = vst.msk [vmem:[%s417 + $0x10] sm:$0xff] %vm5364, %v5302
      %5368 = vst.msk [vmem:[%s417 + $0x18] sm:$0xff] %vm5364, %v5303
      %5369 = vst.msk [vmem:[%s417 + $0x20] sm:$0xff] %vm5364, %v5304
      %5370 = vst.msk [vmem:[%s417 + $0x28] sm:$0xff] %vm5364, %v5305
      %5371 = vst.msk [vmem:[%s417 + $0x30] sm:$0xff] %vm5364, %v5306
      %5372 = vst.msk [vmem:[%s417 + $0x38] sm:$0xff] %vm5364, %v5307
      %5373 = vst.msk [vmem:[%s417 + $0x40] sm:$0xff] %vm5364, %v5308
      %5374 = vst.msk [vmem:[%s417 + $0x48] sm:$0xff] %vm5364, %v5309
      %5375 = vst.msk [vmem:[%s417 + $0x50] sm:$0xff] %vm5364, %v5310
      %5376 = vst.msk [vmem:[%s417 + $0x58] sm:$0xff] %vm5364, %v5311
      %5377 = vst.msk [vmem:[%s417 + $0x60] sm:$0xff] %vm5364, %v5312
      %5378 = vst.msk [vmem:[%s417 + $0x68] sm:$0xff] %vm5364, %v5313
      %5379 = vst.msk [vmem:[%s417 + $0x70] sm:$0xff] %vm5364, %v5314
      %5380 = vst.msk [vmem:[%s417 + $0x78] sm:$0xff] %vm5364, %v5315
      %5381 = vst.msk [vmem:[%s417 + $0x80] sm:$0xff] %vm5364, %v5316
      %5382 = vst.msk [vmem:[%s417 + $0x88] sm:$0xff] %vm5364, %v5317
      %5383 = vst.msk [vmem:[%s417 + $0x90] sm:$0xff] %vm5364, %v5318
      %5384 = vst.msk [vmem:[%s417 + $0x98] sm:$0xff] %vm5364, %v5319
      %5385 = vst.msk [vmem:[%s417 + $0xa0] sm:$0xff] %vm5364, %v5320
      %5386 = vst.msk [vmem:[%s417 + $0xa8] sm:$0xff] %vm5364, %v5321
      %5387 = vst.msk [vmem:[%s417 + $0xb0] sm:$0xff] %vm5364, %v5322
      %5388 = vst.msk [vmem:[%s417 + $0xb8] sm:$0xff] %vm5364, %v5323
      %5389 = vst.msk [vmem:[%s417 + $0xc0] sm:$0xff] %vm5364, %v5324
      %5390 = vst.msk [vmem:[%s417 + $0xc8] sm:$0xff] %vm5364, %v5325
      %5391 = vst.msk [vmem:[%s417 + $0xd0] sm:$0xff] %vm5364, %v5326
      %5392 = vst.msk [vmem:[%s417 + $0xd8] sm:$0xff] %vm5364, %v5327
      %5393 = vst.msk [vmem:[%s417 + $0xe0] sm:$0xff] %vm5364, %v5328
      %5394 = vst.msk [vmem:[%s417 + $0xe8] sm:$0xff] %vm5364, %v5329
      %5395 = vst.msk [vmem:[%s417 + $0xf0] sm:$0xff] %vm5364, %v5330
      %5396 = vst.msk [vmem:[%s417 + $0xf8] sm:$0xff] %vm5364, %v5331
      %5397 = vst.msk [vmem:[%s417 + $0x100] sm:$0xff] %vm5364, %v5332
      %5398 = vst.msk [vmem:[%s417 + $0x108] sm:$0xff] %vm5364, %v5333
      %5399 = vst.msk [vmem:[%s417 + $0x110] sm:$0xff] %vm5364, %v5334
      %5400 = vst.msk [vmem:[%s417 + $0x118] sm:$0xff] %vm5364, %v5335
      %5401 = vst.msk [vmem:[%s417 + $0x120] sm:$0xff] %vm5364, %v5336
      %5402 = vst.msk [vmem:[%s417 + $0x128] sm:$0xff] %vm5364, %v5337
      %5403 = vst.msk [vmem:[%s417 + $0x130] sm:$0xff] %vm5364, %v5338
      %5404 = vst.msk [vmem:[%s417 + $0x138] sm:$0xff] %vm5364, %v5339
      %5405 = vst.msk [vmem:[%s417 + $0x140] sm:$0xff] %vm5364, %v5340
      %5406 = vst.msk [vmem:[%s417 + $0x148] sm:$0xff] %vm5364, %v5341
      %5407 = vst.msk [vmem:[%s417 + $0x150] sm:$0xff] %vm5364, %v5342
      %5408 = vst.msk [vmem:[%s417 + $0x158] sm:$0xff] %vm5364, %v5343
      %5409 = vst.msk [vmem:[%s417 + $0x160] sm:$0xff] %vm5364, %v5344
      %5410 = vst.msk [vmem:[%s417 + $0x168] sm:$0xff] %vm5364, %v5345
      %5411 = vst.msk [vmem:[%s417 + $0x170] sm:$0xff] %vm5364, %v5346
      %5412 = vst.msk [vmem:[%s417 + $0x178] sm:$0xff] %vm5364, %v5347
      %5413 = vst.msk [vmem:[%s417 + $0x180] sm:$0xff] %vm5364, %v5348
      %5414 = vst.msk [vmem:[%s417 + $0x188] sm:$0xff] %vm5364, %v5349
      %5415 = vst.msk [vmem:[%s417 + $0x190] sm:$0xff] %vm5364, %v5350
      %5416 = vst.msk [vmem:[%s417 + $0x198] sm:$0xff] %vm5364, %v5351
      %5417 = vst.msk [vmem:[%s417 + $0x1a0] sm:$0xff] %vm5364, %v5352
      %5418 = vst.msk [vmem:[%s417 + $0x1a8] sm:$0xff] %vm5364, %v5353
      %5419 = vst.msk [vmem:[%s417 + $0x1b0] sm:$0xff] %vm5364, %v5354
      %5420 = vst.msk [vmem:[%s417 + $0x1b8] sm:$0xff] %vm5364, %v5355
      %5421 = vst.msk [vmem:[%s417 + $0x1c0] sm:$0xff] %vm5364, %v5356
      %5422 = vst.msk [vmem:[%s417 + $0x1c8] sm:$0xff] %vm5364, %v5357
      %5423 = vst.msk [vmem:[%s417 + $0x1d0] sm:$0xff] %vm5364, %v5358
      %5424 = vst.msk [vmem:[%s417 + $0x1d8] sm:$0xff] %vm5364, %v5359
      %5425 = vst.msk [vmem:[%s417 + $0x1e0] sm:$0xff] %vm5364, %v5360
      %5426 = vst.msk [vmem:[%s417 + $0x1e8] sm:$0xff] %vm5364, %v5361
      %5427 = vst.msk [vmem:[%s417 + $0x1f0] sm:$0xff] %vm5364, %v5362
      %5428 = vst.msk [vmem:[%s417 + $0x1f8] sm:$0xff] %vm5364, %v5363
      %s5429 = smul.u32 64, %s25
      %p5430 = scmp.lt.s32.totalorder %s5429, 127
      %s5431 = scalar_select %p5430, %s5429, 127
      %s5432 = smul.addr %s5431, 8
      %s5433 = scalar_lea.vmem %s12, %s5432
      // Predicated region
      $region69: #{tpu_custom_call.1} parent=67 // pred_check
        %p5434 = pneg %p300
      $region70: #{tpu_custom_call.1} parent=67 // pred_check_branch
        %5436 = sbr.rel (%p5434) target = $region72
      $region71: #{tpu_custom_call.1} parent=67 // pred_region
        %s5437 = smul.u32 64, %s25
      $region72: #{tpu_custom_call.1} parent=67 // pred_fallthru
        _
    $region68: #{tpu_custom_call.1} parent=5 // pred_fallthru
      _
    %p5438 = scmp.le.s32.totalorder 2, %s20
    // Predicated region
    $region73: #{tpu_custom_call.1} parent=5 // pred_check
      %p5439 = pneg %p5438
    $region74: #{tpu_custom_call.1} parent=5 // pred_check_branch
      %5441 = sbr.rel (%p5439) target = $region76
    $region75: #{tpu_custom_call.1} parent=5 // pred_region
      %s5442 = ssub.s32 %s20, 2
      // Predicated region
      $region77: #{tpu_custom_call.1} parent=75 // pred_check
        %p5443 = pneg %p306
      $region78: #{tpu_custom_call.1} parent=75 // pred_check_branch
        %5445 = sbr.rel (%p5443) target = $region80
      $region79: #{tpu_custom_call.1} parent=75 // pred_region
        %s5446 = smul.u32 64, %s26
        %p5447 = scmp.lt.s32.totalorder %s5446, 127
        %s5448 = scalar_select %p5447, %s5446, 127
        %s5449 = smul.addr %s5448, 8
        %s5450 = scalar_lea.vmem %s12, %s5449
      $region80: #{tpu_custom_call.1} parent=75 // pred_fallthru
        _
    $region76: #{tpu_custom_call.1} parent=5 // pred_fallthru
      _
  $region6: #{tpu_custom_call.1} parent=0 // loop_footer
    %s24 = sadd.s32 1, %s20
  $region7: #{tpu_custom_call.1} parent=0 // loop_footer_branch
    %19 = sbr.rel target = $region3
  $region8: #{tpu_custom_call.1} parent=0 // loop_exit
    _

</llo_original>
